<compile_context>
chip_gen: v7x
topology: tpu7x:2x2x1
jax: 0.10.0
libtpu: 0.0.40
codegen_flags: <defaults>
</compile_context>

<pallas_src>
import math

import jax
import jax.numpy as jnp
from jax import lax
from jax.experimental import pallas as pl
from jax.experimental.pallas import tpu as pltpu

# Whole-array-in-VMEM spec (all operands are tiny at this synthetic size).
VMEM_SPEC = pl.BlockSpec(memory_space=pltpu.MemorySpace.VMEM)


# ------------------------------ fused kernel -------------------------------- #

def make_decap_kernel(*, n_layer, n_head, B, T, E):
    """Build the fused forward kernel for static (n_layer, n_head, B, T, E)."""
    S = T + 1
    M = B * S
    Dh = E // n_head
    scale = 1.0 / math.sqrt(Dh)
    c_gelu = math.sqrt(2.0 / math.pi)
    n_in = 5 + 12 * n_layer + 3   # number of input refs

    def layernorm(x, g, b):
        mu = jnp.mean(x, axis=-1, keepdims=True)
        var = jnp.mean((x - mu) ** 2, axis=-1, keepdims=True)
        return (x - mu) * lax.rsqrt(var + 1e-5) * g + b

    def gelu_new(y):
        # GPT-2 "gelu_new" (tanh approximation), kept in f32.
        return 0.5 * y * (1.0 + jnp.tanh(c_gelu * (y + 0.044715 * y * y * y)))

    def kernel(*refs):
        in_refs = refs[:n_in]
        out_ref = refs[n_in]          # (M, V)
        s_ref = refs[n_in + 1]        # VMEM scratch (M, E)

        clip_ref, text_ref, wpe_ref, cw_ref, cb_ref = in_refs[:5]
        blk_refs = in_refs[5:5 + 12 * n_layer]
        lnf_g_ref, lnf_b_ref, wteT_ref = in_refs[5 + 12 * n_layer:]

        # ---- clip_project + [clip_emb ; token_emb] concat + position emb ----
        wpe = wpe_ref[...]                                            # (S, E)
        emb_clip = (jnp.dot(clip_ref[...], cw_ref[...],
                            preferred_element_type=jnp.float32)
                    + cb_ref[...])                                    # (B, E)
        for b in range(B):
            r0 = b * S
            s_ref[r0:r0 + 1, :] = emb_clip[b:b + 1, :] + wpe[0:1, :]
            s_ref[r0 + 1:r0 + S, :] = text_ref[b] + wpe[1:S, :]
        h = s_ref[...]                                                # (M, E)

        # causal mask (shared by all layers / heads)
        row = lax.broadcasted_iota(jnp.int32, (S, S), 0)
        col = lax.broadcasted_iota(jnp.int32, (S, S), 1)
        neg = jnp.float32(-1e30)

        for li in range(n_layer):
            (ln1_g, ln1_b, attn_w, attn_b, proj_w, proj_b,
             ln2_g, ln2_b, fc_w, fc_b, mp_w, mp_b) = blk_refs[12 * li:12 * (li + 1)]

            # ---- attention ----
            x = layernorm(h, ln1_g[...], ln1_b[...])
            qkv = (jnp.dot(x, attn_w[...],
                           preferred_element_type=jnp.float32)
                   + attn_b[...])                                     # (M, 3E)

            # per (batch, head) causal attention; results gathered lane-dense
            # into the (M, E) scratch, so no head transposes are needed.
            for b in range(B):
                r0, r1 = b * S, (b + 1) * S
                for hd in range(n_head):
                    c0 = hd * Dh
                    q = qkv[r0:r1, c0:c0 + Dh] * scale        # fold 1/sqrt(Dh)
                    k = qkv[r0:r1, E + c0:E + c0 + Dh]
                    v = qkv[r0:r1, 2 * E + c0:2 * E + c0 + Dh]
                    s = lax.dot_general(
                        q, k, (((1,), (1,)), ((), ())),
                        preferred_element_type=jnp.float32)           # (S, S)
                    s = jnp.where(col <= row, s, neg)
                    mmax = jnp.max(s, axis=-1, keepdims=True)
                    p = jnp.exp(s - mmax)
                    denom = jnp.sum(p, axis=-1, keepdims=True)
                    p = p * pl.reciprocal(denom, approx=True)
                    o = jnp.dot(p, v, preferred_element_type=jnp.float32)
                    s_ref[r0:r1, c0:c0 + Dh] = o
            a = s_ref[...]                                            # (M, E)

            # proj with fused residual add
            h = h + (jnp.dot(a, proj_w[...],
                             preferred_element_type=jnp.float32)
                     + proj_b[...])

            # ---- MLP with fused residual add ----
            x = layernorm(h, ln2_g[...], ln2_b[...])
            m = gelu_new(jnp.dot(x, fc_w[...],
                                 preferred_element_type=jnp.float32)
                         + fc_b[...])
            h = h + (jnp.dot(m, mp_w[...],
                             preferred_element_type=jnp.float32)
                     + mp_b[...])

        # ---- final LN + tied LM head (wte pre-transposed outside jit) ----
        hn = layernorm(h, lnf_g_ref[...], lnf_b_ref[...])
        out_ref[...] = jnp.dot(hn, wteT_ref[...],
                               preferred_element_type=jnp.float32)

    return kernel


# ----------------------------- parameters / model --------------------------- #

def init_params(key, *, vocab, n_pos, n_embd, n_layer, prefix_size):
    keys = jax.random.split(key, 4 + n_layer)

    def nrm(k, shape, scale=0.02):
        return scale * jax.random.normal(k, shape, dtype=jnp.float32)

    params = {
        "wte": nrm(keys[0], (vocab, n_embd)),
        "wpe": nrm(keys[1], (n_pos, n_embd)),
        # clip_project = MLP((prefix_size, n_embd)) -> a single Linear, no act.
        "clip_w": nrm(keys[2], (prefix_size, n_embd)),
        "clip_b": jnp.zeros((n_embd,), jnp.float32),
        "ln_f_g": jnp.ones((n_embd,), jnp.float32),
        "ln_f_b": jnp.zeros((n_embd,), jnp.float32),
        "blocks": [],
    }
    for li in range(n_layer):
        k = jax.random.split(keys[4 + li], 4)
        params["blocks"].append({
            "ln1_g": jnp.ones((n_embd,), jnp.float32),
            "ln1_b": jnp.zeros((n_embd,), jnp.float32),
            "attn_w": nrm(k[0], (n_embd, 3 * n_embd)),   # GPT2 Conv1D: x @ W + b
            "attn_b": jnp.zeros((3 * n_embd,), jnp.float32),
            "proj_w": nrm(k[1], (n_embd, n_embd)),
            "proj_b": jnp.zeros((n_embd,), jnp.float32),
            "ln2_g": jnp.ones((n_embd,), jnp.float32),
            "ln2_b": jnp.zeros((n_embd,), jnp.float32),
            "fc_w": nrm(k[2], (n_embd, 4 * n_embd)),
            "fc_b": jnp.zeros((4 * n_embd,), jnp.float32),
            "mlp_proj_w": nrm(k[3], (4 * n_embd, n_embd)),
            "mlp_proj_b": jnp.zeros((n_embd,), jnp.float32),
        })
    # Pre-transposed tied LM-head weight (computed once, NOT per forward call).
    params["wte_T"] = jnp.asarray(params["wte"].T)
    return params


def decap_forward(params, clip_features, tokens, n_head):
    """clip_features: (B, prefix) f32; tokens: (B, T) int32 -> logits (B, T+1, V)."""
    B, T = tokens.shape
    V, E = params["wte"].shape
    S = T + 1
    M = B * S
    n_layer = len(params["blocks"])

    # Glue: token embedding lookup (gather) stays in plain JAX.
    emb_text = jnp.take(params["wte"], tokens, axis=0)                # (B, T, E)
    wpe_s = params["wpe"][:S]                                         # (S, E)

    args = [clip_features, emb_text, wpe_s,
            params["clip_w"], params["clip_b"].reshape(1, E)]
    for blk in params["blocks"]:
        args += [blk["ln1_g"].reshape(1, E), blk["ln1_b"].reshape(1, E),
                 blk["attn_w"], blk["attn_b"].reshape(1, 3 * E),
                 blk["proj_w"], blk["proj_b"].reshape(1, E),
                 blk["ln2_g"].reshape(1, E), blk["ln2_b"].reshape(1, E),
                 blk["fc_w"], blk["fc_b"].reshape(1, 4 * E),
                 blk["mlp_proj_w"], blk["mlp_proj_b"].reshape(1, E)]
    args += [params["ln_f_g"].reshape(1, E), params["ln_f_b"].reshape(1, E),
             params["wte_T"]]

    kernel = make_decap_kernel(n_layer=n_layer, n_head=n_head, B=B, T=T, E=E)
    logits = pl.pallas_call(
        kernel,
        out_shape=jax.ShapeDtypeStruct((M, V), jnp.float32),
        in_specs=[VMEM_SPEC] * len(args),
        out_specs=VMEM_SPEC,
        scratch_shapes=[pltpu.VMEM((M, E), jnp.float32)],
    )(*args)
    return logits.reshape(B, S, V)


# ----------------------------------- main ----------------------------------- #

if __name__ == "__main__":
    B, T = 2, 8
    PREFIX = 32       # prefix_size (512 in the original; small here)
    E = 32            # GPT2 n_embd / embedding_size
    V = 64            # vocab size
    NPOS = 32         # max positions
    NLAYER = 2
    NHEAD = 2

    key = jax.random.PRNGKey(0)
    kp, kc, kt = jax.random.split(key, 3)

    # TODO(synk): real DeCap loads GPT2 config from a pickle + trained weights;
    # this script uses a synthetic deterministic init instead.
    params = init_params(kp, vocab=V, n_pos=NPOS, n_embd=E, n_layer=NLAYER,
                         prefix_size=PREFIX)

    clip_features = jax.random.normal(kc, (B, PREFIX), dtype=jnp.float32)
    tokens = jax.random.randint(kt, (B, T), 0, V, dtype=jnp.int32)

    fwd = jax.jit(lambda p, c, t: decap_forward(p, c, t, NHEAD))
    logits = fwd(params, clip_features, tokens)
    jax.block_until_ready(logits)

    assert logits.shape == (B, T + 1, V), logits.shape
    assert bool(jnp.all(jnp.isfinite(logits)))
    print("KERNEL_OK")
</pallas_src>

<mosaic_0001>
module attributes {stable_mosaic.version = 11 : i64} {
  func.func @kernel(%arg0: memref<2x32xf32, #tpu.memory_space<vmem>>, %arg1: memref<2x8x32xf32, #tpu.memory_space<vmem>>, %arg2: memref<9x32xf32, #tpu.memory_space<vmem>>, %arg3: memref<32x32xf32, #tpu.memory_space<vmem>>, %arg4: memref<1x32xf32, #tpu.memory_space<vmem>>, %arg5: memref<1x32xf32, #tpu.memory_space<vmem>>, %arg6: memref<1x32xf32, #tpu.memory_space<vmem>>, %arg7: memref<32x96xf32, #tpu.memory_space<vmem>>, %arg8: memref<1x96xf32, #tpu.memory_space<vmem>>, %arg9: memref<32x32xf32, #tpu.memory_space<vmem>>, %arg10: memref<1x32xf32, #tpu.memory_space<vmem>>, %arg11: memref<1x32xf32, #tpu.memory_space<vmem>>, %arg12: memref<1x32xf32, #tpu.memory_space<vmem>>, %arg13: memref<32x128xf32, #tpu.memory_space<vmem>>, %arg14: memref<1x128xf32, #tpu.memory_space<vmem>>, %arg15: memref<128x32xf32, #tpu.memory_space<vmem>>, %arg16: memref<1x32xf32, #tpu.memory_space<vmem>>, %arg17: memref<1x32xf32, #tpu.memory_space<vmem>>, %arg18: memref<1x32xf32, #tpu.memory_space<vmem>>, %arg19: memref<32x96xf32, #tpu.memory_space<vmem>>, %arg20: memref<1x96xf32, #tpu.memory_space<vmem>>, %arg21: memref<32x32xf32, #tpu.memory_space<vmem>>, %arg22: memref<1x32xf32, #tpu.memory_space<vmem>>, %arg23: memref<1x32xf32, #tpu.memory_space<vmem>>, %arg24: memref<1x32xf32, #tpu.memory_space<vmem>>, %arg25: memref<32x128xf32, #tpu.memory_space<vmem>>, %arg26: memref<1x128xf32, #tpu.memory_space<vmem>>, %arg27: memref<128x32xf32, #tpu.memory_space<vmem>>, %arg28: memref<1x32xf32, #tpu.memory_space<vmem>>, %arg29: memref<1x32xf32, #tpu.memory_space<vmem>>, %arg30: memref<1x32xf32, #tpu.memory_space<vmem>>, %arg31: memref<32x64xf32, #tpu.memory_space<vmem>>, %arg32: memref<18x64xf32, #tpu.memory_space<vmem>>, %arg33: memref<18x32xf32, #tpu.memory_space<vmem>>) attributes {dimension_semantics = [], scalar_prefetch = 0 : i64, scratch_operands = 1 : i64, tpu.core_type = #tpu.core_type<tc>} {
    %c0 = arith.constant 0 : index
    %c0_0 = arith.constant 0 : index
    %0 = vector.load %arg2[%c0, %c0_0] : memref<9x32xf32, #tpu.memory_space<vmem>>, vector<9x32xf32>
    %c0_1 = arith.constant 0 : index
    %c0_2 = arith.constant 0 : index
    %1 = vector.load %arg0[%c0_1, %c0_2] : memref<2x32xf32, #tpu.memory_space<vmem>>, vector<2x32xf32>
    %c0_3 = arith.constant 0 : index
    %c0_4 = arith.constant 0 : index
    %2 = vector.load %arg3[%c0_3, %c0_4] : memref<32x32xf32, #tpu.memory_space<vmem>>, vector<32x32xf32>
    %cst = arith.constant dense<0.000000e+00> : vector<2x32xf32>
    %3 = tpu.matmul %1, %2, %cst {dimension_numbers = #tpu.dot_dimension_numbers<[1], [0], [0], [1], [0, 0, 1, 1], [], []>} : vector<2x32xf32>, vector<32x32xf32>, vector<2x32xf32> -> vector<2x32xf32>
    %c0_5 = arith.constant 0 : index
    %c0_6 = arith.constant 0 : index
    %4 = vector.load %arg4[%c0_5, %c0_6] : memref<1x32xf32, #tpu.memory_space<vmem>>, vector<1x32xf32>
    %5 = vector.broadcast %4 : vector<1x32xf32> to vector<2x32xf32>
    %6 = arith.addf %3, %5 : vector<2x32xf32>
    %7 = vector.extract_strided_slice %6 {offsets = [0, 0], sizes = [1, 32], strides = [1, 1]} : vector<2x32xf32> to vector<1x32xf32>
    %8 = vector.extract_strided_slice %0 {offsets = [0, 0], sizes = [1, 32], strides = [1, 1]} : vector<9x32xf32> to vector<1x32xf32>
    %9 = arith.addf %7, %8 : vector<1x32xf32>
    %c0_7 = arith.constant 0 : index
    %c0_8 = arith.constant 0 : index
    %10 = vector.load %arg33[%c0_7, %c0_8] : memref<18x32xf32, #tpu.memory_space<vmem>>, vector<1x32xf32>
    tpu.vector_store %arg33[%c0_7, %c0_8], %9 {strides = array<i32>} : memref<18x32xf32, #tpu.memory_space<vmem>>, vector<1x32xf32>,
    %c0_9 = arith.constant 0 : index
    %c0_10 = arith.constant 0 : index
    %c0_11 = arith.constant 0 : index
    %11 = vector.load %arg1[%c0_9, %c0_10, %c0_11] : memref<2x8x32xf32, #tpu.memory_space<vmem>>, vector<1x8x32xf32>
    %12 = vector.shape_cast %11 : vector<1x8x32xf32> to vector<8x32xf32>
    %13 = vector.extract_strided_slice %0 {offsets = [1, 0], sizes = [8, 32], strides = [1, 1]} : vector<9x32xf32> to vector<8x32xf32>
    %14 = arith.addf %12, %13 : vector<8x32xf32>
    %c1 = arith.constant 1 : index
    %c0_12 = arith.constant 0 : index
    %15 = vector.load %arg33[%c1, %c0_12] : memref<18x32xf32, #tpu.memory_space<vmem>>, vector<8x32xf32>
    tpu.vector_store %arg33[%c1, %c0_12], %14 {strides = array<i32>} : memref<18x32xf32, #tpu.memory_space<vmem>>, vector<8x32xf32>,
    %16 = vector.extract_strided_slice %6 {offsets = [1, 0], sizes = [1, 32], strides = [1, 1]} : vector<2x32xf32> to vector<1x32xf32>
    %17 = vector.extract_strided_slice %0 {offsets = [0, 0], sizes = [1, 32], strides = [1, 1]} : vector<9x32xf32> to vector<1x32xf32>
    %18 = arith.addf %16, %17 : vector<1x32xf32>
    %c9 = arith.constant 9 : index
    %c0_13 = arith.constant 0 : index
    %19 = vector.load %arg33[%c9, %c0_13] : memref<18x32xf32, #tpu.memory_space<vmem>>, vector<1x32xf32>
    tpu.vector_store %arg33[%c9, %c0_13], %18 {strides = array<i32>} : memref<18x32xf32, #tpu.memory_space<vmem>>, vector<1x32xf32>,
    %c1_14 = arith.constant 1 : index
    %c0_15 = arith.constant 0 : index
    %c0_16 = arith.constant 0 : index
    %20 = vector.load %arg1[%c1_14, %c0_15, %c0_16] : memref<2x8x32xf32, #tpu.memory_space<vmem>>, vector<1x8x32xf32>
    %21 = vector.shape_cast %20 : vector<1x8x32xf32> to vector<8x32xf32>
    %22 = vector.extract_strided_slice %0 {offsets = [1, 0], sizes = [8, 32], strides = [1, 1]} : vector<9x32xf32> to vector<8x32xf32>
    %23 = arith.addf %21, %22 : vector<8x32xf32>
    %c10 = arith.constant 10 : index
    %c0_17 = arith.constant 0 : index
    %24 = vector.load %arg33[%c10, %c0_17] : memref<18x32xf32, #tpu.memory_space<vmem>>, vector<8x32xf32>
    tpu.vector_store %arg33[%c10, %c0_17], %23 {strides = array<i32>} : memref<18x32xf32, #tpu.memory_space<vmem>>, vector<8x32xf32>,
    %c0_18 = arith.constant 0 : index
    %c0_19 = arith.constant 0 : index
    %25 = vector.load %arg33[%c0_18, %c0_19] : memref<18x32xf32, #tpu.memory_space<vmem>>, vector<18x32xf32>
    %26 = tpu.iota {dimensions = array<i32: 0>} : vector<9x9xi32>
    %27 = tpu.iota {dimensions = array<i32: 1>} : vector<9x9xi32>
    %c0_20 = arith.constant 0 : index
    %c0_21 = arith.constant 0 : index
    %28 = vector.load %arg5[%c0_20, %c0_21] : memref<1x32xf32, #tpu.memory_space<vmem>>, vector<1x32xf32>
    %c0_22 = arith.constant 0 : index
    %c0_23 = arith.constant 0 : index
    %29 = vector.load %arg6[%c0_22, %c0_23] : memref<1x32xf32, #tpu.memory_space<vmem>>, vector<1x32xf32>
    %cst_24 = arith.constant dense<0.000000e+00> : vector<18xf32>
    %30 = vector.multi_reduction <add>, %25, %cst_24 [1] : vector<18x32xf32> to vector<18xf32>
    %31 = vector.shape_cast %30 : vector<18xf32> to vector<18x1xf32>
    %cst_25 = arith.constant 3.200000e+01 : f32
    %32 = vector.broadcast %cst_25 : f32 to vector<18x1xf32>
    %33 = arith.divf %31, %32 : vector<18x1xf32>
    %34 = vector.broadcast %33 : vector<18x1xf32> to vector<18x32xf32>
    %35 = arith.subf %25, %34 : vector<18x32xf32>
    %36 = arith.mulf %35, %35 : vector<18x32xf32>
    %cst_26 = arith.constant dense<0.000000e+00> : vector<18xf32>
    %37 = vector.multi_reduction <add>, %36, %cst_26 [1] : vector<18x32xf32> to vector<18xf32>
    %38 = vector.shape_cast %37 : vector<18xf32> to vector<18x1xf32>
    %cst_27 = arith.constant 3.200000e+01 : f32
    %39 = vector.broadcast %cst_27 : f32 to vector<18x1xf32>
    %40 = arith.divf %38, %39 : vector<18x1xf32>
    %41 = vector.broadcast %33 : vector<18x1xf32> to vector<18x32xf32>
    %42 = arith.subf %25, %41 : vector<18x32xf32>
    %cst_28 = arith.constant 9.99999974E-6 : f32
    %43 = vector.broadcast %cst_28 : f32 to vector<18x1xf32>
    %44 = arith.addf %40, %43 : vector<18x1xf32>
    %45 = math.rsqrt %44 : vector<18x1xf32>
    %46 = vector.broadcast %45 : vector<18x1xf32> to vector<18x32xf32>
    %47 = arith.mulf %42, %46 : vector<18x32xf32>
    %48 = vector.broadcast %28 : vector<1x32xf32> to vector<18x32xf32>
    %49 = arith.mulf %47, %48 : vector<18x32xf32>
    %50 = vector.broadcast %29 : vector<1x32xf32> to vector<18x32xf32>
    %51 = arith.addf %49, %50 : vector<18x32xf32>
    %c0_29 = arith.constant 0 : index
    %c0_30 = arith.constant 0 : index
    %52 = vector.load %arg7[%c0_29, %c0_30] : memref<32x96xf32, #tpu.memory_space<vmem>>, vector<32x96xf32>
    %cst_31 = arith.constant dense<0.000000e+00> : vector<18x96xf32>
    %53 = tpu.matmul %51, %52, %cst_31 {dimension_numbers = #tpu.dot_dimension_numbers<[1], [0], [0], [1], [0, 0, 1, 1], [], []>} : vector<18x32xf32>, vector<32x96xf32>, vector<18x96xf32> -> vector<18x96xf32>
    %c0_32 = arith.constant 0 : index
    %c0_33 = arith.constant 0 : index
    %54 = vector.load %arg8[%c0_32, %c0_33] : memref<1x96xf32, #tpu.memory_space<vmem>>, vector<1x96xf32>
    %55 = vector.broadcast %54 : vector<1x96xf32> to vector<18x96xf32>
    %56 = arith.addf %53, %55 : vector<18x96xf32>
    %57 = vector.extract_strided_slice %56 {offsets = [0, 0], sizes = [9, 16], strides = [1, 1]} : vector<18x96xf32> to vector<9x16xf32>
    %cst_34 = arith.constant 2.500000e-01 : f32
    %58 = vector.broadcast %cst_34 : f32 to vector<9x16xf32>
    %59 = arith.mulf %57, %58 : vector<9x16xf32>
    %60 = vector.extract_strided_slice %56 {offsets = [0, 32], sizes = [9, 16], strides = [1, 1]} : vector<18x96xf32> to vector<9x16xf32>
    %61 = vector.extract_strided_slice %56 {offsets = [0, 64], sizes = [9, 16], strides = [1, 1]} : vector<18x96xf32> to vector<9x16xf32>
    %cst_35 = arith.constant dense<0.000000e+00> : vector<9x9xf32>
    %62 = tpu.matmul %59, %60, %cst_35 {dimension_numbers = #tpu.dot_dimension_numbers<[1], [1], [0], [0], [0, 0, 1, 0], [], []>} : vector<9x16xf32>, vector<9x16xf32>, vector<9x9xf32> -> vector<9x9xf32>
    %63 = arith.cmpi sle, %27, %26 : vector<9x9xi32>
    %cst_36 = arith.constant -1.000000e+30 : f32
    %64 = vector.broadcast %cst_36 : f32 to vector<9x9xf32>
    %65 = arith.select %63, %62, %64 : vector<9x9xi1>, vector<9x9xf32>
    %cst_37 = arith.constant dense<0xFF800000> : vector<9xf32>
    %66 = vector.multi_reduction <maximumf>, %65, %cst_37 [1] : vector<9x9xf32> to vector<9xf32>
    %67 = vector.shape_cast %66 : vector<9xf32> to vector<9x1xf32>
    %68 = vector.broadcast %67 : vector<9x1xf32> to vector<9x9xf32>
    %69 = arith.subf %65, %68 : vector<9x9xf32>
    %70 = math.exp %69 : vector<9x9xf32>
    %cst_38 = arith.constant dense<0.000000e+00> : vector<9xf32>
    %71 = vector.multi_reduction <add>, %70, %cst_38 [1] : vector<9x9xf32> to vector<9xf32>
    %72 = vector.shape_cast %71 : vector<9xf32> to vector<9x1xf32>
    %73 = tpu.reciprocal %72 {approx = true} : vector<9x1xf32> -> vector<9x1xf32>
    %74 = vector.broadcast %73 : vector<9x1xf32> to vector<9x9xf32>
    %75 = arith.mulf %70, %74 : vector<9x9xf32>
    %cst_39 = arith.constant dense<0.000000e+00> : vector<9x16xf32>
    %76 = tpu.matmul %75, %61, %cst_39 {dimension_numbers = #tpu.dot_dimension_numbers<[1], [0], [0], [1], [0, 0, 1, 1], [], []>} : vector<9x9xf32>, vector<9x16xf32>, vector<9x16xf32> -> vector<9x16xf32>
    %c0_40 = arith.constant 0 : index
    %c0_41 = arith.constant 0 : index
    %77 = vector.load %arg33[%c0_40, %c0_41] : memref<18x32xf32, #tpu.memory_space<vmem>>, vector<9x16xf32>
    tpu.vector_store %arg33[%c0_40, %c0_41], %76 {strides = array<i32>} : memref<18x32xf32, #tpu.memory_space<vmem>>, vector<9x16xf32>,
    %78 = vector.extract_strided_slice %56 {offsets = [0, 16], sizes = [9, 16], strides = [1, 1]} : vector<18x96xf32> to vector<9x16xf32>
    %cst_42 = arith.constant 2.500000e-01 : f32
    %79 = vector.broadcast %cst_42 : f32 to vector<9x16xf32>
    %80 = arith.mulf %78, %79 : vector<9x16xf32>
    %81 = vector.extract_strided_slice %56 {offsets = [0, 48], sizes = [9, 16], strides = [1, 1]} : vector<18x96xf32> to vector<9x16xf32>
    %82 = vector.extract_strided_slice %56 {offsets = [0, 80], sizes = [9, 16], strides = [1, 1]} : vector<18x96xf32> to vector<9x16xf32>
    %cst_43 = arith.constant dense<0.000000e+00> : vector<9x9xf32>
    %83 = tpu.matmul %80, %81, %cst_43 {dimension_numbers = #tpu.dot_dimension_numbers<[1], [1], [0], [0], [0, 0, 1, 0], [], []>} : vector<9x16xf32>, vector<9x16xf32>, vector<9x9xf32> -> vector<9x9xf32>
    %84 = arith.cmpi sle, %27, %26 : vector<9x9xi32>
    %cst_44 = arith.constant -1.000000e+30 : f32
    %85 = vector.broadcast %cst_44 : f32 to vector<9x9xf32>
    %86 = arith.select %84, %83, %85 : vector<9x9xi1>, vector<9x9xf32>
    %cst_45 = arith.constant dense<0xFF800000> : vector<9xf32>
    %87 = vector.multi_reduction <maximumf>, %86, %cst_45 [1] : vector<9x9xf32> to vector<9xf32>
    %88 = vector.shape_cast %87 : vector<9xf32> to vector<9x1xf32>
    %89 = vector.broadcast %88 : vector<9x1xf32> to vector<9x9xf32>
    %90 = arith.subf %86, %89 : vector<9x9xf32>
    %91 = math.exp %90 : vector<9x9xf32>
    %cst_46 = arith.constant dense<0.000000e+00> : vector<9xf32>
    %92 = vector.multi_reduction <add>, %91, %cst_46 [1] : vector<9x9xf32> to vector<9xf32>
    %93 = vector.shape_cast %92 : vector<9xf32> to vector<9x1xf32>
    %94 = tpu.reciprocal %93 {approx = true} : vector<9x1xf32> -> vector<9x1xf32>
    %95 = vector.broadcast %94 : vector<9x1xf32> to vector<9x9xf32>
    %96 = arith.mulf %91, %95 : vector<9x9xf32>
    %cst_47 = arith.constant dense<0.000000e+00> : vector<9x16xf32>
    %97 = tpu.matmul %96, %82, %cst_47 {dimension_numbers = #tpu.dot_dimension_numbers<[1], [0], [0], [1], [0, 0, 1, 1], [], []>} : vector<9x9xf32>, vector<9x16xf32>, vector<9x16xf32> -> vector<9x16xf32>
    %c0_48 = arith.constant 0 : index
    %c16 = arith.constant 16 : index
    %98 = vector.load %arg33[%c0_48, %c16] : memref<18x32xf32, #tpu.memory_space<vmem>>, vector<9x16xf32>
    tpu.vector_store %arg33[%c0_48, %c16], %97 {strides = array<i32>} : memref<18x32xf32, #tpu.memory_space<vmem>>, vector<9x16xf32>,
    %99 = vector.extract_strided_slice %56 {offsets = [9, 0], sizes = [9, 16], strides = [1, 1]} : vector<18x96xf32> to vector<9x16xf32>
    %cst_49 = arith.constant 2.500000e-01 : f32
    %100 = vector.broadcast %cst_49 : f32 to vector<9x16xf32>
    %101 = arith.mulf %99, %100 : vector<9x16xf32>
    %102 = vector.extract_strided_slice %56 {offsets = [9, 32], sizes = [9, 16], strides = [1, 1]} : vector<18x96xf32> to vector<9x16xf32>
    %103 = vector.extract_strided_slice %56 {offsets = [9, 64], sizes = [9, 16], strides = [1, 1]} : vector<18x96xf32> to vector<9x16xf32>
    %cst_50 = arith.constant dense<0.000000e+00> : vector<9x9xf32>
    %104 = tpu.matmul %101, %102, %cst_50 {dimension_numbers = #tpu.dot_dimension_numbers<[1], [1], [0], [0], [0, 0, 1, 0], [], []>} : vector<9x16xf32>, vector<9x16xf32>, vector<9x9xf32> -> vector<9x9xf32>
    %105 = arith.cmpi sle, %27, %26 : vector<9x9xi32>
    %cst_51 = arith.constant -1.000000e+30 : f32
    %106 = vector.broadcast %cst_51 : f32 to vector<9x9xf32>
    %107 = arith.select %105, %104, %106 : vector<9x9xi1>, vector<9x9xf32>
    %cst_52 = arith.constant dense<0xFF800000> : vector<9xf32>
    %108 = vector.multi_reduction <maximumf>, %107, %cst_52 [1] : vector<9x9xf32> to vector<9xf32>
    %109 = vector.shape_cast %108 : vector<9xf32> to vector<9x1xf32>
    %110 = vector.broadcast %109 : vector<9x1xf32> to vector<9x9xf32>
    %111 = arith.subf %107, %110 : vector<9x9xf32>
    %112 = math.exp %111 : vector<9x9xf32>
    %cst_53 = arith.constant dense<0.000000e+00> : vector<9xf32>
    %113 = vector.multi_reduction <add>, %112, %cst_53 [1] : vector<9x9xf32> to vector<9xf32>
    %114 = vector.shape_cast %113 : vector<9xf32> to vector<9x1xf32>
    %115 = tpu.reciprocal %114 {approx = true} : vector<9x1xf32> -> vector<9x1xf32>
    %116 = vector.broadcast %115 : vector<9x1xf32> to vector<9x9xf32>
    %117 = arith.mulf %112, %116 : vector<9x9xf32>
    %cst_54 = arith.constant dense<0.000000e+00> : vector<9x16xf32>
    %118 = tpu.matmul %117, %103, %cst_54 {dimension_numbers = #tpu.dot_dimension_numbers<[1], [0], [0], [1], [0, 0, 1, 1], [], []>} : vector<9x9xf32>, vector<9x16xf32>, vector<9x16xf32> -> vector<9x16xf32>
    %c9_55 = arith.constant 9 : index
    %c0_56 = arith.constant 0 : index
    %119 = vector.load %arg33[%c9_55, %c0_56] : memref<18x32xf32, #tpu.memory_space<vmem>>, vector<9x16xf32>
    tpu.vector_store %arg33[%c9_55, %c0_56], %118 {strides = array<i32>} : memref<18x32xf32, #tpu.memory_space<vmem>>, vector<9x16xf32>,
    %120 = vector.extract_strided_slice %56 {offsets = [9, 16], sizes = [9, 16], strides = [1, 1]} : vector<18x96xf32> to vector<9x16xf32>
    %cst_57 = arith.constant 2.500000e-01 : f32
    %121 = vector.broadcast %cst_57 : f32 to vector<9x16xf32>
    %122 = arith.mulf %120, %121 : vector<9x16xf32>
    %123 = vector.extract_strided_slice %56 {offsets = [9, 48], sizes = [9, 16], strides = [1, 1]} : vector<18x96xf32> to vector<9x16xf32>
    %124 = vector.extract_strided_slice %56 {offsets = [9, 80], sizes = [9, 16], strides = [1, 1]} : vector<18x96xf32> to vector<9x16xf32>
    %cst_58 = arith.constant dense<0.000000e+00> : vector<9x9xf32>
    %125 = tpu.matmul %122, %123, %cst_58 {dimension_numbers = #tpu.dot_dimension_numbers<[1], [1], [0], [0], [0, 0, 1, 0], [], []>} : vector<9x16xf32>, vector<9x16xf32>, vector<9x9xf32> -> vector<9x9xf32>
    %126 = arith.cmpi sle, %27, %26 : vector<9x9xi32>
    %cst_59 = arith.constant -1.000000e+30 : f32
    %127 = vector.broadcast %cst_59 : f32 to vector<9x9xf32>
    %128 = arith.select %126, %125, %127 : vector<9x9xi1>, vector<9x9xf32>
    %cst_60 = arith.constant dense<0xFF800000> : vector<9xf32>
    %129 = vector.multi_reduction <maximumf>, %128, %cst_60 [1] : vector<9x9xf32> to vector<9xf32>
    %130 = vector.shape_cast %129 : vector<9xf32> to vector<9x1xf32>
    %131 = vector.broadcast %130 : vector<9x1xf32> to vector<9x9xf32>
    %132 = arith.subf %128, %131 : vector<9x9xf32>
    %133 = math.exp %132 : vector<9x9xf32>
    %cst_61 = arith.constant dense<0.000000e+00> : vector<9xf32>
    %134 = vector.multi_reduction <add>, %133, %cst_61 [1] : vector<9x9xf32> to vector<9xf32>
    %135 = vector.shape_cast %134 : vector<9xf32> to vector<9x1xf32>
    %136 = tpu.reciprocal %135 {approx = true} : vector<9x1xf32> -> vector<9x1xf32>
    %137 = vector.broadcast %136 : vector<9x1xf32> to vector<9x9xf32>
    %138 = arith.mulf %133, %137 : vector<9x9xf32>
    %cst_62 = arith.constant dense<0.000000e+00> : vector<9x16xf32>
    %139 = tpu.matmul %138, %124, %cst_62 {dimension_numbers = #tpu.dot_dimension_numbers<[1], [0], [0], [1], [0, 0, 1, 1], [], []>} : vector<9x9xf32>, vector<9x16xf32>, vector<9x16xf32> -> vector<9x16xf32>
    %c9_63 = arith.constant 9 : index
    %c16_64 = arith.constant 16 : index
    %140 = vector.load %arg33[%c9_63, %c16_64] : memref<18x32xf32, #tpu.memory_space<vmem>>, vector<9x16xf32>
    tpu.vector_store %arg33[%c9_63, %c16_64], %139 {strides = array<i32>} : memref<18x32xf32, #tpu.memory_space<vmem>>, vector<9x16xf32>,
    %c0_65 = arith.constant 0 : index
    %c0_66 = arith.constant 0 : index
    %141 = vector.load %arg33[%c0_65, %c0_66] : memref<18x32xf32, #tpu.memory_space<vmem>>, vector<18x32xf32>
    %c0_67 = arith.constant 0 : index
    %c0_68 = arith.constant 0 : index
    %142 = vector.load %arg9[%c0_67, %c0_68] : memref<32x32xf32, #tpu.memory_space<vmem>>, vector<32x32xf32>
    %cst_69 = arith.constant dense<0.000000e+00> : vector<18x32xf32>
    %143 = tpu.matmul %141, %142, %cst_69 {dimension_numbers = #tpu.dot_dimension_numbers<[1], [0], [0], [1], [0, 0, 1, 1], [], []>} : vector<18x32xf32>, vector<32x32xf32>, vector<18x32xf32> -> vector<18x32xf32>
    %c0_70 = arith.constant 0 : index
    %c0_71 = arith.constant 0 : index
    %144 = vector.load %arg10[%c0_70, %c0_71] : memref<1x32xf32, #tpu.memory_space<vmem>>, vector<1x32xf32>
    %145 = vector.broadcast %144 : vector<1x32xf32> to vector<18x32xf32>
    %146 = arith.addf %143, %145 : vector<18x32xf32>
    %147 = arith.addf %25, %146 : vector<18x32xf32>
    %c0_72 = arith.constant 0 : index
    %c0_73 = arith.constant 0 : index
    %148 = vector.load %arg11[%c0_72, %c0_73] : memref<1x32xf32, #tpu.memory_space<vmem>>, vector<1x32xf32>
    %c0_74 = arith.constant 0 : index
    %c0_75 = arith.constant 0 : index
    %149 = vector.load %arg12[%c0_74, %c0_75] : memref<1x32xf32, #tpu.memory_space<vmem>>, vector<1x32xf32>
    %cst_76 = arith.constant dense<0.000000e+00> : vector<18xf32>
    %150 = vector.multi_reduction <add>, %147, %cst_76 [1] : vector<18x32xf32> to vector<18xf32>
    %151 = vector.shape_cast %150 : vector<18xf32> to vector<18x1xf32>
    %cst_77 = arith.constant 3.200000e+01 : f32
    %152 = vector.broadcast %cst_77 : f32 to vector<18x1xf32>
    %153 = arith.divf %151, %152 : vector<18x1xf32>
    %154 = vector.broadcast %153 : vector<18x1xf32> to vector<18x32xf32>
    %155 = arith.subf %147, %154 : vector<18x32xf32>
    %156 = arith.mulf %155, %155 : vector<18x32xf32>
    %cst_78 = arith.constant dense<0.000000e+00> : vector<18xf32>
    %157 = vector.multi_reduction <add>, %156, %cst_78 [1] : vector<18x32xf32> to vector<18xf32>
    %158 = vector.shape_cast %157 : vector<18xf32> to vector<18x1xf32>
    %cst_79 = arith.constant 3.200000e+01 : f32
    %159 = vector.broadcast %cst_79 : f32 to vector<18x1xf32>
    %160 = arith.divf %158, %159 : vector<18x1xf32>
    %161 = vector.broadcast %153 : vector<18x1xf32> to vector<18x32xf32>
    %162 = arith.subf %147, %161 : vector<18x32xf32>
    %cst_80 = arith.constant 9.99999974E-6 : f32
    %163 = vector.broadcast %cst_80 : f32 to vector<18x1xf32>
    %164 = arith.addf %160, %163 : vector<18x1xf32>
    %165 = math.rsqrt %164 : vector<18x1xf32>
    %166 = vector.broadcast %165 : vector<18x1xf32> to vector<18x32xf32>
    %167 = arith.mulf %162, %166 : vector<18x32xf32>
    %168 = vector.broadcast %148 : vector<1x32xf32> to vector<18x32xf32>
    %169 = arith.mulf %167, %168 : vector<18x32xf32>
    %170 = vector.broadcast %149 : vector<1x32xf32> to vector<18x32xf32>
    %171 = arith.addf %169, %170 : vector<18x32xf32>
    %c0_81 = arith.constant 0 : index
    %c0_82 = arith.constant 0 : index
    %172 = vector.load %arg13[%c0_81, %c0_82] : memref<32x128xf32, #tpu.memory_space<vmem>>, vector<32x128xf32>
    %cst_83 = arith.constant dense<0.000000e+00> : vector<18x128xf32>
    %173 = tpu.matmul %171, %172, %cst_83 {dimension_numbers = #tpu.dot_dimension_numbers<[1], [0], [0], [1], [0, 0, 1, 1], [], []>} : vector<18x32xf32>, vector<32x128xf32>, vector<18x128xf32> -> vector<18x128xf32>
    %c0_84 = arith.constant 0 : index
    %c0_85 = arith.constant 0 : index
    %174 = vector.load %arg14[%c0_84, %c0_85] : memref<1x128xf32, #tpu.memory_space<vmem>>, vector<1x128xf32>
    %175 = vector.broadcast %174 : vector<1x128xf32> to vector<18x128xf32>
    %176 = arith.addf %173, %175 : vector<18x128xf32>
    %cst_86 = arith.constant 5.000000e-01 : f32
    %177 = vector.broadcast %cst_86 : f32 to vector<18x128xf32>
    %178 = arith.mulf %177, %176 : vector<18x128xf32>
    %cst_87 = arith.constant 4.471500e-02 : f32
    %179 = vector.broadcast %cst_87 : f32 to vector<18x128xf32>
    %180 = arith.mulf %179, %176 : vector<18x128xf32>
    %181 = arith.mulf %180, %176 : vector<18x128xf32>
    %182 = arith.mulf %181, %176 : vector<18x128xf32>
    %183 = arith.addf %176, %182 : vector<18x128xf32>
    %cst_88 = arith.constant 0.797884583 : f32
    %184 = vector.broadcast %cst_88 : f32 to vector<18x128xf32>
    %185 = arith.mulf %184, %183 : vector<18x128xf32>
    %186 = math.tanh %185 : vector<18x128xf32>
    %cst_89 = arith.constant 1.000000e+00 : f32
    %187 = vector.broadcast %cst_89 : f32 to vector<18x128xf32>
    %188 = arith.addf %187, %186 : vector<18x128xf32>
    %189 = arith.mulf %178, %188 : vector<18x128xf32>
    %c0_90 = arith.constant 0 : index
    %c0_91 = arith.constant 0 : index
    %190 = vector.load %arg15[%c0_90, %c0_91] : memref<128x32xf32, #tpu.memory_space<vmem>>, vector<128x32xf32>
    %cst_92 = arith.constant dense<0.000000e+00> : vector<18x32xf32>
    %191 = tpu.matmul %189, %190, %cst_92 {dimension_numbers = #tpu.dot_dimension_numbers<[1], [0], [0], [1], [0, 0, 1, 1], [], []>} : vector<18x128xf32>, vector<128x32xf32>, vector<18x32xf32> -> vector<18x32xf32>
    %c0_93 = arith.constant 0 : index
    %c0_94 = arith.constant 0 : index
    %192 = vector.load %arg16[%c0_93, %c0_94] : memref<1x32xf32, #tpu.memory_space<vmem>>, vector<1x32xf32>
    %193 = vector.broadcast %192 : vector<1x32xf32> to vector<18x32xf32>
    %194 = arith.addf %191, %193 : vector<18x32xf32>
    %195 = arith.addf %147, %194 : vector<18x32xf32>
    %c0_95 = arith.constant 0 : index
    %c0_96 = arith.constant 0 : index
    %196 = vector.load %arg17[%c0_95, %c0_96] : memref<1x32xf32, #tpu.memory_space<vmem>>, vector<1x32xf32>
    %c0_97 = arith.constant 0 : index
    %c0_98 = arith.constant 0 : index
    %197 = vector.load %arg18[%c0_97, %c0_98] : memref<1x32xf32, #tpu.memory_space<vmem>>, vector<1x32xf32>
    %cst_99 = arith.constant dense<0.000000e+00> : vector<18xf32>
    %198 = vector.multi_reduction <add>, %195, %cst_99 [1] : vector<18x32xf32> to vector<18xf32>
    %199 = vector.shape_cast %198 : vector<18xf32> to vector<18x1xf32>
    %cst_100 = arith.constant 3.200000e+01 : f32
    %200 = vector.broadcast %cst_100 : f32 to vector<18x1xf32>
    %201 = arith.divf %199, %200 : vector<18x1xf32>
    %202 = vector.broadcast %201 : vector<18x1xf32> to vector<18x32xf32>
    %203 = arith.subf %195, %202 : vector<18x32xf32>
    %204 = arith.mulf %203, %203 : vector<18x32xf32>
    %cst_101 = arith.constant dense<0.000000e+00> : vector<18xf32>
    %205 = vector.multi_reduction <add>, %204, %cst_101 [1] : vector<18x32xf32> to vector<18xf32>
    %206 = vector.shape_cast %205 : vector<18xf32> to vector<18x1xf32>
    %cst_102 = arith.constant 3.200000e+01 : f32
    %207 = vector.broadcast %cst_102 : f32 to vector<18x1xf32>
    %208 = arith.divf %206, %207 : vector<18x1xf32>
    %209 = vector.broadcast %201 : vector<18x1xf32> to vector<18x32xf32>
    %210 = arith.subf %195, %209 : vector<18x32xf32>
    %cst_103 = arith.constant 9.99999974E-6 : f32
    %211 = vector.broadcast %cst_103 : f32 to vector<18x1xf32>
    %212 = arith.addf %208, %211 : vector<18x1xf32>
    %213 = math.rsqrt %212 : vector<18x1xf32>
    %214 = vector.broadcast %213 : vector<18x1xf32> to vector<18x32xf32>
    %215 = arith.mulf %210, %214 : vector<18x32xf32>
    %216 = vector.broadcast %196 : vector<1x32xf32> to vector<18x32xf32>
    %217 = arith.mulf %215, %216 : vector<18x32xf32>
    %218 = vector.broadcast %197 : vector<1x32xf32> to vector<18x32xf32>
    %219 = arith.addf %217, %218 : vector<18x32xf32>
    %c0_104 = arith.constant 0 : index
    %c0_105 = arith.constant 0 : index
    %220 = vector.load %arg19[%c0_104, %c0_105] : memref<32x96xf32, #tpu.memory_space<vmem>>, vector<32x96xf32>
    %cst_106 = arith.constant dense<0.000000e+00> : vector<18x96xf32>
    %221 = tpu.matmul %219, %220, %cst_106 {dimension_numbers = #tpu.dot_dimension_numbers<[1], [0], [0], [1], [0, 0, 1, 1], [], []>} : vector<18x32xf32>, vector<32x96xf32>, vector<18x96xf32> -> vector<18x96xf32>
    %c0_107 = arith.constant 0 : index
    %c0_108 = arith.constant 0 : index
    %222 = vector.load %arg20[%c0_107, %c0_108] : memref<1x96xf32, #tpu.memory_space<vmem>>, vector<1x96xf32>
    %223 = vector.broadcast %222 : vector<1x96xf32> to vector<18x96xf32>
    %224 = arith.addf %221, %223 : vector<18x96xf32>
    %225 = vector.extract_strided_slice %224 {offsets = [0, 0], sizes = [9, 16], strides = [1, 1]} : vector<18x96xf32> to vector<9x16xf32>
    %cst_109 = arith.constant 2.500000e-01 : f32
    %226 = vector.broadcast %cst_109 : f32 to vector<9x16xf32>
    %227 = arith.mulf %225, %226 : vector<9x16xf32>
    %228 = vector.extract_strided_slice %224 {offsets = [0, 32], sizes = [9, 16], strides = [1, 1]} : vector<18x96xf32> to vector<9x16xf32>
    %229 = vector.extract_strided_slice %224 {offsets = [0, 64], sizes = [9, 16], strides = [1, 1]} : vector<18x96xf32> to vector<9x16xf32>
    %cst_110 = arith.constant dense<0.000000e+00> : vector<9x9xf32>
    %230 = tpu.matmul %227, %228, %cst_110 {dimension_numbers = #tpu.dot_dimension_numbers<[1], [1], [0], [0], [0, 0, 1, 0], [], []>} : vector<9x16xf32>, vector<9x16xf32>, vector<9x9xf32> -> vector<9x9xf32>
    %231 = arith.cmpi sle, %27, %26 : vector<9x9xi32>
    %cst_111 = arith.constant -1.000000e+30 : f32
    %232 = vector.broadcast %cst_111 : f32 to vector<9x9xf32>
    %233 = arith.select %231, %230, %232 : vector<9x9xi1>, vector<9x9xf32>
    %cst_112 = arith.constant dense<0xFF800000> : vector<9xf32>
    %234 = vector.multi_reduction <maximumf>, %233, %cst_112 [1] : vector<9x9xf32> to vector<9xf32>
    %235 = vector.shape_cast %234 : vector<9xf32> to vector<9x1xf32>
    %236 = vector.broadcast %235 : vector<9x1xf32> to vector<9x9xf32>
    %237 = arith.subf %233, %236 : vector<9x9xf32>
    %238 = math.exp %237 : vector<9x9xf32>
    %cst_113 = arith.constant dense<0.000000e+00> : vector<9xf32>
    %239 = vector.multi_reduction <add>, %238, %cst_113 [1] : vector<9x9xf32> to vector<9xf32>
    %240 = vector.shape_cast %239 : vector<9xf32> to vector<9x1xf32>
    %241 = tpu.reciprocal %240 {approx = true} : vector<9x1xf32> -> vector<9x1xf32>
    %242 = vector.broadcast %241 : vector<9x1xf32> to vector<9x9xf32>
    %243 = arith.mulf %238, %242 : vector<9x9xf32>
    %cst_114 = arith.constant dense<0.000000e+00> : vector<9x16xf32>
    %244 = tpu.matmul %243, %229, %cst_114 {dimension_numbers = #tpu.dot_dimension_numbers<[1], [0], [0], [1], [0, 0, 1, 1], [], []>} : vector<9x9xf32>, vector<9x16xf32>, vector<9x16xf32> -> vector<9x16xf32>
    %c0_115 = arith.constant 0 : index
    %c0_116 = arith.constant 0 : index
    %245 = vector.load %arg33[%c0_115, %c0_116] : memref<18x32xf32, #tpu.memory_space<vmem>>, vector<9x16xf32>
    tpu.vector_store %arg33[%c0_115, %c0_116], %244 {strides = array<i32>} : memref<18x32xf32, #tpu.memory_space<vmem>>, vector<9x16xf32>,
    %246 = vector.extract_strided_slice %224 {offsets = [0, 16], sizes = [9, 16], strides = [1, 1]} : vector<18x96xf32> to vector<9x16xf32>
    %cst_117 = arith.constant 2.500000e-01 : f32
    %247 = vector.broadcast %cst_117 : f32 to vector<9x16xf32>
    %248 = arith.mulf %246, %247 : vector<9x16xf32>
    %249 = vector.extract_strided_slice %224 {offsets = [0, 48], sizes = [9, 16], strides = [1, 1]} : vector<18x96xf32> to vector<9x16xf32>
    %250 = vector.extract_strided_slice %224 {offsets = [0, 80], sizes = [9, 16], strides = [1, 1]} : vector<18x96xf32> to vector<9x16xf32>
    %cst_118 = arith.constant dense<0.000000e+00> : vector<9x9xf32>
    %251 = tpu.matmul %248, %249, %cst_118 {dimension_numbers = #tpu.dot_dimension_numbers<[1], [1], [0], [0], [0, 0, 1, 0], [], []>} : vector<9x16xf32>, vector<9x16xf32>, vector<9x9xf32> -> vector<9x9xf32>
    %252 = arith.cmpi sle, %27, %26 : vector<9x9xi32>
    %cst_119 = arith.constant -1.000000e+30 : f32
    %253 = vector.broadcast %cst_119 : f32 to vector<9x9xf32>
    %254 = arith.select %252, %251, %253 : vector<9x9xi1>, vector<9x9xf32>
    %cst_120 = arith.constant dense<0xFF800000> : vector<9xf32>
    %255 = vector.multi_reduction <maximumf>, %254, %cst_120 [1] : vector<9x9xf32> to vector<9xf32>
    %256 = vector.shape_cast %255 : vector<9xf32> to vector<9x1xf32>
    %257 = vector.broadcast %256 : vector<9x1xf32> to vector<9x9xf32>
    %258 = arith.subf %254, %257 : vector<9x9xf32>
    %259 = math.exp %258 : vector<9x9xf32>
    %cst_121 = arith.constant dense<0.000000e+00> : vector<9xf32>
    %260 = vector.multi_reduction <add>, %259, %cst_121 [1] : vector<9x9xf32> to vector<9xf32>
    %261 = vector.shape_cast %260 : vector<9xf32> to vector<9x1xf32>
    %262 = tpu.reciprocal %261 {approx = true} : vector<9x1xf32> -> vector<9x1xf32>
    %263 = vector.broadcast %262 : vector<9x1xf32> to vector<9x9xf32>
    %264 = arith.mulf %259, %263 : vector<9x9xf32>
    %cst_122 = arith.constant dense<0.000000e+00> : vector<9x16xf32>
    %265 = tpu.matmul %264, %250, %cst_122 {dimension_numbers = #tpu.dot_dimension_numbers<[1], [0], [0], [1], [0, 0, 1, 1], [], []>} : vector<9x9xf32>, vector<9x16xf32>, vector<9x16xf32> -> vector<9x16xf32>
    %c0_123 = arith.constant 0 : index
    %c16_124 = arith.constant 16 : index
    %266 = vector.load %arg33[%c0_123, %c16_124] : memref<18x32xf32, #tpu.memory_space<vmem>>, vector<9x16xf32>
    tpu.vector_store %arg33[%c0_123, %c16_124], %265 {strides = array<i32>} : memref<18x32xf32, #tpu.memory_space<vmem>>, vector<9x16xf32>,
    %267 = vector.extract_strided_slice %224 {offsets = [9, 0], sizes = [9, 16], strides = [1, 1]} : vector<18x96xf32> to vector<9x16xf32>
    %cst_125 = arith.constant 2.500000e-01 : f32
    %268 = vector.broadcast %cst_125 : f32 to vector<9x16xf32>
    %269 = arith.mulf %267, %268 : vector<9x16xf32>
    %270 = vector.extract_strided_slice %224 {offsets = [9, 32], sizes = [9, 16], strides = [1, 1]} : vector<18x96xf32> to vector<9x16xf32>
    %271 = vector.extract_strided_slice %224 {offsets = [9, 64], sizes = [9, 16], strides = [1, 1]} : vector<18x96xf32> to vector<9x16xf32>
    %cst_126 = arith.constant dense<0.000000e+00> : vector<9x9xf32>
    %272 = tpu.matmul %269, %270, %cst_126 {dimension_numbers = #tpu.dot_dimension_numbers<[1], [1], [0], [0], [0, 0, 1, 0], [], []>} : vector<9x16xf32>, vector<9x16xf32>, vector<9x9xf32> -> vector<9x9xf32>
    %273 = arith.cmpi sle, %27, %26 : vector<9x9xi32>
    %cst_127 = arith.constant -1.000000e+30 : f32
    %274 = vector.broadcast %cst_127 : f32 to vector<9x9xf32>
    %275 = arith.select %273, %272, %274 : vector<9x9xi1>, vector<9x9xf32>
    %cst_128 = arith.constant dense<0xFF800000> : vector<9xf32>
    %276 = vector.multi_reduction <maximumf>, %275, %cst_128 [1] : vector<9x9xf32> to vector<9xf32>
    %277 = vector.shape_cast %276 : vector<9xf32> to vector<9x1xf32>
    %278 = vector.broadcast %277 : vector<9x1xf32> to vector<9x9xf32>
    %279 = arith.subf %275, %278 : vector<9x9xf32>
    %280 = math.exp %279 : vector<9x9xf32>
    %cst_129 = arith.constant dense<0.000000e+00> : vector<9xf32>
    %281 = vector.multi_reduction <add>, %280, %cst_129 [1] : vector<9x9xf32> to vector<9xf32>
    %282 = vector.shape_cast %281 : vector<9xf32> to vector<9x1xf32>
    %283 = tpu.reciprocal %282 {approx = true} : vector<9x1xf32> -> vector<9x1xf32>
    %284 = vector.broadcast %283 : vector<9x1xf32> to vector<9x9xf32>
    %285 = arith.mulf %280, %284 : vector<9x9xf32>
    %cst_130 = arith.constant dense<0.000000e+00> : vector<9x16xf32>
    %286 = tpu.matmul %285, %271, %cst_130 {dimension_numbers = #tpu.dot_dimension_numbers<[1], [0], [0], [1], [0, 0, 1, 1], [], []>} : vector<9x9xf32>, vector<9x16xf32>, vector<9x16xf32> -> vector<9x16xf32>
    %c9_131 = arith.constant 9 : index
    %c0_132 = arith.constant 0 : index
    %287 = vector.load %arg33[%c9_131, %c0_132] : memref<18x32xf32, #tpu.memory_space<vmem>>, vector<9x16xf32>
    tpu.vector_store %arg33[%c9_131, %c0_132], %286 {strides = array<i32>} : memref<18x32xf32, #tpu.memory_space<vmem>>, vector<9x16xf32>,
    %288 = vector.extract_strided_slice %224 {offsets = [9, 16], sizes = [9, 16], strides = [1, 1]} : vector<18x96xf32> to vector<9x16xf32>
    %cst_133 = arith.constant 2.500000e-01 : f32
    %289 = vector.broadcast %cst_133 : f32 to vector<9x16xf32>
    %290 = arith.mulf %288, %289 : vector<9x16xf32>
    %291 = vector.extract_strided_slice %224 {offsets = [9, 48], sizes = [9, 16], strides = [1, 1]} : vector<18x96xf32> to vector<9x16xf32>
    %292 = vector.extract_strided_slice %224 {offsets = [9, 80], sizes = [9, 16], strides = [1, 1]} : vector<18x96xf32> to vector<9x16xf32>
    %cst_134 = arith.constant dense<0.000000e+00> : vector<9x9xf32>
    %293 = tpu.matmul %290, %291, %cst_134 {dimension_numbers = #tpu.dot_dimension_numbers<[1], [1], [0], [0], [0, 0, 1, 0], [], []>} : vector<9x16xf32>, vector<9x16xf32>, vector<9x9xf32> -> vector<9x9xf32>
    %294 = arith.cmpi sle, %27, %26 : vector<9x9xi32>
    %cst_135 = arith.constant -1.000000e+30 : f32
    %295 = vector.broadcast %cst_135 : f32 to vector<9x9xf32>
    %296 = arith.select %294, %293, %295 : vector<9x9xi1>, vector<9x9xf32>
    %cst_136 = arith.constant dense<0xFF800000> : vector<9xf32>
    %297 = vector.multi_reduction <maximumf>, %296, %cst_136 [1] : vector<9x9xf32> to vector<9xf32>
    %298 = vector.shape_cast %297 : vector<9xf32> to vector<9x1xf32>
    %299 = vector.broadcast %298 : vector<9x1xf32> to vector<9x9xf32>
    %300 = arith.subf %296, %299 : vector<9x9xf32>
    %301 = math.exp %300 : vector<9x9xf32>
    %cst_137 = arith.constant dense<0.000000e+00> : vector<9xf32>
    %302 = vector.multi_reduction <add>, %301, %cst_137 [1] : vector<9x9xf32> to vector<9xf32>
    %303 = vector.shape_cast %302 : vector<9xf32> to vector<9x1xf32>
    %304 = tpu.reciprocal %303 {approx = true} : vector<9x1xf32> -> vector<9x1xf32>
    %305 = vector.broadcast %304 : vector<9x1xf32> to vector<9x9xf32>
    %306 = arith.mulf %301, %305 : vector<9x9xf32>
    %cst_138 = arith.constant dense<0.000000e+00> : vector<9x16xf32>
    %307 = tpu.matmul %306, %292, %cst_138 {dimension_numbers = #tpu.dot_dimension_numbers<[1], [0], [0], [1], [0, 0, 1, 1], [], []>} : vector<9x9xf32>, vector<9x16xf32>, vector<9x16xf32> -> vector<9x16xf32>
    %c9_139 = arith.constant 9 : index
    %c16_140 = arith.constant 16 : index
    %308 = vector.load %arg33[%c9_139, %c16_140] : memref<18x32xf32, #tpu.memory_space<vmem>>, vector<9x16xf32>
    tpu.vector_store %arg33[%c9_139, %c16_140], %307 {strides = array<i32>} : memref<18x32xf32, #tpu.memory_space<vmem>>, vector<9x16xf32>,
    %c0_141 = arith.constant 0 : index
    %c0_142 = arith.constant 0 : index
    %309 = vector.load %arg33[%c0_141, %c0_142] : memref<18x32xf32, #tpu.memory_space<vmem>>, vector<18x32xf32>
    %c0_143 = arith.constant 0 : index
    %c0_144 = arith.constant 0 : index
    %310 = vector.load %arg21[%c0_143, %c0_144] : memref<32x32xf32, #tpu.memory_space<vmem>>, vector<32x32xf32>
    %cst_145 = arith.constant dense<0.000000e+00> : vector<18x32xf32>
    %311 = tpu.matmul %309, %310, %cst_145 {dimension_numbers = #tpu.dot_dimension_numbers<[1], [0], [0], [1], [0, 0, 1, 1], [], []>} : vector<18x32xf32>, vector<32x32xf32>, vector<18x32xf32> -> vector<18x32xf32>
    %c0_146 = arith.constant 0 : index
    %c0_147 = arith.constant 0 : index
    %312 = vector.load %arg22[%c0_146, %c0_147] : memref<1x32xf32, #tpu.memory_space<vmem>>, vector<1x32xf32>
    %313 = vector.broadcast %312 : vector<1x32xf32> to vector<18x32xf32>
    %314 = arith.addf %311, %313 : vector<18x32xf32>
    %315 = arith.addf %195, %314 : vector<18x32xf32>
    %c0_148 = arith.constant 0 : index
    %c0_149 = arith.constant 0 : index
    %316 = vector.load %arg23[%c0_148, %c0_149] : memref<1x32xf32, #tpu.memory_space<vmem>>, vector<1x32xf32>
    %c0_150 = arith.constant 0 : index
    %c0_151 = arith.constant 0 : index
    %317 = vector.load %arg24[%c0_150, %c0_151] : memref<1x32xf32, #tpu.memory_space<vmem>>, vector<1x32xf32>
    %cst_152 = arith.constant dense<0.000000e+00> : vector<18xf32>
    %318 = vector.multi_reduction <add>, %315, %cst_152 [1] : vector<18x32xf32> to vector<18xf32>
    %319 = vector.shape_cast %318 : vector<18xf32> to vector<18x1xf32>
    %cst_153 = arith.constant 3.200000e+01 : f32
    %320 = vector.broadcast %cst_153 : f32 to vector<18x1xf32>
    %321 = arith.divf %319, %320 : vector<18x1xf32>
    %322 = vector.broadcast %321 : vector<18x1xf32> to vector<18x32xf32>
    %323 = arith.subf %315, %322 : vector<18x32xf32>
    %324 = arith.mulf %323, %323 : vector<18x32xf32>
    %cst_154 = arith.constant dense<0.000000e+00> : vector<18xf32>
    %325 = vector.multi_reduction <add>, %324, %cst_154 [1] : vector<18x32xf32> to vector<18xf32>
    %326 = vector.shape_cast %325 : vector<18xf32> to vector<18x1xf32>
    %cst_155 = arith.constant 3.200000e+01 : f32
    %327 = vector.broadcast %cst_155 : f32 to vector<18x1xf32>
    %328 = arith.divf %326, %327 : vector<18x1xf32>
    %329 = vector.broadcast %321 : vector<18x1xf32> to vector<18x32xf32>
    %330 = arith.subf %315, %329 : vector<18x32xf32>
    %cst_156 = arith.constant 9.99999974E-6 : f32
    %331 = vector.broadcast %cst_156 : f32 to vector<18x1xf32>
    %332 = arith.addf %328, %331 : vector<18x1xf32>
    %333 = math.rsqrt %332 : vector<18x1xf32>
    %334 = vector.broadcast %333 : vector<18x1xf32> to vector<18x32xf32>
    %335 = arith.mulf %330, %334 : vector<18x32xf32>
    %336 = vector.broadcast %316 : vector<1x32xf32> to vector<18x32xf32>
    %337 = arith.mulf %335, %336 : vector<18x32xf32>
    %338 = vector.broadcast %317 : vector<1x32xf32> to vector<18x32xf32>
    %339 = arith.addf %337, %338 : vector<18x32xf32>
    %c0_157 = arith.constant 0 : index
    %c0_158 = arith.constant 0 : index
    %340 = vector.load %arg25[%c0_157, %c0_158] : memref<32x128xf32, #tpu.memory_space<vmem>>, vector<32x128xf32>
    %cst_159 = arith.constant dense<0.000000e+00> : vector<18x128xf32>
    %341 = tpu.matmul %339, %340, %cst_159 {dimension_numbers = #tpu.dot_dimension_numbers<[1], [0], [0], [1], [0, 0, 1, 1], [], []>} : vector<18x32xf32>, vector<32x128xf32>, vector<18x128xf32> -> vector<18x128xf32>
    %c0_160 = arith.constant 0 : index
    %c0_161 = arith.constant 0 : index
    %342 = vector.load %arg26[%c0_160, %c0_161] : memref<1x128xf32, #tpu.memory_space<vmem>>, vector<1x128xf32>
    %343 = vector.broadcast %342 : vector<1x128xf32> to vector<18x128xf32>
    %344 = arith.addf %341, %343 : vector<18x128xf32>
    %cst_162 = arith.constant 5.000000e-01 : f32
    %345 = vector.broadcast %cst_162 : f32 to vector<18x128xf32>
    %346 = arith.mulf %345, %344 : vector<18x128xf32>
    %cst_163 = arith.constant 4.471500e-02 : f32
    %347 = vector.broadcast %cst_163 : f32 to vector<18x128xf32>
    %348 = arith.mulf %347, %344 : vector<18x128xf32>
    %349 = arith.mulf %348, %344 : vector<18x128xf32>
    %350 = arith.mulf %349, %344 : vector<18x128xf32>
    %351 = arith.addf %344, %350 : vector<18x128xf32>
    %cst_164 = arith.constant 0.797884583 : f32
    %352 = vector.broadcast %cst_164 : f32 to vector<18x128xf32>
    %353 = arith.mulf %352, %351 : vector<18x128xf32>
    %354 = math.tanh %353 : vector<18x128xf32>
    %cst_165 = arith.constant 1.000000e+00 : f32
    %355 = vector.broadcast %cst_165 : f32 to vector<18x128xf32>
    %356 = arith.addf %355, %354 : vector<18x128xf32>
    %357 = arith.mulf %346, %356 : vector<18x128xf32>
    %c0_166 = arith.constant 0 : index
    %c0_167 = arith.constant 0 : index
    %358 = vector.load %arg27[%c0_166, %c0_167] : memref<128x32xf32, #tpu.memory_space<vmem>>, vector<128x32xf32>
    %cst_168 = arith.constant dense<0.000000e+00> : vector<18x32xf32>
    %359 = tpu.matmul %357, %358, %cst_168 {dimension_numbers = #tpu.dot_dimension_numbers<[1], [0], [0], [1], [0, 0, 1, 1], [], []>} : vector<18x128xf32>, vector<128x32xf32>, vector<18x32xf32> -> vector<18x32xf32>
    %c0_169 = arith.constant 0 : index
    %c0_170 = arith.constant 0 : index
    %360 = vector.load %arg28[%c0_169, %c0_170] : memref<1x32xf32, #tpu.memory_space<vmem>>, vector<1x32xf32>
    %361 = vector.broadcast %360 : vector<1x32xf32> to vector<18x32xf32>
    %362 = arith.addf %359, %361 : vector<18x32xf32>
    %363 = arith.addf %315, %362 : vector<18x32xf32>
    %c0_171 = arith.constant 0 : index
    %c0_172 = arith.constant 0 : index
    %364 = vector.load %arg29[%c0_171, %c0_172] : memref<1x32xf32, #tpu.memory_space<vmem>>, vector<1x32xf32>
    %c0_173 = arith.constant 0 : index
    %c0_174 = arith.constant 0 : index
    %365 = vector.load %arg30[%c0_173, %c0_174] : memref<1x32xf32, #tpu.memory_space<vmem>>, vector<1x32xf32>
    %cst_175 = arith.constant dense<0.000000e+00> : vector<18xf32>
    %366 = vector.multi_reduction <add>, %363, %cst_175 [1] : vector<18x32xf32> to vector<18xf32>
    %367 = vector.shape_cast %366 : vector<18xf32> to vector<18x1xf32>
    %cst_176 = arith.constant 3.200000e+01 : f32
    %368 = vector.broadcast %cst_176 : f32 to vector<18x1xf32>
    %369 = arith.divf %367, %368 : vector<18x1xf32>
    %370 = vector.broadcast %369 : vector<18x1xf32> to vector<18x32xf32>
    %371 = arith.subf %363, %370 : vector<18x32xf32>
    %372 = arith.mulf %371, %371 : vector<18x32xf32>
    %cst_177 = arith.constant dense<0.000000e+00> : vector<18xf32>
    %373 = vector.multi_reduction <add>, %372, %cst_177 [1] : vector<18x32xf32> to vector<18xf32>
    %374 = vector.shape_cast %373 : vector<18xf32> to vector<18x1xf32>
    %cst_178 = arith.constant 3.200000e+01 : f32
    %375 = vector.broadcast %cst_178 : f32 to vector<18x1xf32>
    %376 = arith.divf %374, %375 : vector<18x1xf32>
    %377 = vector.broadcast %369 : vector<18x1xf32> to vector<18x32xf32>
    %378 = arith.subf %363, %377 : vector<18x32xf32>
    %cst_179 = arith.constant 9.99999974E-6 : f32
    %379 = vector.broadcast %cst_179 : f32 to vector<18x1xf32>
    %380 = arith.addf %376, %379 : vector<18x1xf32>
    %381 = math.rsqrt %380 : vector<18x1xf32>
    %382 = vector.broadcast %381 : vector<18x1xf32> to vector<18x32xf32>
    %383 = arith.mulf %378, %382 : vector<18x32xf32>
    %384 = vector.broadcast %364 : vector<1x32xf32> to vector<18x32xf32>
    %385 = arith.mulf %383, %384 : vector<18x32xf32>
    %386 = vector.broadcast %365 : vector<1x32xf32> to vector<18x32xf32>
    %387 = arith.addf %385, %386 : vector<18x32xf32>
    %c0_180 = arith.constant 0 : index
    %c0_181 = arith.constant 0 : index
    %388 = vector.load %arg31[%c0_180, %c0_181] : memref<32x64xf32, #tpu.memory_space<vmem>>, vector<32x64xf32>
    %cst_182 = arith.constant dense<0.000000e+00> : vector<18x64xf32>
    %389 = tpu.matmul %387, %388, %cst_182 {dimension_numbers = #tpu.dot_dimension_numbers<[1], [0], [0], [1], [0, 0, 1, 1], [], []>} : vector<18x32xf32>, vector<32x64xf32>, vector<18x64xf32> -> vector<18x64xf32>
    %c0_183 = arith.constant 0 : index
    %c0_184 = arith.constant 0 : index
    %390 = vector.load %arg32[%c0_183, %c0_184] : memref<18x64xf32, #tpu.memory_space<vmem>>, vector<18x64xf32>
    tpu.vector_store %arg32[%c0_183, %c0_184], %389 {strides = array<i32>} : memref<18x64xf32, #tpu.memory_space<vmem>>, vector<18x64xf32>,
    return
  }
}

</mosaic_0001>

<llo_original>
// kernel: _lambda_.1
$region0: #{_lambda_.1}
  #allocation0 [shape = 'u32[]', space=smem, size = 0x4, offset = 0x4, fixed_abs, tag = 'smem constant byte address 0x4 - core index']
  #allocation1 [shape = 'u32[144,128]{1,0:T(1,128)}', space=vmem, size = 0x12000, scoped, tag = 'internal scratch']
  #allocation2 [shape = 'f32[18,32]{1,0:T(8,128)}', space=vmem, size = 0x3000, scoped, tag = 'scratch operand']
  %s0 = inlined_call_operand.smem [shape: u32[33], index: -1, kind: input, shape index: {}]
  %s1 = sld [smem:[%s0]]
  %s2 = scalar_lea.smem %s0, 1
  %s3 = sld [smem:[%s2]]
  %s4 = scalar_lea.smem %s0, 2
  %s5 = sld [smem:[%s4]]
  %s6 = scalar_lea.smem %s0, 3
  %s7 = sld [smem:[%s6]]
  %s8 = scalar_lea.smem %s0, 4
  %s9 = sld [smem:[%s8]]
  %s10 = scalar_lea.smem %s0, 5
  %s11 = sld [smem:[%s10]]
  %s12 = scalar_lea.smem %s0, 6
  %s13 = sld [smem:[%s12]]
  %s14 = scalar_lea.smem %s0, 7
  %s15 = sld [smem:[%s14]]
  %s16 = scalar_lea.smem %s0, 8
  %s17 = sld [smem:[%s16]]
  %s18 = scalar_lea.smem %s0, 9
  %s19 = sld [smem:[%s18]]
  %s20 = scalar_lea.smem %s0, 10
  %s21 = sld [smem:[%s20]]
  %s22 = scalar_lea.smem %s0, 11
  %s23 = sld [smem:[%s22]]
  %s24 = scalar_lea.smem %s0, 12
  %s25 = sld [smem:[%s24]]
  %s26 = scalar_lea.smem %s0, 13
  %s27 = sld [smem:[%s26]]
  %s28 = scalar_lea.smem %s0, 14
  %s29 = sld [smem:[%s28]]
  %s30 = scalar_lea.smem %s0, 15
  %s31 = sld [smem:[%s30]]
  %s32 = scalar_lea.smem %s0, 16
  %s33 = sld [smem:[%s32]]
  %s34 = scalar_lea.smem %s0, 17
  %s35 = sld [smem:[%s34]]
  %s36 = scalar_lea.smem %s0, 18
  %s37 = sld [smem:[%s36]]
  %s38 = scalar_lea.smem %s0, 19
  %s39 = sld [smem:[%s38]]
  %s40 = scalar_lea.smem %s0, 20
  %s41 = sld [smem:[%s40]]
  %s42 = scalar_lea.smem %s0, 21
  %s43 = sld [smem:[%s42]]
  %s44 = scalar_lea.smem %s0, 22
  %s45 = sld [smem:[%s44]]
  %s46 = scalar_lea.smem %s0, 23
  %s47 = sld [smem:[%s46]]
  %s48 = scalar_lea.smem %s0, 24
  %s49 = sld [smem:[%s48]]
  %s50 = scalar_lea.smem %s0, 25
  %s51 = sld [smem:[%s50]]
  %s52 = scalar_lea.smem %s0, 26
  %s53 = sld [smem:[%s52]]
  %s54 = scalar_lea.smem %s0, 27
  %s55 = sld [smem:[%s54]]
  %s56 = scalar_lea.smem %s0, 28
  %s57 = sld [smem:[%s56]]
  %s58 = scalar_lea.smem %s0, 29
  %s59 = sld [smem:[%s58]]
  %s60 = scalar_lea.smem %s0, 30
  %s61 = sld [smem:[%s60]]
  %s62 = scalar_lea.smem %s0, 31
  %s63 = sld [smem:[%s62]]
  %s64 = scalar_lea.smem %s0, 32
  %s65 = sld [smem:[%s64]]
  %s66 = sld [smem:[#allocation0]]
  $region138: #{_lambda_.1} parent=0
    _
  %s68 = ssub.s32 1, %s66
  %s69 = scalar_select 0, %s68, %s66
  // Predicated region
  $region2: #{_lambda_.1} parent=0 // pred_check
    _
  $region3: #{_lambda_.1} parent=0 // pred_check_branch
    %71 = sbr.rel (0) target = $region5
  $region4: #{_lambda_.1} parent=0 // pred_region
    _
  $region5: #{_lambda_.1} parent=0 // pred_fallthru
    _
  // Predicated region
  $region6: #{_lambda_.1} parent=0 // pred_check
    _
  $region7: #{_lambda_.1} parent=0 // pred_check_branch
    %73 = sbr.rel (0) target = $region9
  $region8: #{_lambda_.1} parent=0 // pred_region
    _
  $region9: #{_lambda_.1} parent=0 // pred_fallthru
    _
  // Predicated region
  $region10: #{_lambda_.1} parent=0 // pred_check
    _
  $region11: #{_lambda_.1} parent=0 // pred_check_branch
    %75 = sbr.rel (0) target = $region13
  $region12: #{_lambda_.1} parent=0 // pred_region
    _
  $region13: #{_lambda_.1} parent=0 // pred_fallthru
    _
  // Predicated region
  $region14: #{_lambda_.1} parent=0 // pred_check
    _
  $region15: #{_lambda_.1} parent=0 // pred_check_branch
    %77 = sbr.rel (0) target = $region17
  $region16: #{_lambda_.1} parent=0 // pred_region
    _
  $region17: #{_lambda_.1} parent=0 // pred_fallthru
    _
  // Predicated region
  $region18: #{_lambda_.1} parent=0 // pred_check
    _
  $region19: #{_lambda_.1} parent=0 // pred_check_branch
    %79 = sbr.rel (0) target = $region21
  $region20: #{_lambda_.1} parent=0 // pred_region
    _
  $region21: #{_lambda_.1} parent=0 // pred_fallthru
    _
  // Predicated region
  $region22: #{_lambda_.1} parent=0 // pred_check
    _
  $region23: #{_lambda_.1} parent=0 // pred_check_branch
    %81 = sbr.rel (0) target = $region25
  $region24: #{_lambda_.1} parent=0 // pred_region
    _
  $region25: #{_lambda_.1} parent=0 // pred_fallthru
    _
  // Predicated region
  $region26: #{_lambda_.1} parent=0 // pred_check
    _
  $region27: #{_lambda_.1} parent=0 // pred_check_branch
    %83 = sbr.rel (0) target = $region29
  $region28: #{_lambda_.1} parent=0 // pred_region
    _
  $region29: #{_lambda_.1} parent=0 // pred_fallthru
    _
  // Predicated region
  $region30: #{_lambda_.1} parent=0 // pred_check
    _
  $region31: #{_lambda_.1} parent=0 // pred_check_branch
    %85 = sbr.rel (0) target = $region33
  $region32: #{_lambda_.1} parent=0 // pred_region
    _
  $region33: #{_lambda_.1} parent=0 // pred_fallthru
    _
  // Predicated region
  $region34: #{_lambda_.1} parent=0 // pred_check
    _
  $region35: #{_lambda_.1} parent=0 // pred_check_branch
    %87 = sbr.rel (0) target = $region37
  $region36: #{_lambda_.1} parent=0 // pred_region
    _
  $region37: #{_lambda_.1} parent=0 // pred_fallthru
    _
  // Predicated region
  $region38: #{_lambda_.1} parent=0 // pred_check
    _
  $region39: #{_lambda_.1} parent=0 // pred_check_branch
    %89 = sbr.rel (0) target = $region41
  $region40: #{_lambda_.1} parent=0 // pred_region
    _
  $region41: #{_lambda_.1} parent=0 // pred_fallthru
    _
  // Predicated region
  $region42: #{_lambda_.1} parent=0 // pred_check
    _
  $region43: #{_lambda_.1} parent=0 // pred_check_branch
    %91 = sbr.rel (0) target = $region45
  $region44: #{_lambda_.1} parent=0 // pred_region
    _
  $region45: #{_lambda_.1} parent=0 // pred_fallthru
    _
  // Predicated region
  $region46: #{_lambda_.1} parent=0 // pred_check
    _
  $region47: #{_lambda_.1} parent=0 // pred_check_branch
    %93 = sbr.rel (0) target = $region49
  $region48: #{_lambda_.1} parent=0 // pred_region
    _
  $region49: #{_lambda_.1} parent=0 // pred_fallthru
    _
  // Predicated region
  $region50: #{_lambda_.1} parent=0 // pred_check
    _
  $region51: #{_lambda_.1} parent=0 // pred_check_branch
    %95 = sbr.rel (0) target = $region53
  $region52: #{_lambda_.1} parent=0 // pred_region
    _
  $region53: #{_lambda_.1} parent=0 // pred_fallthru
    _
  // Predicated region
  $region54: #{_lambda_.1} parent=0 // pred_check
    _
  $region55: #{_lambda_.1} parent=0 // pred_check_branch
    %97 = sbr.rel (0) target = $region57
  $region56: #{_lambda_.1} parent=0 // pred_region
    _
  $region57: #{_lambda_.1} parent=0 // pred_fallthru
    _
  // Predicated region
  $region58: #{_lambda_.1} parent=0 // pred_check
    _
  $region59: #{_lambda_.1} parent=0 // pred_check_branch
    %99 = sbr.rel (0) target = $region61
  $region60: #{_lambda_.1} parent=0 // pred_region
    _
  $region61: #{_lambda_.1} parent=0 // pred_fallthru
    _
  // Predicated region
  $region62: #{_lambda_.1} parent=0 // pred_check
    _
  $region63: #{_lambda_.1} parent=0 // pred_check_branch
    %101 = sbr.rel (0) target = $region65
  $region64: #{_lambda_.1} parent=0 // pred_region
    _
  $region65: #{_lambda_.1} parent=0 // pred_fallthru
    _
  // Predicated region
  $region66: #{_lambda_.1} parent=0 // pred_check
    _
  $region67: #{_lambda_.1} parent=0 // pred_check_branch
    %103 = sbr.rel (0) target = $region69
  $region68: #{_lambda_.1} parent=0 // pred_region
    _
  $region69: #{_lambda_.1} parent=0 // pred_fallthru
    _
  // Predicated region
  $region70: #{_lambda_.1} parent=0 // pred_check
    _
  $region71: #{_lambda_.1} parent=0 // pred_check_branch
    %105 = sbr.rel (0) target = $region73
  $region72: #{_lambda_.1} parent=0 // pred_region
    _
  $region73: #{_lambda_.1} parent=0 // pred_fallthru
    _
  // Predicated region
  $region74: #{_lambda_.1} parent=0 // pred_check
    _
  $region75: #{_lambda_.1} parent=0 // pred_check_branch
    %107 = sbr.rel (0) target = $region77
  $region76: #{_lambda_.1} parent=0 // pred_region
    _
  $region77: #{_lambda_.1} parent=0 // pred_fallthru
    _
  // Predicated region
  $region78: #{_lambda_.1} parent=0 // pred_check
    _
  $region79: #{_lambda_.1} parent=0 // pred_check_branch
    %109 = sbr.rel (0) target = $region81
  $region80: #{_lambda_.1} parent=0 // pred_region
    _
  $region81: #{_lambda_.1} parent=0 // pred_fallthru
    _
  // Predicated region
  $region82: #{_lambda_.1} parent=0 // pred_check
    _
  $region83: #{_lambda_.1} parent=0 // pred_check_branch
    %111 = sbr.rel (0) target = $region85
  $region84: #{_lambda_.1} parent=0 // pred_region
    _
  $region85: #{_lambda_.1} parent=0 // pred_fallthru
    _
  // Predicated region
  $region86: #{_lambda_.1} parent=0 // pred_check
    _
  $region87: #{_lambda_.1} parent=0 // pred_check_branch
    %113 = sbr.rel (0) target = $region89
  $region88: #{_lambda_.1} parent=0 // pred_region
    _
  $region89: #{_lambda_.1} parent=0 // pred_fallthru
    _
  // Predicated region
  $region90: #{_lambda_.1} parent=0 // pred_check
    _
  $region91: #{_lambda_.1} parent=0 // pred_check_branch
    %115 = sbr.rel (0) target = $region93
  $region92: #{_lambda_.1} parent=0 // pred_region
    _
  $region93: #{_lambda_.1} parent=0 // pred_fallthru
    _
  // Predicated region
  $region94: #{_lambda_.1} parent=0 // pred_check
    _
  $region95: #{_lambda_.1} parent=0 // pred_check_branch
    %117 = sbr.rel (0) target = $region97
  $region96: #{_lambda_.1} parent=0 // pred_region
    _
  $region97: #{_lambda_.1} parent=0 // pred_fallthru
    _
  // Predicated region
  $region98: #{_lambda_.1} parent=0 // pred_check
    _
  $region99: #{_lambda_.1} parent=0 // pred_check_branch
    %119 = sbr.rel (0) target = $region101
  $region100: #{_lambda_.1} parent=0 // pred_region
    _
  $region101: #{_lambda_.1} parent=0 // pred_fallthru
    _
  // Predicated region
  $region102: #{_lambda_.1} parent=0 // pred_check
    _
  $region103: #{_lambda_.1} parent=0 // pred_check_branch
    %121 = sbr.rel (0) target = $region105
  $region104: #{_lambda_.1} parent=0 // pred_region
    _
  $region105: #{_lambda_.1} parent=0 // pred_fallthru
    _
  // Predicated region
  $region106: #{_lambda_.1} parent=0 // pred_check
    _
  $region107: #{_lambda_.1} parent=0 // pred_check_branch
    %123 = sbr.rel (0) target = $region109
  $region108: #{_lambda_.1} parent=0 // pred_region
    _
  $region109: #{_lambda_.1} parent=0 // pred_fallthru
    _
  // Predicated region
  $region110: #{_lambda_.1} parent=0 // pred_check
    _
  $region111: #{_lambda_.1} parent=0 // pred_check_branch
    %125 = sbr.rel (0) target = $region113
  $region112: #{_lambda_.1} parent=0 // pred_region
    _
  $region113: #{_lambda_.1} parent=0 // pred_fallthru
    _
  // Predicated region
  $region114: #{_lambda_.1} parent=0 // pred_check
    _
  $region115: #{_lambda_.1} parent=0 // pred_check_branch
    %127 = sbr.rel (0) target = $region117
  $region116: #{_lambda_.1} parent=0 // pred_region
    _
  $region117: #{_lambda_.1} parent=0 // pred_fallthru
    _
  // Predicated region
  $region118: #{_lambda_.1} parent=0 // pred_check
    _
  $region119: #{_lambda_.1} parent=0 // pred_check_branch
    %129 = sbr.rel (0) target = $region121
  $region120: #{_lambda_.1} parent=0 // pred_region
    _
  $region121: #{_lambda_.1} parent=0 // pred_fallthru
    _
  // Predicated region
  $region122: #{_lambda_.1} parent=0 // pred_check
    _
  $region123: #{_lambda_.1} parent=0 // pred_check_branch
    %131 = sbr.rel (0) target = $region125
  $region124: #{_lambda_.1} parent=0 // pred_region
    _
  $region125: #{_lambda_.1} parent=0 // pred_fallthru
    _
  // Predicated region
  $region126: #{_lambda_.1} parent=0 // pred_check
    _
  $region127: #{_lambda_.1} parent=0 // pred_check_branch
    %133 = sbr.rel (0) target = $region129
  $region128: #{_lambda_.1} parent=0 // pred_region
    _
  $region129: #{_lambda_.1} parent=0 // pred_fallthru
    _
  %v134 = vld [vmem:[%s5] sm:$0xff]
  %v135 = vld [vmem:[%s5 + $0x8] sm:$0x1]
  %v136 = vld [vmem:[%s1] sm:$0x3]
  %v137 = vld [vmem:[%s7] sm:$0xff]
  %v138 = vld [vmem:[%s7 + $0x8] sm:$0xff]
  %v139 = vld [vmem:[%s7 + $0x10] sm:$0xff]
  %v140 = vld [vmem:[%s7 + $0x18] sm:$0xff]
  %v141 = vld [vmem:[%s9] sm:$0x1]
  %v143 = vlaneseq
  %v144 = vshrl.u32 %v143, 7
  %v145 = vsub.s32 0, %v144
  %v146 = vrot.slane %v141, %v145
  %vm148 = vcmask 261120
  %v150 = vsel %vm148, %v136, 0
  %152 = vmatprep.subr.mxu0 0.0
  %153 = vmatpush1.msra.mxu0 %v137
  %154 = vmatprep.subr.mxu0 0.0
  %155 = vmatpush1.msra.mxu0 %v138
  %156 = vmatprep.subr.mxu0 0.0
  %157 = vmatpush1.msra.mxu0 %v139
  %158 = vmatprep.subr.mxu0 0.0
  %159 = vmatpush1.msra.mxu0 %v140
  %160 = vmatprep.subr.mxu0 0.0
  %161 = vmatpush1.msra.mxu0 0.0
  %162 = vmatprep.subr.mxu0 0.0
  %163 = vmatpush1.msra.mxu0 0.0
  %164 = vmatprep.subr.mxu0 0.0
  %165 = vmatpush1.msra.mxu0 0.0
  %166 = vmatprep.subr.mxu0 0.0
  %167 = vmatpush1.msra.mxu0 0.0
  %168 = vmatprep.subr.mxu0 0.0
  %169 = vmatpush1.msra.mxu0 0.0
  %170 = vmatprep.subr.mxu0 0.0
  %171 = vmatpush1.msra.mxu0 0.0
  %172 = vmatprep.subr.mxu0 0.0
  %173 = vmatpush1.msra.mxu0 0.0
  %174 = vmatprep.subr.mxu0 0.0
  %175 = vmatpush1.msra.mxu0 0.0
  %176 = vmatprep.subr.mxu0 0.0
  %177 = vmatpush1.msra.mxu0 0.0
  %178 = vmatprep.subr.mxu0 0.0
  %179 = vmatpush1.msra.mxu0 0.0
  %180 = vmatprep.subr.mxu0 0.0
  %181 = vmatpush1.msra.mxu0 0.0
  %182 = vmatprep.subr.mxu0 0.0
  %183 = vmatpush1.msra.mxu0 0.0
  %184 = vmatprep.subr.mxu0 0.0
  %185 = vmatpush1.msra.mxu0 0.0
  %186 = vmatprep.subr.mxu0 0.0
  %187 = vmatpush1.msra.mxu0 0.0
  %188 = vmatprep.subr.mxu0 0.0
  %189 = vmatpush1.msra.mxu0 0.0
  %190 = vmatprep.subr.mxu0 0.0
  %191 = vmatpush1.msra.mxu0 0.0
  %192 = vmatprep.subr.mxu0 0.0
  %193 = vmatpush1.msra.mxu0 0.0
  %194 = vmatprep.subr.mxu0 0.0
  %195 = vmatpush1.msra.mxu0 0.0
  %196 = vmatprep.subr.mxu0 0.0
  %197 = vmatpush1.msra.mxu0 0.0
  %198 = vmatprep.subr.mxu0 0.0
  %199 = vmatpush1.msra.mxu0 0.0
  %200 = vmatprep.subr.mxu0 0.0
  %201 = vmatpush1.msra.mxu0 0.0
  %202 = vmatprep.subr.mxu0 0.0
  %203 = vmatpush1.msra.mxu0 0.0
  %204 = vmatprep.subr.mxu0 0.0
  %205 = vmatpush1.msra.mxu0 0.0
  %206 = vmatprep.subr.mxu0 0.0
  %207 = vmatpush1.msra.mxu0 0.0
  %208 = vmatprep.subr.mxu0 0.0
  %209 = vmatpush1.msra.mxu0 0.0
  %210 = vmatprep.subr.mxu0 0.0
  %211 = vmatpush1.msra.mxu0 0.0
  %212 = vmatprep.subr.mxu0 0.0
  %213 = vmatpush1.msra.mxu0 0.0
  %214 = vmatprep.subr.mxu0 0.0
  %215 = vmatpush1.msra.mxu0 0.0
  %216 = vmatprep.mubr.f32.mxu0 0.0
  %217 = vmatmul.mubr.f32.gmra.mrb[0].mxu0 %v150
  %v218 = vpop.f32.mrb[0].mxu0
  %v219 = vadd.f32 %v146, %v218
  %v220 = vpop.f32.mrb[0].mxu0
  %221 = vdwg.mxu0
  %v222 = vadd.f32 %v219, %v134
  %vm223 = vcmask 253952
  %224 = vst.msk [vmem:[#allocation2] sm:$0x1] %vm223, %v222
  %v225 = vld [vmem:[%s3] sm:$0xff]
  %vm228 = vcmask 1046528
  %v229 = vrot.slane %v134, 1
  %v230 = vrot.slane %v135, 1
  %v231 = vsel %vm228, %v229, %v230
  %v233 = vadd.f32 %v225, %v231
  %234 = vst.msk [vmem:[#allocation2 + $0x1] sm:$0xff] %vm148, %v233
  %v235 = vrot.slane %v134, 7
  %v237 = vadd.f32 %v219, %v235
  %vm238 = vcmask 254977
  %239 = vst.msk [vmem:[#allocation2 + $0x8] sm:$0x2] %vm238, %v237
  %s240 = scalar_lea.vmem %s3, 8
  %v241 = vld [vmem:[%s240] sm:$0xff]
  %v242 = vadd.f32 %v241, %v231
  %243 = vst.msk [vmem:[#allocation2 + $0xa] sm:$0xff] %vm148, %v242
  %v244 = vld [vmem:[#allocation2] sm:$0xff]
  %v245 = vld [vmem:[#allocation2 + $0x8] sm:$0xff]
  %v246 = vld [vmem:[#allocation2 + $0x10] sm:$0x3]
  %v247 = vlaneseq
  %v248 = vshrl.u32 %v247, 7
  %v249 = vadd.s32 %v248, 8
  %v250 = vlaneseq
  %v251 = vand.u32 %v250, 127
  %v252 = vld [vmem:[%s11] sm:$0x1]
  %v253 = vld [vmem:[%s13] sm:$0x1]
  %v254 = vsel %vm148, %v244, 0.0
  %255 = vadd.xlane.f32.xlu0 %v254
  %v256 = vpop.xlane.xlu0 %255
  %v257 = vsel %vm148, %v245, 0.0
  %258 = vadd.xlane.f32.xlu0 %v257
  %v259 = vpop.xlane.xlu0 %258
  %vm260 = vcmask 254976
  %v261 = vsel %vm260, %v246, 0.0
  %262 = vadd.xlane.f32.xlu0 %v261
  %v263 = vpop.xlane.xlu0 %262
  %v264 = vrcp.pop 32.0
  %v265 = vmul.f32 %v256, %v264
  %v266 = vmul.f32 %v259, %v264
  %v267 = vmul.f32 %v263, %v264
  %v268 = vsub.f32 %v244, %v265
  %v269 = vsub.f32 %v245, %v266
  %v270 = vsub.f32 %v246, %v267
  %v271 = vmul.f32 %v268, %v268
  %v272 = vmul.f32 %v269, %v269
  %v273 = vmul.f32 %v270, %v270
  %v274 = vsel %vm148, %v271, 0.0
  %275 = vadd.xlane.f32.xlu0 %v274
  %v276 = vpop.xlane.xlu0 %275
  %v277 = vsel %vm148, %v272, 0.0
  %278 = vadd.xlane.f32.xlu0 %v277
  %v279 = vpop.xlane.xlu0 %278
  %v280 = vsel %vm260, %v273, 0.0
  %281 = vadd.xlane.f32.xlu0 %v280
  %v282 = vpop.xlane.xlu0 %281
  %v283 = vmul.f32 %v276, %v264
  %v284 = vmul.f32 %v279, %v264
  %v285 = vmul.f32 %v282, %v264
  %v286 = vadd.f32 %v283, 1e-05
  %v287 = vadd.f32 %v284, 1e-05
  %v288 = vadd.f32 %v285, 1e-05
  %v289 = vrsqrt.pop %v286
  %v290 = vrsqrt.pop %v287
  %v291 = vrsqrt.pop %v288
  %v292 = vmul.f32 %v268, %v289
  %v293 = vmul.f32 %v269, %v290
  %v294 = vmul.f32 %v270, %v291
  %v296 = vlaneseq
  %v297 = vshrl.u32 %v296, 7
  %v298 = vsub.s32 0, %v297
  %v299 = vrot.slane %v252, %v298
  %v301 = vmul.f32 %v292, %v299
  %v302 = vmul.f32 %v293, %v299
  %v303 = vmul.f32 %v294, %v299
  %v305 = vlaneseq
  %v306 = vshrl.u32 %v305, 7
  %v307 = vsub.s32 0, %v306
  %v308 = vrot.slane %v253, %v307
  %v310 = vadd.f32 %v301, %v308
  %v311 = vadd.f32 %v302, %v308
  %v312 = vadd.f32 %v303, %v308
  %v313 = vld [vmem:[%s15] sm:$0xff]
  %v314 = vld [vmem:[%s15 + $0x8] sm:$0xff]
  %v315 = vld [vmem:[%s15 + $0x10] sm:$0xff]
  %v316 = vld [vmem:[%s15 + $0x18] sm:$0xff]
  %v317 = vld [vmem:[%s17] sm:$0x1]
  %v319 = vlaneseq
  %v320 = vshrl.u32 %v319, 7
  %v321 = vsub.s32 0, %v320
  %v322 = vrot.slane %v317, %v321
  %v325 = vsel %vm148, %v310, 0
  %v328 = vsel %vm148, %v311, 0
  %v331 = vsel %vm148, %v312, 0
  %333 = vmatprep.subr.mxu0 0.0
  %334 = vmatpush1.msra.mxu0 %v313
  %335 = vmatprep.subr.mxu0 0.0
  %336 = vmatpush1.msra.mxu0 %v314
  %337 = vmatprep.subr.mxu0 0.0
  %338 = vmatpush1.msra.mxu0 %v315
  %339 = vmatprep.subr.mxu0 0.0
  %340 = vmatpush1.msra.mxu0 %v316
  %341 = vmatprep.subr.mxu0 0.0
  %342 = vmatpush1.msra.mxu0 0.0
  %343 = vmatprep.subr.mxu0 0.0
  %344 = vmatpush1.msra.mxu0 0.0
  %345 = vmatprep.subr.mxu0 0.0
  %346 = vmatpush1.msra.mxu0 0.0
  %347 = vmatprep.subr.mxu0 0.0
  %348 = vmatpush1.msra.mxu0 0.0
  %349 = vmatprep.subr.mxu0 0.0
  %350 = vmatpush1.msra.mxu0 0.0
  %351 = vmatprep.subr.mxu0 0.0
  %352 = vmatpush1.msra.mxu0 0.0
  %353 = vmatprep.subr.mxu0 0.0
  %354 = vmatpush1.msra.mxu0 0.0
  %355 = vmatprep.subr.mxu0 0.0
  %356 = vmatpush1.msra.mxu0 0.0
  %357 = vmatprep.subr.mxu0 0.0
  %358 = vmatpush1.msra.mxu0 0.0
  %359 = vmatprep.subr.mxu0 0.0
  %360 = vmatpush1.msra.mxu0 0.0
  %361 = vmatprep.subr.mxu0 0.0
  %362 = vmatpush1.msra.mxu0 0.0
  %363 = vmatprep.subr.mxu0 0.0
  %364 = vmatpush1.msra.mxu0 0.0
  %365 = vmatprep.subr.mxu0 0.0
  %366 = vmatpush1.msra.mxu0 0.0
  %367 = vmatprep.subr.mxu0 0.0
  %368 = vmatpush1.msra.mxu0 0.0
  %369 = vmatprep.subr.mxu0 0.0
  %370 = vmatpush1.msra.mxu0 0.0
  %371 = vmatprep.subr.mxu0 0.0
  %372 = vmatpush1.msra.mxu0 0.0
  %373 = vmatprep.subr.mxu0 0.0
  %374 = vmatpush1.msra.mxu0 0.0
  %375 = vmatprep.subr.mxu0 0.0
  %376 = vmatpush1.msra.mxu0 0.0
  %377 = vmatprep.subr.mxu0 0.0
  %378 = vmatpush1.msra.mxu0 0.0
  %379 = vmatprep.subr.mxu0 0.0
  %380 = vmatpush1.msra.mxu0 0.0
  %381 = vmatprep.subr.mxu0 0.0
  %382 = vmatpush1.msra.mxu0 0.0
  %383 = vmatprep.subr.mxu0 0.0
  %384 = vmatpush1.msra.mxu0 0.0
  %385 = vmatprep.subr.mxu0 0.0
  %386 = vmatpush1.msra.mxu0 0.0
  %387 = vmatprep.subr.mxu0 0.0
  %388 = vmatpush1.msra.mxu0 0.0
  %389 = vmatprep.subr.mxu0 0.0
  %390 = vmatpush1.msra.mxu0 0.0
  %391 = vmatprep.subr.mxu0 0.0
  %392 = vmatpush1.msra.mxu0 0.0
  %393 = vmatprep.subr.mxu0 0.0
  %394 = vmatpush1.msra.mxu0 0.0
  %395 = vmatprep.subr.mxu0 0.0
  %396 = vmatpush1.msra.mxu0 0.0
  %397 = vmatprep.mubr.f32.mxu0 0.0
  %398 = vmatmul.mubr.f32.gmra.mrb[0].mxu0 %v325
  %v399 = vpop.f32.mrb[0].mxu0
  %v400 = vadd.f32 %v322, %v399
  %v401 = vpop.f32.mrb[0].mxu0
  %402 = vmatprep.mubr.f32.mxu0 0.0
  %403 = vmatmul.mubr.f32.gmra.mrb[0].mxu0 %v328
  %v404 = vpop.f32.mrb[0].mxu0
  %v405 = vadd.f32 %v322, %v404
  %v406 = vpop.f32.mrb[0].mxu0
  %407 = vmatprep.mubr.f32.mxu0 0.0
  %408 = vmatmul.mubr.f32.gmra.mrb[0].mxu0 %v331
  %v409 = vpop.f32.mrb[0].mxu0
  %v410 = vadd.f32 %v322, %v409
  %v411 = vpop.f32.mrb[0].mxu0
  %412 = vdwg.mxu0
  %v413 = vmul.f32 %v400, 0.25
  %v414 = vmul.f32 %v405, 0.25
  %417 = vrot.lane.b32.xlu0 %v400, 96
  %v418 = vpop.permute.xlu0 %417
  %419 = vrot.lane.b32.xlu0 %v405, 96
  %v420 = vpop.permute.xlu0 %419
  %vm421 = vcmask 130048
  %v423 = vsel %vm421, %v413, 0
  %v426 = vsel %vm421, %v414, 0
  %v428 = vsel %vm421, %v418, 0
  %v430 = vsel %vm421, %v420, 0
  %432 = vmatprep.subr.mxu0 0.0
  %433 = vmatpush1.xpose.msra.mxu0 %v428
  %434 = vmatprep.subr.mxu0 0.0
  %435 = vmatpush1.xpose.msra.mxu0 %v430
  %436 = vmatprep.subr.mxu0 0.0
  %437 = vmatpush1.xpose.msra.mxu0 0.0
  %438 = vmatprep.subr.mxu0 0.0
  %439 = vmatpush1.xpose.msra.mxu0 0.0
  %440 = vmatprep.subr.mxu0 0.0
  %441 = vmatpush1.xpose.msra.mxu0 0.0
  %442 = vmatprep.subr.mxu0 0.0
  %443 = vmatpush1.xpose.msra.mxu0 0.0
  %444 = vmatprep.subr.mxu0 0.0
  %445 = vmatpush1.xpose.msra.mxu0 0.0
  %446 = vmatprep.subr.mxu0 0.0
  %447 = vmatpush1.xpose.msra.mxu0 0.0
  %448 = vmatprep.subr.mxu0 0.0
  %449 = vmatpush1.xpose.msra.mxu0 0.0
  %450 = vmatprep.subr.mxu0 0.0
  %451 = vmatpush1.xpose.msra.mxu0 0.0
  %452 = vmatprep.subr.mxu0 0.0
  %453 = vmatpush1.xpose.msra.mxu0 0.0
  %454 = vmatprep.subr.mxu0 0.0
  %455 = vmatpush1.xpose.msra.mxu0 0.0
  %456 = vmatprep.subr.mxu0 0.0
  %457 = vmatpush1.xpose.msra.mxu0 0.0
  %458 = vmatprep.subr.mxu0 0.0
  %459 = vmatpush1.xpose.msra.mxu0 0.0
  %460 = vmatprep.subr.mxu0 0.0
  %461 = vmatpush1.xpose.msra.mxu0 0.0
  %462 = vmatprep.subr.mxu0 0.0
  %463 = vmatpush1.xpose.msra.mxu0 0.0
  %464 = vmatprep.subr.mxu0 0.0
  %465 = vmatpush1.xpose.msra.mxu0 0.0
  %466 = vmatprep.subr.mxu0 0.0
  %467 = vmatpush1.xpose.msra.mxu0 0.0
  %468 = vmatprep.subr.mxu0 0.0
  %469 = vmatpush1.xpose.msra.mxu0 0.0
  %470 = vmatprep.subr.mxu0 0.0
  %471 = vmatpush1.xpose.msra.mxu0 0.0
  %472 = vmatprep.subr.mxu0 0.0
  %473 = vmatpush1.xpose.msra.mxu0 0.0
  %474 = vmatprep.subr.mxu0 0.0
  %475 = vmatpush1.xpose.msra.mxu0 0.0
  %476 = vmatprep.subr.mxu0 0.0
  %477 = vmatpush1.xpose.msra.mxu0 0.0
  %478 = vmatprep.subr.mxu0 0.0
  %479 = vmatpush1.xpose.msra.mxu0 0.0
  %480 = vmatprep.subr.mxu0 0.0
  %481 = vmatpush1.xpose.msra.mxu0 0.0
  %482 = vmatprep.subr.mxu0 0.0
  %483 = vmatpush1.xpose.msra.mxu0 0.0
  %484 = vmatprep.subr.mxu0 0.0
  %485 = vmatpush1.xpose.msra.mxu0 0.0
  %486 = vmatprep.subr.mxu0 0.0
  %487 = vmatpush1.xpose.msra.mxu0 0.0
  %488 = vmatprep.subr.mxu0 0.0
  %489 = vmatpush1.xpose.msra.mxu0 0.0
  %490 = vmatprep.subr.mxu0 0.0
  %491 = vmatpush1.xpose.msra.mxu0 0.0
  %492 = vmatprep.subr.mxu0 0.0
  %493 = vmatpush1.xpose.msra.mxu0 0.0
  %494 = vmatprep.subr.mxu0 0.0
  %495 = vmatpush1.xpose.msra.mxu0 0.0
  %496 = vmatprep.mubr.f32.mxu0 0.0
  %497 = vmatmul.mubr.f32.gmra.mrb[0].mxu0 %v423
  %v498 = vpop.f32.mrb[0].mxu0
  %v499 = vadd.f32 0.0, %v498
  %v500 = vpop.f32.mrb[0].mxu0
  %501 = vmatprep.mubr.f32.mxu0 0.0
  %502 = vmatmul.mubr.f32.gmra.mrb[0].mxu0 %v426
  %v503 = vpop.f32.mrb[0].mxu0
  %v504 = vadd.f32 0.0, %v503
  %v505 = vpop.f32.mrb[0].mxu0
  %506 = vdwg.mxu0
  %vm507 = vcmp.le.s32.totalorder %v251, %v248
  %vm508 = vcmp.le.s32.totalorder %v251, %v249
  %v509 = vsel %vm507, %v499, -1e+30
  %v510 = vsel %vm508, %v504, -1e+30
  %vm511 = vcmask 72704
  %v512 = vsel %vm511, %v509, -inf
  %513 = vmax.xlane.f32.xlu0 %v512
  %v514 = vpop.xlane.xlu0 %513
  %vm515 = vcmask 65536
  %v516 = vsel %vm515, %v510, -inf
  %517 = vmax.xlane.f32.xlu0 %v516
  %v518 = vpop.xlane.xlu0 %517
  %v519 = vsub.f32 %v509, %v514
  %v520 = vsub.f32 %v510, %v518
  %v521 = vmul.f32 %v519, 1.442695
  %v522 = vpow.pop %v521
  %v523 = vmul.f32 %v520, 1.442695
  %v524 = vpow.pop %v523
  %v525 = vsel %vm511, %v522, 0.0
  %526 = vadd.xlane.f32.xlu0 %v525
  %v527 = vpop.xlane.xlu0 %526
  %v528 = vsel %vm515, %v524, 0.0
  %529 = vadd.xlane.f32.xlu0 %v528
  %v530 = vpop.xlane.xlu0 %529
  %v531 = vrcp.pop %v527
  %v532 = vrcp.pop %v530
  %v533 = vmul.f32 %v522, %v531
  %v534 = vmul.f32 %v524, %v532
  %535 = vrot.lane.b32.xlu0 %v400, 64
  %v536 = vpop.permute.xlu0 %535
  %537 = vrot.lane.b32.xlu0 %v405, 64
  %v538 = vpop.permute.xlu0 %537
  %v541 = vsel %vm511, %v533, 0
  %v544 = vsel %vm511, %v534, 0
  %vm546 = vcmask 1040384
  %v547 = vsel %vm546, %v538, 0
  %549 = vmatprep.subr.mxu0 0.0
  %550 = vmatpush1.msra.mxu0 %v536
  %551 = vmatprep.subr.mxu0 0.0
  %552 = vmatpush1.msra.mxu0 %v547
  %553 = vmatprep.subr.mxu0 0.0
  %554 = vmatpush1.msra.mxu0 0.0
  %555 = vmatprep.subr.mxu0 0.0
  %556 = vmatpush1.msra.mxu0 0.0
  %557 = vmatprep.subr.mxu0 0.0
  %558 = vmatpush1.msra.mxu0 0.0
  %559 = vmatprep.subr.mxu0 0.0
  %560 = vmatpush1.msra.mxu0 0.0
  %561 = vmatprep.subr.mxu0 0.0
  %562 = vmatpush1.msra.mxu0 0.0
  %563 = vmatprep.subr.mxu0 0.0
  %564 = vmatpush1.msra.mxu0 0.0
  %565 = vmatprep.subr.mxu0 0.0
  %566 = vmatpush1.msra.mxu0 0.0
  %567 = vmatprep.subr.mxu0 0.0
  %568 = vmatpush1.msra.mxu0 0.0
  %569 = vmatprep.subr.mxu0 0.0
  %570 = vmatpush1.msra.mxu0 0.0
  %571 = vmatprep.subr.mxu0 0.0
  %572 = vmatpush1.msra.mxu0 0.0
  %573 = vmatprep.subr.mxu0 0.0
  %574 = vmatpush1.msra.mxu0 0.0
  %575 = vmatprep.subr.mxu0 0.0
  %576 = vmatpush1.msra.mxu0 0.0
  %577 = vmatprep.subr.mxu0 0.0
  %578 = vmatpush1.msra.mxu0 0.0
  %579 = vmatprep.subr.mxu0 0.0
  %580 = vmatpush1.msra.mxu0 0.0
  %581 = vmatprep.subr.mxu0 0.0
  %582 = vmatpush1.msra.mxu0 0.0
  %583 = vmatprep.subr.mxu0 0.0
  %584 = vmatpush1.msra.mxu0 0.0
  %585 = vmatprep.subr.mxu0 0.0
  %586 = vmatpush1.msra.mxu0 0.0
  %587 = vmatprep.subr.mxu0 0.0
  %588 = vmatpush1.msra.mxu0 0.0
  %589 = vmatprep.subr.mxu0 0.0
  %590 = vmatpush1.msra.mxu0 0.0
  %591 = vmatprep.subr.mxu0 0.0
  %592 = vmatpush1.msra.mxu0 0.0
  %593 = vmatprep.subr.mxu0 0.0
  %594 = vmatpush1.msra.mxu0 0.0
  %595 = vmatprep.subr.mxu0 0.0
  %596 = vmatpush1.msra.mxu0 0.0
  %597 = vmatprep.subr.mxu0 0.0
  %598 = vmatpush1.msra.mxu0 0.0
  %599 = vmatprep.subr.mxu0 0.0
  %600 = vmatpush1.msra.mxu0 0.0
  %601 = vmatprep.subr.mxu0 0.0
  %602 = vmatpush1.msra.mxu0 0.0
  %603 = vmatprep.subr.mxu0 0.0
  %604 = vmatpush1.msra.mxu0 0.0
  %605 = vmatprep.subr.mxu0 0.0
  %606 = vmatpush1.msra.mxu0 0.0
  %607 = vmatprep.subr.mxu0 0.0
  %608 = vmatpush1.msra.mxu0 0.0
  %609 = vmatprep.subr.mxu0 0.0
  %610 = vmatpush1.msra.mxu0 0.0
  %611 = vmatprep.subr.mxu0 0.0
  %612 = vmatpush1.msra.mxu0 0.0
  %613 = vmatprep.mubr.f32.mxu0 0.0
  %614 = vmatmul.mubr.f32.gmra.mrb[0].mxu0 %v541
  %v615 = vpop.f32.mrb[0].mxu0
  %v616 = vadd.f32 0.0, %v615
  %v617 = vpop.f32.mrb[0].mxu0
  %618 = vmatprep.mubr.f32.mxu0 0.0
  %619 = vmatmul.mubr.f32.gmra.mrb[0].mxu0 %v544
  %v620 = vpop.f32.mrb[0].mxu0
  %v621 = vadd.f32 0.0, %v620
  %v622 = vpop.f32.mrb[0].mxu0
  %623 = vdwg.mxu0
  %624 = vst.msk [vmem:[#allocation2] sm:$0xff] %vm421, %v616
  %vm625 = vcmask 122880
  %626 = vst.msk [vmem:[#allocation2 + $0x8] sm:$0x1] %vm625, %v621
  %627 = vrot.lane.b32.xlu0 %v413, 112
  %v628 = vpop.permute.xlu0 %627
  %629 = vrot.lane.b32.xlu0 %v414, 112
  %v630 = vpop.permute.xlu0 %629
  %631 = vrot.lane.b32.xlu0 %v400, 80
  %v632 = vpop.permute.xlu0 %631
  %633 = vrot.lane.b32.xlu0 %v405, 80
  %v634 = vpop.permute.xlu0 %633
  %v635 = vsel %vm421, %v628, 0
  %v637 = vsel %vm421, %v630, 0
  %v639 = vsel %vm421, %v632, 0
  %v641 = vsel %vm421, %v634, 0
  %643 = vmatprep.subr.mxu0 0.0
  %644 = vmatpush1.xpose.msra.mxu0 %v639
  %645 = vmatprep.subr.mxu0 0.0
  %646 = vmatpush1.xpose.msra.mxu0 %v641
  %647 = vmatprep.subr.mxu0 0.0
  %648 = vmatpush1.xpose.msra.mxu0 0.0
  %649 = vmatprep.subr.mxu0 0.0
  %650 = vmatpush1.xpose.msra.mxu0 0.0
  %651 = vmatprep.subr.mxu0 0.0
  %652 = vmatpush1.xpose.msra.mxu0 0.0
  %653 = vmatprep.subr.mxu0 0.0
  %654 = vmatpush1.xpose.msra.mxu0 0.0
  %655 = vmatprep.subr.mxu0 0.0
  %656 = vmatpush1.xpose.msra.mxu0 0.0
  %657 = vmatprep.subr.mxu0 0.0
  %658 = vmatpush1.xpose.msra.mxu0 0.0
  %659 = vmatprep.subr.mxu0 0.0
  %660 = vmatpush1.xpose.msra.mxu0 0.0
  %661 = vmatprep.subr.mxu0 0.0
  %662 = vmatpush1.xpose.msra.mxu0 0.0
  %663 = vmatprep.subr.mxu0 0.0
  %664 = vmatpush1.xpose.msra.mxu0 0.0
  %665 = vmatprep.subr.mxu0 0.0
  %666 = vmatpush1.xpose.msra.mxu0 0.0
  %667 = vmatprep.subr.mxu0 0.0
  %668 = vmatpush1.xpose.msra.mxu0 0.0
  %669 = vmatprep.subr.mxu0 0.0
  %670 = vmatpush1.xpose.msra.mxu0 0.0
  %671 = vmatprep.subr.mxu0 0.0
  %672 = vmatpush1.xpose.msra.mxu0 0.0
  %673 = vmatprep.subr.mxu0 0.0
  %674 = vmatpush1.xpose.msra.mxu0 0.0
  %675 = vmatprep.subr.mxu0 0.0
  %676 = vmatpush1.xpose.msra.mxu0 0.0
  %677 = vmatprep.subr.mxu0 0.0
  %678 = vmatpush1.xpose.msra.mxu0 0.0
  %679 = vmatprep.subr.mxu0 0.0
  %680 = vmatpush1.xpose.msra.mxu0 0.0
  %681 = vmatprep.subr.mxu0 0.0
  %682 = vmatpush1.xpose.msra.mxu0 0.0
  %683 = vmatprep.subr.mxu0 0.0
  %684 = vmatpush1.xpose.msra.mxu0 0.0
  %685 = vmatprep.subr.mxu0 0.0
  %686 = vmatpush1.xpose.msra.mxu0 0.0
  %687 = vmatprep.subr.mxu0 0.0
  %688 = vmatpush1.xpose.msra.mxu0 0.0
  %689 = vmatprep.subr.mxu0 0.0
  %690 = vmatpush1.xpose.msra.mxu0 0.0
  %691 = vmatprep.subr.mxu0 0.0
  %692 = vmatpush1.xpose.msra.mxu0 0.0
  %693 = vmatprep.subr.mxu0 0.0
  %694 = vmatpush1.xpose.msra.mxu0 0.0
  %695 = vmatprep.subr.mxu0 0.0
  %696 = vmatpush1.xpose.msra.mxu0 0.0
  %697 = vmatprep.subr.mxu0 0.0
  %698 = vmatpush1.xpose.msra.mxu0 0.0
  %699 = vmatprep.subr.mxu0 0.0
  %700 = vmatpush1.xpose.msra.mxu0 0.0
  %701 = vmatprep.subr.mxu0 0.0
  %702 = vmatpush1.xpose.msra.mxu0 0.0
  %703 = vmatprep.subr.mxu0 0.0
  %704 = vmatpush1.xpose.msra.mxu0 0.0
  %705 = vmatprep.subr.mxu0 0.0
  %706 = vmatpush1.xpose.msra.mxu0 0.0
  %707 = vmatprep.mubr.f32.mxu0 0.0
  %708 = vmatmul.mubr.f32.gmra.mrb[0].mxu0 %v635
  %v709 = vpop.f32.mrb[0].mxu0
  %v710 = vadd.f32 0.0, %v709
  %v711 = vpop.f32.mrb[0].mxu0
  %712 = vmatprep.mubr.f32.mxu0 0.0
  %713 = vmatmul.mubr.f32.gmra.mrb[0].mxu0 %v637
  %v714 = vpop.f32.mrb[0].mxu0
  %v715 = vadd.f32 0.0, %v714
  %v716 = vpop.f32.mrb[0].mxu0
  %717 = vdwg.mxu0
  %v718 = vsel %vm507, %v710, -1e+30
  %v719 = vsel %vm508, %v715, -1e+30
  %v720 = vsel %vm511, %v718, -inf
  %721 = vmax.xlane.f32.xlu0 %v720
  %v722 = vpop.xlane.xlu0 %721
  %v723 = vsel %vm515, %v719, -inf
  %724 = vmax.xlane.f32.xlu0 %v723
  %v725 = vpop.xlane.xlu0 %724
  %v726 = vsub.f32 %v718, %v722
  %v727 = vsub.f32 %v719, %v725
  %v728 = vmul.f32 %v726, 1.442695
  %v729 = vpow.pop %v728
  %v730 = vmul.f32 %v727, 1.442695
  %v731 = vpow.pop %v730
  %v732 = vsel %vm511, %v729, 0.0
  %733 = vadd.xlane.f32.xlu0 %v732
  %v734 = vpop.xlane.xlu0 %733
  %v735 = vsel %vm515, %v731, 0.0
  %736 = vadd.xlane.f32.xlu0 %v735
  %v737 = vpop.xlane.xlu0 %736
  %v738 = vrcp.pop %v734
  %v739 = vrcp.pop %v737
  %v740 = vmul.f32 %v729, %v738
  %v741 = vmul.f32 %v731, %v739
  %742 = vrot.lane.b32.xlu0 %v400, 48
  %v743 = vpop.permute.xlu0 %742
  %744 = vrot.lane.b32.xlu0 %v405, 48
  %v745 = vpop.permute.xlu0 %744
  %v748 = vsel %vm511, %v740, 0
  %v751 = vsel %vm511, %v741, 0
  %v753 = vsel %vm546, %v745, 0
  %755 = vmatprep.subr.mxu0 0.0
  %756 = vmatpush1.msra.mxu0 %v743
  %757 = vmatprep.subr.mxu0 0.0
  %758 = vmatpush1.msra.mxu0 %v753
  %759 = vmatprep.subr.mxu0 0.0
  %760 = vmatpush1.msra.mxu0 0.0
  %761 = vmatprep.subr.mxu0 0.0
  %762 = vmatpush1.msra.mxu0 0.0
  %763 = vmatprep.subr.mxu0 0.0
  %764 = vmatpush1.msra.mxu0 0.0
  %765 = vmatprep.subr.mxu0 0.0
  %766 = vmatpush1.msra.mxu0 0.0
  %767 = vmatprep.subr.mxu0 0.0
  %768 = vmatpush1.msra.mxu0 0.0
  %769 = vmatprep.subr.mxu0 0.0
  %770 = vmatpush1.msra.mxu0 0.0
  %771 = vmatprep.subr.mxu0 0.0
  %772 = vmatpush1.msra.mxu0 0.0
  %773 = vmatprep.subr.mxu0 0.0
  %774 = vmatpush1.msra.mxu0 0.0
  %775 = vmatprep.subr.mxu0 0.0
  %776 = vmatpush1.msra.mxu0 0.0
  %777 = vmatprep.subr.mxu0 0.0
  %778 = vmatpush1.msra.mxu0 0.0
  %779 = vmatprep.subr.mxu0 0.0
  %780 = vmatpush1.msra.mxu0 0.0
  %781 = vmatprep.subr.mxu0 0.0
  %782 = vmatpush1.msra.mxu0 0.0
  %783 = vmatprep.subr.mxu0 0.0
  %784 = vmatpush1.msra.mxu0 0.0
  %785 = vmatprep.subr.mxu0 0.0
  %786 = vmatpush1.msra.mxu0 0.0
  %787 = vmatprep.subr.mxu0 0.0
  %788 = vmatpush1.msra.mxu0 0.0
  %789 = vmatprep.subr.mxu0 0.0
  %790 = vmatpush1.msra.mxu0 0.0
  %791 = vmatprep.subr.mxu0 0.0
  %792 = vmatpush1.msra.mxu0 0.0
  %793 = vmatprep.subr.mxu0 0.0
  %794 = vmatpush1.msra.mxu0 0.0
  %795 = vmatprep.subr.mxu0 0.0
  %796 = vmatpush1.msra.mxu0 0.0
  %797 = vmatprep.subr.mxu0 0.0
  %798 = vmatpush1.msra.mxu0 0.0
  %799 = vmatprep.subr.mxu0 0.0
  %800 = vmatpush1.msra.mxu0 0.0
  %801 = vmatprep.subr.mxu0 0.0
  %802 = vmatpush1.msra.mxu0 0.0
  %803 = vmatprep.subr.mxu0 0.0
  %804 = vmatpush1.msra.mxu0 0.0
  %805 = vmatprep.subr.mxu0 0.0
  %806 = vmatpush1.msra.mxu0 0.0
  %807 = vmatprep.subr.mxu0 0.0
  %808 = vmatpush1.msra.mxu0 0.0
  %809 = vmatprep.subr.mxu0 0.0
  %810 = vmatpush1.msra.mxu0 0.0
  %811 = vmatprep.subr.mxu0 0.0
  %812 = vmatpush1.msra.mxu0 0.0
  %813 = vmatprep.subr.mxu0 0.0
  %814 = vmatpush1.msra.mxu0 0.0
  %815 = vmatprep.subr.mxu0 0.0
  %816 = vmatpush1.msra.mxu0 0.0
  %817 = vmatprep.subr.mxu0 0.0
  %818 = vmatpush1.msra.mxu0 0.0
  %819 = vmatprep.mubr.f32.mxu0 0.0
  %820 = vmatmul.mubr.f32.gmra.mrb[0].mxu0 %v748
  %v821 = vpop.f32.mrb[0].mxu0
  %v822 = vadd.f32 0.0, %v821
  %v823 = vpop.f32.mrb[0].mxu0
  %824 = vmatprep.mubr.f32.mxu0 0.0
  %825 = vmatmul.mubr.f32.gmra.mrb[0].mxu0 %v751
  %v826 = vpop.f32.mrb[0].mxu0
  %v827 = vadd.f32 0.0, %v826
  %v828 = vpop.f32.mrb[0].mxu0
  %829 = vdwg.mxu0
  %832 = vrot.lane.b32.xlu0 %v822, 16
  %v833 = vpop.permute.xlu0 %832
  %834 = vrot.lane.b32.xlu0 %v827, 16
  %v835 = vpop.permute.xlu0 %834
  %vm838 = vcmask 261248
  %839 = vst.msk [vmem:[#allocation2] sm:$0xff] %vm838, %v833
  %vm840 = vcmask 254080
  %841 = vst.msk [vmem:[#allocation2 + $0x8] sm:$0x1] %vm840, %v835
  %v842 = vmul.f32 %v410, 0.25
  %v844 = vrot.slane %v414, 1
  %v845 = vrot.slane %v842, 1
  %v846 = vsel %vm228, %v844, %v845
  %v848 = vrot.slane %v405, 1
  %v849 = vrot.slane %v410, 1
  %v850 = vsel %vm228, %v848, %v849
  %851 = vrot.lane.b32.xlu0 %v850, 96
  %v852 = vpop.permute.xlu0 %851
  %853 = vrot.lane.b32.xlu0 %v849, 96
  %v854 = vpop.permute.xlu0 %853
  %v855 = vsel %vm421, %v846, 0
  %v857 = vsel %vm421, %v845, 0
  %v859 = vsel %vm421, %v852, 0
  %v861 = vsel %vm421, %v854, 0
  %863 = vmatprep.subr.mxu0 0.0
  %864 = vmatpush1.xpose.msra.mxu0 %v859
  %865 = vmatprep.subr.mxu0 0.0
  %866 = vmatpush1.xpose.msra.mxu0 %v861
  %867 = vmatprep.subr.mxu0 0.0
  %868 = vmatpush1.xpose.msra.mxu0 0.0
  %869 = vmatprep.subr.mxu0 0.0
  %870 = vmatpush1.xpose.msra.mxu0 0.0
  %871 = vmatprep.subr.mxu0 0.0
  %872 = vmatpush1.xpose.msra.mxu0 0.0
  %873 = vmatprep.subr.mxu0 0.0
  %874 = vmatpush1.xpose.msra.mxu0 0.0
  %875 = vmatprep.subr.mxu0 0.0
  %876 = vmatpush1.xpose.msra.mxu0 0.0
  %877 = vmatprep.subr.mxu0 0.0
  %878 = vmatpush1.xpose.msra.mxu0 0.0
  %879 = vmatprep.subr.mxu0 0.0
  %880 = vmatpush1.xpose.msra.mxu0 0.0
  %881 = vmatprep.subr.mxu0 0.0
  %882 = vmatpush1.xpose.msra.mxu0 0.0
  %883 = vmatprep.subr.mxu0 0.0
  %884 = vmatpush1.xpose.msra.mxu0 0.0
  %885 = vmatprep.subr.mxu0 0.0
  %886 = vmatpush1.xpose.msra.mxu0 0.0
  %887 = vmatprep.subr.mxu0 0.0
  %888 = vmatpush1.xpose.msra.mxu0 0.0
  %889 = vmatprep.subr.mxu0 0.0
  %890 = vmatpush1.xpose.msra.mxu0 0.0
  %891 = vmatprep.subr.mxu0 0.0
  %892 = vmatpush1.xpose.msra.mxu0 0.0
  %893 = vmatprep.subr.mxu0 0.0
  %894 = vmatpush1.xpose.msra.mxu0 0.0
  %895 = vmatprep.subr.mxu0 0.0
  %896 = vmatpush1.xpose.msra.mxu0 0.0
  %897 = vmatprep.subr.mxu0 0.0
  %898 = vmatpush1.xpose.msra.mxu0 0.0
  %899 = vmatprep.subr.mxu0 0.0
  %900 = vmatpush1.xpose.msra.mxu0 0.0
  %901 = vmatprep.subr.mxu0 0.0
  %902 = vmatpush1.xpose.msra.mxu0 0.0
  %903 = vmatprep.subr.mxu0 0.0
  %904 = vmatpush1.xpose.msra.mxu0 0.0
  %905 = vmatprep.subr.mxu0 0.0
  %906 = vmatpush1.xpose.msra.mxu0 0.0
  %907 = vmatprep.subr.mxu0 0.0
  %908 = vmatpush1.xpose.msra.mxu0 0.0
  %909 = vmatprep.subr.mxu0 0.0
  %910 = vmatpush1.xpose.msra.mxu0 0.0
  %911 = vmatprep.subr.mxu0 0.0
  %912 = vmatpush1.xpose.msra.mxu0 0.0
  %913 = vmatprep.subr.mxu0 0.0
  %914 = vmatpush1.xpose.msra.mxu0 0.0
  %915 = vmatprep.subr.mxu0 0.0
  %916 = vmatpush1.xpose.msra.mxu0 0.0
  %917 = vmatprep.subr.mxu0 0.0
  %918 = vmatpush1.xpose.msra.mxu0 0.0
  %919 = vmatprep.subr.mxu0 0.0
  %920 = vmatpush1.xpose.msra.mxu0 0.0
  %921 = vmatprep.subr.mxu0 0.0
  %922 = vmatpush1.xpose.msra.mxu0 0.0
  %923 = vmatprep.subr.mxu0 0.0
  %924 = vmatpush1.xpose.msra.mxu0 0.0
  %925 = vmatprep.subr.mxu0 0.0
  %926 = vmatpush1.xpose.msra.mxu0 0.0
  %927 = vmatprep.mubr.f32.mxu0 0.0
  %928 = vmatmul.mubr.f32.gmra.mrb[0].mxu0 %v855
  %v929 = vpop.f32.mrb[0].mxu0
  %v930 = vadd.f32 0.0, %v929
  %v931 = vpop.f32.mrb[0].mxu0
  %932 = vmatprep.mubr.f32.mxu0 0.0
  %933 = vmatmul.mubr.f32.gmra.mrb[0].mxu0 %v857
  %v934 = vpop.f32.mrb[0].mxu0
  %v935 = vadd.f32 0.0, %v934
  %v936 = vpop.f32.mrb[0].mxu0
  %937 = vdwg.mxu0
  %v938 = vsel %vm507, %v930, -1e+30
  %v939 = vsel %vm508, %v935, -1e+30
  %v940 = vsel %vm511, %v938, -inf
  %941 = vmax.xlane.f32.xlu0 %v940
  %v942 = vpop.xlane.xlu0 %941
  %v943 = vsel %vm515, %v939, -inf
  %944 = vmax.xlane.f32.xlu0 %v943
  %v945 = vpop.xlane.xlu0 %944
  %v946 = vsub.f32 %v938, %v942
  %v947 = vsub.f32 %v939, %v945
  %v948 = vmul.f32 %v946, 1.442695
  %v949 = vpow.pop %v948
  %v950 = vmul.f32 %v947, 1.442695
  %v951 = vpow.pop %v950
  %v952 = vsel %vm511, %v949, 0.0
  %953 = vadd.xlane.f32.xlu0 %v952
  %v954 = vpop.xlane.xlu0 %953
  %v955 = vsel %vm515, %v951, 0.0
  %956 = vadd.xlane.f32.xlu0 %v955
  %v957 = vpop.xlane.xlu0 %956
  %v958 = vrcp.pop %v954
  %v959 = vrcp.pop %v957
  %v960 = vmul.f32 %v949, %v958
  %v961 = vmul.f32 %v951, %v959
  %962 = vrot.lane.b32.xlu0 %v850, 64
  %v963 = vpop.permute.xlu0 %962
  %964 = vrot.lane.b32.xlu0 %v849, 64
  %v965 = vpop.permute.xlu0 %964
  %v968 = vsel %vm511, %v960, 0
  %v971 = vsel %vm511, %v961, 0
  %v973 = vsel %vm546, %v965, 0
  %975 = vmatprep.subr.mxu0 0.0
  %976 = vmatpush1.msra.mxu0 %v963
  %977 = vmatprep.subr.mxu0 0.0
  %978 = vmatpush1.msra.mxu0 %v973
  %979 = vmatprep.subr.mxu0 0.0
  %980 = vmatpush1.msra.mxu0 0.0
  %981 = vmatprep.subr.mxu0 0.0
  %982 = vmatpush1.msra.mxu0 0.0
  %983 = vmatprep.subr.mxu0 0.0
  %984 = vmatpush1.msra.mxu0 0.0
  %985 = vmatprep.subr.mxu0 0.0
  %986 = vmatpush1.msra.mxu0 0.0
  %987 = vmatprep.subr.mxu0 0.0
  %988 = vmatpush1.msra.mxu0 0.0
  %989 = vmatprep.subr.mxu0 0.0
  %990 = vmatpush1.msra.mxu0 0.0
  %991 = vmatprep.subr.mxu0 0.0
  %992 = vmatpush1.msra.mxu0 0.0
  %993 = vmatprep.subr.mxu0 0.0
  %994 = vmatpush1.msra.mxu0 0.0
  %995 = vmatprep.subr.mxu0 0.0
  %996 = vmatpush1.msra.mxu0 0.0
  %997 = vmatprep.subr.mxu0 0.0
  %998 = vmatpush1.msra.mxu0 0.0
  %999 = vmatprep.subr.mxu0 0.0
  %1000 = vmatpush1.msra.mxu0 0.0
  %1001 = vmatprep.subr.mxu0 0.0
  %1002 = vmatpush1.msra.mxu0 0.0
  %1003 = vmatprep.subr.mxu0 0.0
  %1004 = vmatpush1.msra.mxu0 0.0
  %1005 = vmatprep.subr.mxu0 0.0
  %1006 = vmatpush1.msra.mxu0 0.0
  %1007 = vmatprep.subr.mxu0 0.0
  %1008 = vmatpush1.msra.mxu0 0.0
  %1009 = vmatprep.subr.mxu0 0.0
  %1010 = vmatpush1.msra.mxu0 0.0
  %1011 = vmatprep.subr.mxu0 0.0
  %1012 = vmatpush1.msra.mxu0 0.0
  %1013 = vmatprep.subr.mxu0 0.0
  %1014 = vmatpush1.msra.mxu0 0.0
  %1015 = vmatprep.subr.mxu0 0.0
  %1016 = vmatpush1.msra.mxu0 0.0
  %1017 = vmatprep.subr.mxu0 0.0
  %1018 = vmatpush1.msra.mxu0 0.0
  %1019 = vmatprep.subr.mxu0 0.0
  %1020 = vmatpush1.msra.mxu0 0.0
  %1021 = vmatprep.subr.mxu0 0.0
  %1022 = vmatpush1.msra.mxu0 0.0
  %1023 = vmatprep.subr.mxu0 0.0
  %1024 = vmatpush1.msra.mxu0 0.0
  %1025 = vmatprep.subr.mxu0 0.0
  %1026 = vmatpush1.msra.mxu0 0.0
  %1027 = vmatprep.subr.mxu0 0.0
  %1028 = vmatpush1.msra.mxu0 0.0
  %1029 = vmatprep.subr.mxu0 0.0
  %1030 = vmatpush1.msra.mxu0 0.0
  %1031 = vmatprep.subr.mxu0 0.0
  %1032 = vmatpush1.msra.mxu0 0.0
  %1033 = vmatprep.subr.mxu0 0.0
  %1034 = vmatpush1.msra.mxu0 0.0
  %1035 = vmatprep.subr.mxu0 0.0
  %1036 = vmatpush1.msra.mxu0 0.0
  %1037 = vmatprep.subr.mxu0 0.0
  %1038 = vmatpush1.msra.mxu0 0.0
  %1039 = vmatprep.mubr.f32.mxu0 0.0
  %1040 = vmatmul.mubr.f32.gmra.mrb[0].mxu0 %v968
  %v1041 = vpop.f32.mrb[0].mxu0
  %v1042 = vadd.f32 0.0, %v1041
  %v1043 = vpop.f32.mrb[0].mxu0
  %1044 = vmatprep.mubr.f32.mxu0 0.0
  %1045 = vmatmul.mubr.f32.gmra.mrb[0].mxu0 %v971
  %v1046 = vpop.f32.mrb[0].mxu0
  %v1047 = vadd.f32 0.0, %v1046
  %v1048 = vpop.f32.mrb[0].mxu0
  %1049 = vdwg.mxu0
  %1050 = vst.msk [vmem:[#allocation2 + $0x9] sm:$0xff] %vm421, %v1042
  %1051 = vst.msk [vmem:[#allocation2 + $0x11] sm:$0x1] %vm625, %v1047
  %1052 = vrot.lane.b32.xlu0 %v846, 112
  %v1053 = vpop.permute.xlu0 %1052
  %1054 = vrot.lane.b32.xlu0 %v845, 112
  %v1055 = vpop.permute.xlu0 %1054
  %1056 = vrot.lane.b32.xlu0 %v850, 80
  %v1057 = vpop.permute.xlu0 %1056
  %1058 = vrot.lane.b32.xlu0 %v849, 80
  %v1059 = vpop.permute.xlu0 %1058
  %v1060 = vsel %vm421, %v1053, 0
  %v1062 = vsel %vm421, %v1055, 0
  %v1064 = vsel %vm421, %v1057, 0
  %v1066 = vsel %vm421, %v1059, 0
  %1068 = vmatprep.subr.mxu0 0.0
  %1069 = vmatpush1.xpose.msra.mxu0 %v1064
  %1070 = vmatprep.subr.mxu0 0.0
  %1071 = vmatpush1.xpose.msra.mxu0 %v1066
  %1072 = vmatprep.subr.mxu0 0.0
  %1073 = vmatpush1.xpose.msra.mxu0 0.0
  %1074 = vmatprep.subr.mxu0 0.0
  %1075 = vmatpush1.xpose.msra.mxu0 0.0
  %1076 = vmatprep.subr.mxu0 0.0
  %1077 = vmatpush1.xpose.msra.mxu0 0.0
  %1078 = vmatprep.subr.mxu0 0.0
  %1079 = vmatpush1.xpose.msra.mxu0 0.0
  %1080 = vmatprep.subr.mxu0 0.0
  %1081 = vmatpush1.xpose.msra.mxu0 0.0
  %1082 = vmatprep.subr.mxu0 0.0
  %1083 = vmatpush1.xpose.msra.mxu0 0.0
  %1084 = vmatprep.subr.mxu0 0.0
  %1085 = vmatpush1.xpose.msra.mxu0 0.0
  %1086 = vmatprep.subr.mxu0 0.0
  %1087 = vmatpush1.xpose.msra.mxu0 0.0
  %1088 = vmatprep.subr.mxu0 0.0
  %1089 = vmatpush1.xpose.msra.mxu0 0.0
  %1090 = vmatprep.subr.mxu0 0.0
  %1091 = vmatpush1.xpose.msra.mxu0 0.0
  %1092 = vmatprep.subr.mxu0 0.0
  %1093 = vmatpush1.xpose.msra.mxu0 0.0
  %1094 = vmatprep.subr.mxu0 0.0
  %1095 = vmatpush1.xpose.msra.mxu0 0.0
  %1096 = vmatprep.subr.mxu0 0.0
  %1097 = vmatpush1.xpose.msra.mxu0 0.0
  %1098 = vmatprep.subr.mxu0 0.0
  %1099 = vmatpush1.xpose.msra.mxu0 0.0
  %1100 = vmatprep.subr.mxu0 0.0
  %1101 = vmatpush1.xpose.msra.mxu0 0.0
  %1102 = vmatprep.subr.mxu0 0.0
  %1103 = vmatpush1.xpose.msra.mxu0 0.0
  %1104 = vmatprep.subr.mxu0 0.0
  %1105 = vmatpush1.xpose.msra.mxu0 0.0
  %1106 = vmatprep.subr.mxu0 0.0
  %1107 = vmatpush1.xpose.msra.mxu0 0.0
  %1108 = vmatprep.subr.mxu0 0.0
  %1109 = vmatpush1.xpose.msra.mxu0 0.0
  %1110 = vmatprep.subr.mxu0 0.0
  %1111 = vmatpush1.xpose.msra.mxu0 0.0
  %1112 = vmatprep.subr.mxu0 0.0
  %1113 = vmatpush1.xpose.msra.mxu0 0.0
  %1114 = vmatprep.subr.mxu0 0.0
  %1115 = vmatpush1.xpose.msra.mxu0 0.0
  %1116 = vmatprep.subr.mxu0 0.0
  %1117 = vmatpush1.xpose.msra.mxu0 0.0
  %1118 = vmatprep.subr.mxu0 0.0
  %1119 = vmatpush1.xpose.msra.mxu0 0.0
  %1120 = vmatprep.subr.mxu0 0.0
  %1121 = vmatpush1.xpose.msra.mxu0 0.0
  %1122 = vmatprep.subr.mxu0 0.0
  %1123 = vmatpush1.xpose.msra.mxu0 0.0
  %1124 = vmatprep.subr.mxu0 0.0
  %1125 = vmatpush1.xpose.msra.mxu0 0.0
  %1126 = vmatprep.subr.mxu0 0.0
  %1127 = vmatpush1.xpose.msra.mxu0 0.0
  %1128 = vmatprep.subr.mxu0 0.0
  %1129 = vmatpush1.xpose.msra.mxu0 0.0
  %1130 = vmatprep.subr.mxu0 0.0
  %1131 = vmatpush1.xpose.msra.mxu0 0.0
  %1132 = vmatprep.mubr.f32.mxu0 0.0
  %1133 = vmatmul.mubr.f32.gmra.mrb[0].mxu0 %v1060
  %v1134 = vpop.f32.mrb[0].mxu0
  %v1135 = vadd.f32 0.0, %v1134
  %v1136 = vpop.f32.mrb[0].mxu0
  %1137 = vmatprep.mubr.f32.mxu0 0.0
  %1138 = vmatmul.mubr.f32.gmra.mrb[0].mxu0 %v1062
  %v1139 = vpop.f32.mrb[0].mxu0
  %v1140 = vadd.f32 0.0, %v1139
  %v1141 = vpop.f32.mrb[0].mxu0
  %1142 = vdwg.mxu0
  %v1143 = vsel %vm507, %v1135, -1e+30
  %v1144 = vsel %vm508, %v1140, -1e+30
  %v1145 = vsel %vm511, %v1143, -inf
  %1146 = vmax.xlane.f32.xlu0 %v1145
  %v1147 = vpop.xlane.xlu0 %1146
  %v1148 = vsel %vm515, %v1144, -inf
  %1149 = vmax.xlane.f32.xlu0 %v1148
  %v1150 = vpop.xlane.xlu0 %1149
  %v1151 = vsub.f32 %v1143, %v1147
  %v1152 = vsub.f32 %v1144, %v1150
  %v1153 = vmul.f32 %v1151, 1.442695
  %v1154 = vpow.pop %v1153
  %v1155 = vmul.f32 %v1152, 1.442695
  %v1156 = vpow.pop %v1155
  %v1157 = vsel %vm511, %v1154, 0.0
  %1158 = vadd.xlane.f32.xlu0 %v1157
  %v1159 = vpop.xlane.xlu0 %1158
  %v1160 = vsel %vm515, %v1156, 0.0
  %1161 = vadd.xlane.f32.xlu0 %v1160
  %v1162 = vpop.xlane.xlu0 %1161
  %v1163 = vrcp.pop %v1159
  %v1164 = vrcp.pop %v1162
  %v1165 = vmul.f32 %v1154, %v1163
  %v1166 = vmul.f32 %v1156, %v1164
  %1167 = vrot.lane.b32.xlu0 %v850, 48
  %v1168 = vpop.permute.xlu0 %1167
  %1169 = vrot.lane.b32.xlu0 %v849, 48
  %v1170 = vpop.permute.xlu0 %1169
  %v1173 = vsel %vm511, %v1165, 0
  %v1176 = vsel %vm511, %v1166, 0
  %v1178 = vsel %vm546, %v1170, 0
  %1180 = vmatprep.subr.mxu0 0.0
  %1181 = vmatpush1.msra.mxu0 %v1168
  %1182 = vmatprep.subr.mxu0 0.0
  %1183 = vmatpush1.msra.mxu0 %v1178
  %1184 = vmatprep.subr.mxu0 0.0
  %1185 = vmatpush1.msra.mxu0 0.0
  %1186 = vmatprep.subr.mxu0 0.0
  %1187 = vmatpush1.msra.mxu0 0.0
  %1188 = vmatprep.subr.mxu0 0.0
  %1189 = vmatpush1.msra.mxu0 0.0
  %1190 = vmatprep.subr.mxu0 0.0
  %1191 = vmatpush1.msra.mxu0 0.0
  %1192 = vmatprep.subr.mxu0 0.0
  %1193 = vmatpush1.msra.mxu0 0.0
  %1194 = vmatprep.subr.mxu0 0.0
  %1195 = vmatpush1.msra.mxu0 0.0
  %1196 = vmatprep.subr.mxu0 0.0
  %1197 = vmatpush1.msra.mxu0 0.0
  %1198 = vmatprep.subr.mxu0 0.0
  %1199 = vmatpush1.msra.mxu0 0.0
  %1200 = vmatprep.subr.mxu0 0.0
  %1201 = vmatpush1.msra.mxu0 0.0
  %1202 = vmatprep.subr.mxu0 0.0
  %1203 = vmatpush1.msra.mxu0 0.0
  %1204 = vmatprep.subr.mxu0 0.0
  %1205 = vmatpush1.msra.mxu0 0.0
  %1206 = vmatprep.subr.mxu0 0.0
  %1207 = vmatpush1.msra.mxu0 0.0
  %1208 = vmatprep.subr.mxu0 0.0
  %1209 = vmatpush1.msra.mxu0 0.0
  %1210 = vmatprep.subr.mxu0 0.0
  %1211 = vmatpush1.msra.mxu0 0.0
  %1212 = vmatprep.subr.mxu0 0.0
  %1213 = vmatpush1.msra.mxu0 0.0
  %1214 = vmatprep.subr.mxu0 0.0
  %1215 = vmatpush1.msra.mxu0 0.0
  %1216 = vmatprep.subr.mxu0 0.0
  %1217 = vmatpush1.msra.mxu0 0.0
  %1218 = vmatprep.subr.mxu0 0.0
  %1219 = vmatpush1.msra.mxu0 0.0
  %1220 = vmatprep.subr.mxu0 0.0
  %1221 = vmatpush1.msra.mxu0 0.0
  %1222 = vmatprep.subr.mxu0 0.0
  %1223 = vmatpush1.msra.mxu0 0.0
  %1224 = vmatprep.subr.mxu0 0.0
  %1225 = vmatpush1.msra.mxu0 0.0
  %1226 = vmatprep.subr.mxu0 0.0
  %1227 = vmatpush1.msra.mxu0 0.0
  %1228 = vmatprep.subr.mxu0 0.0
  %1229 = vmatpush1.msra.mxu0 0.0
  %1230 = vmatprep.subr.mxu0 0.0
  %1231 = vmatpush1.msra.mxu0 0.0
  %1232 = vmatprep.subr.mxu0 0.0
  %1233 = vmatpush1.msra.mxu0 0.0
  %1234 = vmatprep.subr.mxu0 0.0
  %1235 = vmatpush1.msra.mxu0 0.0
  %1236 = vmatprep.subr.mxu0 0.0
  %1237 = vmatpush1.msra.mxu0 0.0
  %1238 = vmatprep.subr.mxu0 0.0
  %1239 = vmatpush1.msra.mxu0 0.0
  %1240 = vmatprep.subr.mxu0 0.0
  %1241 = vmatpush1.msra.mxu0 0.0
  %1242 = vmatprep.subr.mxu0 0.0
  %1243 = vmatpush1.msra.mxu0 0.0
  %1244 = vmatprep.mubr.f32.mxu0 0.0
  %1245 = vmatmul.mubr.f32.gmra.mrb[0].mxu0 %v1173
  %v1246 = vpop.f32.mrb[0].mxu0
  %v1247 = vadd.f32 0.0, %v1246
  %v1248 = vpop.f32.mrb[0].mxu0
  %1249 = vmatprep.mubr.f32.mxu0 0.0
  %1250 = vmatmul.mubr.f32.gmra.mrb[0].mxu0 %v1176
  %v1251 = vpop.f32.mrb[0].mxu0
  %v1252 = vadd.f32 0.0, %v1251
  %v1253 = vpop.f32.mrb[0].mxu0
  %1254 = vdwg.mxu0
  %1257 = vrot.lane.b32.xlu0 %v1247, 16
  %v1258 = vpop.permute.xlu0 %1257
  %1259 = vrot.lane.b32.xlu0 %v1252, 16
  %v1260 = vpop.permute.xlu0 %1259
  %1263 = vst.msk [vmem:[#allocation2 + $0x9] sm:$0xff] %vm838, %v1258
  %1264 = vst.msk [vmem:[#allocation2 + $0x11] sm:$0x1] %vm840, %v1260
  %v1265 = vld [vmem:[#allocation2] sm:$0xff]
  %v1266 = vld [vmem:[#allocation2 + $0x8] sm:$0xff]
  %v1267 = vld [vmem:[#allocation2 + $0x10] sm:$0x3]
  %v1268 = vld [vmem:[%s19] sm:$0xff]
  %v1269 = vld [vmem:[%s19 + $0x8] sm:$0xff]
  %v1270 = vld [vmem:[%s19 + $0x10] sm:$0xff]
  %v1271 = vld [vmem:[%s19 + $0x18] sm:$0xff]
  %v1272 = vld [vmem:[%s21] sm:$0x1]
  %v1274 = vlaneseq
  %v1275 = vshrl.u32 %v1274, 7
  %v1276 = vsub.s32 0, %v1275
  %v1277 = vrot.slane %v1272, %v1276
  %v1280 = vsel %vm148, %v1265, 0
  %v1283 = vsel %vm148, %v1266, 0
  %v1286 = vsel %vm148, %v1267, 0
  %1288 = vmatprep.subr.mxu0 0.0
  %1289 = vmatpush1.msra.mxu0 %v1268
  %1290 = vmatprep.subr.mxu0 0.0
  %1291 = vmatpush1.msra.mxu0 %v1269
  %1292 = vmatprep.subr.mxu0 0.0
  %1293 = vmatpush1.msra.mxu0 %v1270
  %1294 = vmatprep.subr.mxu0 0.0
  %1295 = vmatpush1.msra.mxu0 %v1271
  %1296 = vmatprep.subr.mxu0 0.0
  %1297 = vmatpush1.msra.mxu0 0.0
  %1298 = vmatprep.subr.mxu0 0.0
  %1299 = vmatpush1.msra.mxu0 0.0
  %1300 = vmatprep.subr.mxu0 0.0
  %1301 = vmatpush1.msra.mxu0 0.0
  %1302 = vmatprep.subr.mxu0 0.0
  %1303 = vmatpush1.msra.mxu0 0.0
  %1304 = vmatprep.subr.mxu0 0.0
  %1305 = vmatpush1.msra.mxu0 0.0
  %1306 = vmatprep.subr.mxu0 0.0
  %1307 = vmatpush1.msra.mxu0 0.0
  %1308 = vmatprep.subr.mxu0 0.0
  %1309 = vmatpush1.msra.mxu0 0.0
  %1310 = vmatprep.subr.mxu0 0.0
  %1311 = vmatpush1.msra.mxu0 0.0
  %1312 = vmatprep.subr.mxu0 0.0
  %1313 = vmatpush1.msra.mxu0 0.0
  %1314 = vmatprep.subr.mxu0 0.0
  %1315 = vmatpush1.msra.mxu0 0.0
  %1316 = vmatprep.subr.mxu0 0.0
  %1317 = vmatpush1.msra.mxu0 0.0
  %1318 = vmatprep.subr.mxu0 0.0
  %1319 = vmatpush1.msra.mxu0 0.0
  %1320 = vmatprep.subr.mxu0 0.0
  %1321 = vmatpush1.msra.mxu0 0.0
  %1322 = vmatprep.subr.mxu0 0.0
  %1323 = vmatpush1.msra.mxu0 0.0
  %1324 = vmatprep.subr.mxu0 0.0
  %1325 = vmatpush1.msra.mxu0 0.0
  %1326 = vmatprep.subr.mxu0 0.0
  %1327 = vmatpush1.msra.mxu0 0.0
  %1328 = vmatprep.subr.mxu0 0.0
  %1329 = vmatpush1.msra.mxu0 0.0
  %1330 = vmatprep.subr.mxu0 0.0
  %1331 = vmatpush1.msra.mxu0 0.0
  %1332 = vmatprep.subr.mxu0 0.0
  %1333 = vmatpush1.msra.mxu0 0.0
  %1334 = vmatprep.subr.mxu0 0.0
  %1335 = vmatpush1.msra.mxu0 0.0
  %1336 = vmatprep.subr.mxu0 0.0
  %1337 = vmatpush1.msra.mxu0 0.0
  %1338 = vmatprep.subr.mxu0 0.0
  %1339 = vmatpush1.msra.mxu0 0.0
  %1340 = vmatprep.subr.mxu0 0.0
  %1341 = vmatpush1.msra.mxu0 0.0
  %1342 = vmatprep.subr.mxu0 0.0
  %1343 = vmatpush1.msra.mxu0 0.0
  %1344 = vmatprep.subr.mxu0 0.0
  %1345 = vmatpush1.msra.mxu0 0.0
  %1346 = vmatprep.subr.mxu0 0.0
  %1347 = vmatpush1.msra.mxu0 0.0
  %1348 = vmatprep.subr.mxu0 0.0
  %1349 = vmatpush1.msra.mxu0 0.0
  %1350 = vmatprep.subr.mxu0 0.0
  %1351 = vmatpush1.msra.mxu0 0.0
  %1352 = vmatprep.mubr.f32.mxu0 0.0
  %1353 = vmatmul.mubr.f32.gmra.mrb[0].mxu0 %v1280
  %v1354 = vpop.f32.mrb[0].mxu0
  %v1355 = vadd.f32 %v1277, %v1354
  %v1356 = vpop.f32.mrb[0].mxu0
  %1357 = vmatprep.mubr.f32.mxu0 0.0
  %1358 = vmatmul.mubr.f32.gmra.mrb[0].mxu0 %v1283
  %v1359 = vpop.f32.mrb[0].mxu0
  %v1360 = vadd.f32 %v1277, %v1359
  %v1361 = vpop.f32.mrb[0].mxu0
  %1362 = vmatprep.mubr.f32.mxu0 0.0
  %1363 = vmatmul.mubr.f32.gmra.mrb[0].mxu0 %v1286
  %v1364 = vpop.f32.mrb[0].mxu0
  %v1365 = vadd.f32 %v1277, %v1364
  %v1366 = vpop.f32.mrb[0].mxu0
  %1367 = vdwg.mxu0
  %v1368 = vadd.f32 %v244, %v1355
  %v1369 = vadd.f32 %v245, %v1360
  %v1370 = vadd.f32 %v246, %v1365
  %v1371 = vld [vmem:[%s23] sm:$0x1]
  %v1372 = vld [vmem:[%s25] sm:$0x1]
  %v1373 = vsel %vm148, %v1368, 0.0
  %1374 = vadd.xlane.f32.xlu0 %v1373
  %v1375 = vpop.xlane.xlu0 %1374
  %v1376 = vsel %vm148, %v1369, 0.0
  %1377 = vadd.xlane.f32.xlu0 %v1376
  %v1378 = vpop.xlane.xlu0 %1377
  %v1379 = vsel %vm260, %v1370, 0.0
  %1380 = vadd.xlane.f32.xlu0 %v1379
  %v1381 = vpop.xlane.xlu0 %1380
  %v1382 = vmul.f32 %v1375, %v264
  %v1383 = vmul.f32 %v1378, %v264
  %v1384 = vmul.f32 %v1381, %v264
  %v1385 = vsub.f32 %v1368, %v1382
  %v1386 = vsub.f32 %v1369, %v1383
  %v1387 = vsub.f32 %v1370, %v1384
  %v1388 = vmul.f32 %v1385, %v1385
  %v1389 = vmul.f32 %v1386, %v1386
  %v1390 = vmul.f32 %v1387, %v1387
  %v1391 = vsel %vm148, %v1388, 0.0
  %1392 = vadd.xlane.f32.xlu0 %v1391
  %v1393 = vpop.xlane.xlu0 %1392
  %v1394 = vsel %vm148, %v1389, 0.0
  %1395 = vadd.xlane.f32.xlu0 %v1394
  %v1396 = vpop.xlane.xlu0 %1395
  %v1397 = vsel %vm260, %v1390, 0.0
  %1398 = vadd.xlane.f32.xlu0 %v1397
  %v1399 = vpop.xlane.xlu0 %1398
  %v1400 = vmul.f32 %v1393, %v264
  %v1401 = vmul.f32 %v1396, %v264
  %v1402 = vmul.f32 %v1399, %v264
  %v1403 = vadd.f32 %v1400, 1e-05
  %v1404 = vadd.f32 %v1401, 1e-05
  %v1405 = vadd.f32 %v1402, 1e-05
  %v1406 = vrsqrt.pop %v1403
  %v1407 = vrsqrt.pop %v1404
  %v1408 = vrsqrt.pop %v1405
  %v1409 = vmul.f32 %v1385, %v1406
  %v1410 = vmul.f32 %v1386, %v1407
  %v1411 = vmul.f32 %v1387, %v1408
  %v1413 = vlaneseq
  %v1414 = vshrl.u32 %v1413, 7
  %v1415 = vsub.s32 0, %v1414
  %v1416 = vrot.slane %v1371, %v1415
  %v1418 = vmul.f32 %v1409, %v1416
  %v1419 = vmul.f32 %v1410, %v1416
  %v1420 = vmul.f32 %v1411, %v1416
  %v1422 = vlaneseq
  %v1423 = vshrl.u32 %v1422, 7
  %v1424 = vsub.s32 0, %v1423
  %v1425 = vrot.slane %v1372, %v1424
  %v1427 = vadd.f32 %v1418, %v1425
  %v1428 = vadd.f32 %v1419, %v1425
  %v1429 = vadd.f32 %v1420, %v1425
  %v1430 = vld [vmem:[%s27] sm:$0xff]
  %v1431 = vld [vmem:[%s27 + $0x8] sm:$0xff]
  %v1432 = vld [vmem:[%s27 + $0x10] sm:$0xff]
  %v1433 = vld [vmem:[%s27 + $0x18] sm:$0xff]
  %v1434 = vld [vmem:[%s29] sm:$0x1]
  %v1436 = vlaneseq
  %v1437 = vshrl.u32 %v1436, 7
  %v1438 = vsub.s32 0, %v1437
  %v1439 = vrot.slane %v1434, %v1438
  %v1442 = vsel %vm148, %v1427, 0
  %v1445 = vsel %vm148, %v1428, 0
  %v1448 = vsel %vm148, %v1429, 0
  %1450 = vmatprep.subr.mxu0 0.0
  %1451 = vmatpush1.msra.mxu0 %v1430
  %1452 = vmatprep.subr.mxu0 0.0
  %1453 = vmatpush1.msra.mxu0 %v1431
  %1454 = vmatprep.subr.mxu0 0.0
  %1455 = vmatpush1.msra.mxu0 %v1432
  %1456 = vmatprep.subr.mxu0 0.0
  %1457 = vmatpush1.msra.mxu0 %v1433
  %1458 = vmatprep.subr.mxu0 0.0
  %1459 = vmatpush1.msra.mxu0 0.0
  %1460 = vmatprep.subr.mxu0 0.0
  %1461 = vmatpush1.msra.mxu0 0.0
  %1462 = vmatprep.subr.mxu0 0.0
  %1463 = vmatpush1.msra.mxu0 0.0
  %1464 = vmatprep.subr.mxu0 0.0
  %1465 = vmatpush1.msra.mxu0 0.0
  %1466 = vmatprep.subr.mxu0 0.0
  %1467 = vmatpush1.msra.mxu0 0.0
  %1468 = vmatprep.subr.mxu0 0.0
  %1469 = vmatpush1.msra.mxu0 0.0
  %1470 = vmatprep.subr.mxu0 0.0
  %1471 = vmatpush1.msra.mxu0 0.0
  %1472 = vmatprep.subr.mxu0 0.0
  %1473 = vmatpush1.msra.mxu0 0.0
  %1474 = vmatprep.subr.mxu0 0.0
  %1475 = vmatpush1.msra.mxu0 0.0
  %1476 = vmatprep.subr.mxu0 0.0
  %1477 = vmatpush1.msra.mxu0 0.0
  %1478 = vmatprep.subr.mxu0 0.0
  %1479 = vmatpush1.msra.mxu0 0.0
  %1480 = vmatprep.subr.mxu0 0.0
  %1481 = vmatpush1.msra.mxu0 0.0
  %1482 = vmatprep.subr.mxu0 0.0
  %1483 = vmatpush1.msra.mxu0 0.0
  %1484 = vmatprep.subr.mxu0 0.0
  %1485 = vmatpush1.msra.mxu0 0.0
  %1486 = vmatprep.subr.mxu0 0.0
  %1487 = vmatpush1.msra.mxu0 0.0
  %1488 = vmatprep.subr.mxu0 0.0
  %1489 = vmatpush1.msra.mxu0 0.0
  %1490 = vmatprep.subr.mxu0 0.0
  %1491 = vmatpush1.msra.mxu0 0.0
  %1492 = vmatprep.subr.mxu0 0.0
  %1493 = vmatpush1.msra.mxu0 0.0
  %1494 = vmatprep.subr.mxu0 0.0
  %1495 = vmatpush1.msra.mxu0 0.0
  %1496 = vmatprep.subr.mxu0 0.0
  %1497 = vmatpush1.msra.mxu0 0.0
  %1498 = vmatprep.subr.mxu0 0.0
  %1499 = vmatpush1.msra.mxu0 0.0
  %1500 = vmatprep.subr.mxu0 0.0
  %1501 = vmatpush1.msra.mxu0 0.0
  %1502 = vmatprep.subr.mxu0 0.0
  %1503 = vmatpush1.msra.mxu0 0.0
  %1504 = vmatprep.subr.mxu0 0.0
  %1505 = vmatpush1.msra.mxu0 0.0
  %1506 = vmatprep.subr.mxu0 0.0
  %1507 = vmatpush1.msra.mxu0 0.0
  %1508 = vmatprep.subr.mxu0 0.0
  %1509 = vmatpush1.msra.mxu0 0.0
  %1510 = vmatprep.subr.mxu0 0.0
  %1511 = vmatpush1.msra.mxu0 0.0
  %1512 = vmatprep.subr.mxu0 0.0
  %1513 = vmatpush1.msra.mxu0 0.0
  %1514 = vmatprep.mubr.f32.mxu0 0.0
  %1515 = vmatmul.mubr.f32.gmra.mrb[0].mxu0 %v1442
  %v1516 = vpop.f32.mrb[0].mxu0
  %v1517 = vadd.f32 %v1439, %v1516
  %v1518 = vpop.f32.mrb[0].mxu0
  %1519 = vmatprep.mubr.f32.mxu0 0.0
  %1520 = vmatmul.mubr.f32.gmra.mrb[0].mxu0 %v1445
  %v1521 = vpop.f32.mrb[0].mxu0
  %v1522 = vadd.f32 %v1439, %v1521
  %v1523 = vpop.f32.mrb[0].mxu0
  %1524 = vmatprep.mubr.f32.mxu0 0.0
  %1525 = vmatmul.mubr.f32.gmra.mrb[0].mxu0 %v1448
  %v1526 = vpop.f32.mrb[0].mxu0
  %v1527 = vadd.f32 %v1439, %v1526
  %v1528 = vpop.f32.mrb[0].mxu0
  %1529 = vdwg.mxu0
  %v1530 = vmul.f32 %v1517, 0.5
  %v1531 = vmul.f32 %v1522, 0.5
  %v1532 = vmul.f32 %v1527, 0.5
  %v1533 = vmul.f32 %v1517, 0.044715
  %v1534 = vmul.f32 %v1522, 0.044715
  %v1535 = vmul.f32 %v1527, 0.044715
  %v1536 = vmul.f32 %v1533, %v1517
  %v1537 = vmul.f32 %v1534, %v1522
  %v1538 = vmul.f32 %v1535, %v1527
  %v1539 = vmul.f32 %v1536, %v1517
  %v1540 = vmul.f32 %v1537, %v1522
  %v1541 = vmul.f32 %v1538, %v1527
  %v1542 = vadd.f32 %v1517, %v1539
  %v1543 = vadd.f32 %v1522, %v1540
  %v1544 = vadd.f32 %v1527, %v1541
  %v1545 = vmul.f32 %v1542, 0.7978846
  %v1546 = vmul.f32 %v1543, 0.7978846
  %v1547 = vmul.f32 %v1544, 0.7978846
  %v1548 = vtanh.pop %v1545
  %v1549 = vtanh.pop %v1546
  %v1550 = vtanh.pop %v1547
  %v1551 = vadd.f32 %v1548, 1.0
  %v1552 = vadd.f32 %v1549, 1.0
  %v1553 = vadd.f32 %v1550, 1.0
  %v1554 = vmul.f32 %v1530, %v1551
  %v1555 = vmul.f32 %v1531, %v1552
  %v1556 = vmul.f32 %v1532, %v1553
  %v1557 = vld [vmem:[%s31] sm:$0xff]
  %v1558 = vld [vmem:[%s31 + $0x8] sm:$0xff]
  %v1559 = vld [vmem:[%s31 + $0x10] sm:$0xff]
  %v1560 = vld [vmem:[%s31 + $0x18] sm:$0xff]
  %v1561 = vld [vmem:[%s31 + $0x20] sm:$0xff]
  %v1562 = vld [vmem:[%s31 + $0x28] sm:$0xff]
  %v1563 = vld [vmem:[%s31 + $0x30] sm:$0xff]
  %v1564 = vld [vmem:[%s31 + $0x38] sm:$0xff]
  %v1565 = vld [vmem:[%s31 + $0x40] sm:$0xff]
  %v1566 = vld [vmem:[%s31 + $0x48] sm:$0xff]
  %v1567 = vld [vmem:[%s31 + $0x50] sm:$0xff]
  %v1568 = vld [vmem:[%s31 + $0x58] sm:$0xff]
  %v1569 = vld [vmem:[%s31 + $0x60] sm:$0xff]
  %v1570 = vld [vmem:[%s31 + $0x68] sm:$0xff]
  %v1571 = vld [vmem:[%s31 + $0x70] sm:$0xff]
  %v1572 = vld [vmem:[%s31 + $0x78] sm:$0xff]
  %v1573 = vld [vmem:[%s33] sm:$0x1]
  %v1575 = vlaneseq
  %v1576 = vshrl.u32 %v1575, 7
  %v1577 = vsub.s32 0, %v1576
  %v1578 = vrot.slane %v1573, %v1577
  %1580 = vmatprep.subr.mxu0 0.0
  %1581 = vmatpush1.msra.mxu0 %v1557
  %1582 = vmatprep.subr.mxu0 0.0
  %1583 = vmatpush1.msra.mxu0 %v1558
  %1584 = vmatprep.subr.mxu0 0.0
  %1585 = vmatpush1.msra.mxu0 %v1559
  %1586 = vmatprep.subr.mxu0 0.0
  %1587 = vmatpush1.msra.mxu0 %v1560
  %1588 = vmatprep.subr.mxu0 0.0
  %1589 = vmatpush1.msra.mxu0 %v1561
  %1590 = vmatprep.subr.mxu0 0.0
  %1591 = vmatpush1.msra.mxu0 %v1562
  %1592 = vmatprep.subr.mxu0 0.0
  %1593 = vmatpush1.msra.mxu0 %v1563
  %1594 = vmatprep.subr.mxu0 0.0
  %1595 = vmatpush1.msra.mxu0 %v1564
  %1596 = vmatprep.subr.mxu0 0.0
  %1597 = vmatpush1.msra.mxu0 %v1565
  %1598 = vmatprep.subr.mxu0 0.0
  %1599 = vmatpush1.msra.mxu0 %v1566
  %1600 = vmatprep.subr.mxu0 0.0
  %1601 = vmatpush1.msra.mxu0 %v1567
  %1602 = vmatprep.subr.mxu0 0.0
  %1603 = vmatpush1.msra.mxu0 %v1568
  %1604 = vmatprep.subr.mxu0 0.0
  %1605 = vmatpush1.msra.mxu0 %v1569
  %1606 = vmatprep.subr.mxu0 0.0
  %1607 = vmatpush1.msra.mxu0 %v1570
  %1608 = vmatprep.subr.mxu0 0.0
  %1609 = vmatpush1.msra.mxu0 %v1571
  %1610 = vmatprep.subr.mxu0 0.0
  %1611 = vmatpush1.msra.mxu0 %v1572
  %1612 = vmatprep.subr.mxu0 0.0
  %1613 = vmatpush1.msra.mxu0 0.0
  %1614 = vmatprep.subr.mxu0 0.0
  %1615 = vmatpush1.msra.mxu0 0.0
  %1616 = vmatprep.subr.mxu0 0.0
  %1617 = vmatpush1.msra.mxu0 0.0
  %1618 = vmatprep.subr.mxu0 0.0
  %1619 = vmatpush1.msra.mxu0 0.0
  %1620 = vmatprep.subr.mxu0 0.0
  %1621 = vmatpush1.msra.mxu0 0.0
  %1622 = vmatprep.subr.mxu0 0.0
  %1623 = vmatpush1.msra.mxu0 0.0
  %1624 = vmatprep.subr.mxu0 0.0
  %1625 = vmatpush1.msra.mxu0 0.0
  %1626 = vmatprep.subr.mxu0 0.0
  %1627 = vmatpush1.msra.mxu0 0.0
  %1628 = vmatprep.subr.mxu0 0.0
  %1629 = vmatpush1.msra.mxu0 0.0
  %1630 = vmatprep.subr.mxu0 0.0
  %1631 = vmatpush1.msra.mxu0 0.0
  %1632 = vmatprep.subr.mxu0 0.0
  %1633 = vmatpush1.msra.mxu0 0.0
  %1634 = vmatprep.subr.mxu0 0.0
  %1635 = vmatpush1.msra.mxu0 0.0
  %1636 = vmatprep.subr.mxu0 0.0
  %1637 = vmatpush1.msra.mxu0 0.0
  %1638 = vmatprep.subr.mxu0 0.0
  %1639 = vmatpush1.msra.mxu0 0.0
  %1640 = vmatprep.subr.mxu0 0.0
  %1641 = vmatpush1.msra.mxu0 0.0
  %1642 = vmatprep.subr.mxu0 0.0
  %1643 = vmatpush1.msra.mxu0 0.0
  %1644 = vmatprep.mubr.f32.mxu0 0.0
  %1645 = vmatmul.mubr.f32.gmra.mrb[0].mxu0 %v1554
  %v1646 = vpop.f32.mrb[0].mxu0
  %v1647 = vadd.f32 %v1578, %v1646
  %v1648 = vpop.f32.mrb[0].mxu0
  %1649 = vmatprep.mubr.f32.mxu0 0.0
  %1650 = vmatmul.mubr.f32.gmra.mrb[0].mxu0 %v1555
  %v1651 = vpop.f32.mrb[0].mxu0
  %v1652 = vadd.f32 %v1578, %v1651
  %v1653 = vpop.f32.mrb[0].mxu0
  %1654 = vmatprep.mubr.f32.mxu0 0.0
  %1655 = vmatmul.mubr.f32.gmra.mrb[0].mxu0 %v1556
  %v1656 = vpop.f32.mrb[0].mxu0
  %v1657 = vadd.f32 %v1578, %v1656
  %v1658 = vpop.f32.mrb[0].mxu0
  %1659 = vdwg.mxu0
  %v1660 = vadd.f32 %v1368, %v1647
  %v1661 = vadd.f32 %v1369, %v1652
  %v1662 = vadd.f32 %v1370, %v1657
  %v1663 = vld [vmem:[%s35] sm:$0x1]
  %v1664 = vld [vmem:[%s37] sm:$0x1]
  %v1665 = vsel %vm148, %v1660, 0.0
  %1666 = vadd.xlane.f32.xlu0 %v1665
  %v1667 = vpop.xlane.xlu0 %1666
  %v1668 = vsel %vm148, %v1661, 0.0
  %1669 = vadd.xlane.f32.xlu0 %v1668
  %v1670 = vpop.xlane.xlu0 %1669
  %v1671 = vsel %vm260, %v1662, 0.0
  %1672 = vadd.xlane.f32.xlu0 %v1671
  %v1673 = vpop.xlane.xlu0 %1672
  %v1674 = vmul.f32 %v1667, %v264
  %v1675 = vmul.f32 %v1670, %v264
  %v1676 = vmul.f32 %v1673, %v264
  %v1677 = vsub.f32 %v1660, %v1674
  %v1678 = vsub.f32 %v1661, %v1675
  %v1679 = vsub.f32 %v1662, %v1676
  %v1680 = vmul.f32 %v1677, %v1677
  %v1681 = vmul.f32 %v1678, %v1678
  %v1682 = vmul.f32 %v1679, %v1679
  %v1683 = vsel %vm148, %v1680, 0.0
  %1684 = vadd.xlane.f32.xlu0 %v1683
  %v1685 = vpop.xlane.xlu0 %1684
  %v1686 = vsel %vm148, %v1681, 0.0
  %1687 = vadd.xlane.f32.xlu0 %v1686
  %v1688 = vpop.xlane.xlu0 %1687
  %v1689 = vsel %vm260, %v1682, 0.0
  %1690 = vadd.xlane.f32.xlu0 %v1689
  %v1691 = vpop.xlane.xlu0 %1690
  %v1692 = vmul.f32 %v1685, %v264
  %v1693 = vmul.f32 %v1688, %v264
  %v1694 = vmul.f32 %v1691, %v264
  %v1695 = vadd.f32 %v1692, 1e-05
  %v1696 = vadd.f32 %v1693, 1e-05
  %v1697 = vadd.f32 %v1694, 1e-05
  %v1698 = vrsqrt.pop %v1695
  %v1699 = vrsqrt.pop %v1696
  %v1700 = vrsqrt.pop %v1697
  %v1701 = vmul.f32 %v1677, %v1698
  %v1702 = vmul.f32 %v1678, %v1699
  %v1703 = vmul.f32 %v1679, %v1700
  %v1705 = vlaneseq
  %v1706 = vshrl.u32 %v1705, 7
  %v1707 = vsub.s32 0, %v1706
  %v1708 = vrot.slane %v1663, %v1707
  %v1710 = vmul.f32 %v1701, %v1708
  %v1711 = vmul.f32 %v1702, %v1708
  %v1712 = vmul.f32 %v1703, %v1708
  %v1714 = vlaneseq
  %v1715 = vshrl.u32 %v1714, 7
  %v1716 = vsub.s32 0, %v1715
  %v1717 = vrot.slane %v1664, %v1716
  %v1719 = vadd.f32 %v1710, %v1717
  %v1720 = vadd.f32 %v1711, %v1717
  %v1721 = vadd.f32 %v1712, %v1717
  %v1722 = vld [vmem:[%s39] sm:$0xff]
  %v1723 = vld [vmem:[%s39 + $0x8] sm:$0xff]
  %v1724 = vld [vmem:[%s39 + $0x10] sm:$0xff]
  %v1725 = vld [vmem:[%s39 + $0x18] sm:$0xff]
  %v1726 = vld [vmem:[%s41] sm:$0x1]
  %v1728 = vlaneseq
  %v1729 = vshrl.u32 %v1728, 7
  %v1730 = vsub.s32 0, %v1729
  %v1731 = vrot.slane %v1726, %v1730
  %v1734 = vsel %vm148, %v1719, 0
  %v1737 = vsel %vm148, %v1720, 0
  %v1740 = vsel %vm148, %v1721, 0
  %1742 = vmatprep.subr.mxu0 0.0
  %1743 = vmatpush1.msra.mxu0 %v1722
  %1744 = vmatprep.subr.mxu0 0.0
  %1745 = vmatpush1.msra.mxu0 %v1723
  %1746 = vmatprep.subr.mxu0 0.0
  %1747 = vmatpush1.msra.mxu0 %v1724
  %1748 = vmatprep.subr.mxu0 0.0
  %1749 = vmatpush1.msra.mxu0 %v1725
  %1750 = vmatprep.subr.mxu0 0.0
  %1751 = vmatpush1.msra.mxu0 0.0
  %1752 = vmatprep.subr.mxu0 0.0
  %1753 = vmatpush1.msra.mxu0 0.0
  %1754 = vmatprep.subr.mxu0 0.0
  %1755 = vmatpush1.msra.mxu0 0.0
  %1756 = vmatprep.subr.mxu0 0.0
  %1757 = vmatpush1.msra.mxu0 0.0
  %1758 = vmatprep.subr.mxu0 0.0
  %1759 = vmatpush1.msra.mxu0 0.0
  %1760 = vmatprep.subr.mxu0 0.0
  %1761 = vmatpush1.msra.mxu0 0.0
  %1762 = vmatprep.subr.mxu0 0.0
  %1763 = vmatpush1.msra.mxu0 0.0
  %1764 = vmatprep.subr.mxu0 0.0
  %1765 = vmatpush1.msra.mxu0 0.0
  %1766 = vmatprep.subr.mxu0 0.0
  %1767 = vmatpush1.msra.mxu0 0.0
  %1768 = vmatprep.subr.mxu0 0.0
  %1769 = vmatpush1.msra.mxu0 0.0
  %1770 = vmatprep.subr.mxu0 0.0
  %1771 = vmatpush1.msra.mxu0 0.0
  %1772 = vmatprep.subr.mxu0 0.0
  %1773 = vmatpush1.msra.mxu0 0.0
  %1774 = vmatprep.subr.mxu0 0.0
  %1775 = vmatpush1.msra.mxu0 0.0
  %1776 = vmatprep.subr.mxu0 0.0
  %1777 = vmatpush1.msra.mxu0 0.0
  %1778 = vmatprep.subr.mxu0 0.0
  %1779 = vmatpush1.msra.mxu0 0.0
  %1780 = vmatprep.subr.mxu0 0.0
  %1781 = vmatpush1.msra.mxu0 0.0
  %1782 = vmatprep.subr.mxu0 0.0
  %1783 = vmatpush1.msra.mxu0 0.0
  %1784 = vmatprep.subr.mxu0 0.0
  %1785 = vmatpush1.msra.mxu0 0.0
  %1786 = vmatprep.subr.mxu0 0.0
  %1787 = vmatpush1.msra.mxu0 0.0
  %1788 = vmatprep.subr.mxu0 0.0
  %1789 = vmatpush1.msra.mxu0 0.0
  %1790 = vmatprep.subr.mxu0 0.0
  %1791 = vmatpush1.msra.mxu0 0.0
  %1792 = vmatprep.subr.mxu0 0.0
  %1793 = vmatpush1.msra.mxu0 0.0
  %1794 = vmatprep.subr.mxu0 0.0
  %1795 = vmatpush1.msra.mxu0 0.0
  %1796 = vmatprep.subr.mxu0 0.0
  %1797 = vmatpush1.msra.mxu0 0.0
  %1798 = vmatprep.subr.mxu0 0.0
  %1799 = vmatpush1.msra.mxu0 0.0
  %1800 = vmatprep.subr.mxu0 0.0
  %1801 = vmatpush1.msra.mxu0 0.0
  %1802 = vmatprep.subr.mxu0 0.0
  %1803 = vmatpush1.msra.mxu0 0.0
  %1804 = vmatprep.subr.mxu0 0.0
  %1805 = vmatpush1.msra.mxu0 0.0
  %1806 = vmatprep.mubr.f32.mxu0 0.0
  %1807 = vmatmul.mubr.f32.gmra.mrb[0].mxu0 %v1734
  %v1808 = vpop.f32.mrb[0].mxu0
  %v1809 = vadd.f32 %v1731, %v1808
  %v1810 = vpop.f32.mrb[0].mxu0
  %1811 = vmatprep.mubr.f32.mxu0 0.0
  %1812 = vmatmul.mubr.f32.gmra.mrb[0].mxu0 %v1737
  %v1813 = vpop.f32.mrb[0].mxu0
  %v1814 = vadd.f32 %v1731, %v1813
  %v1815 = vpop.f32.mrb[0].mxu0
  %1816 = vmatprep.mubr.f32.mxu0 0.0
  %1817 = vmatmul.mubr.f32.gmra.mrb[0].mxu0 %v1740
  %v1818 = vpop.f32.mrb[0].mxu0
  %v1819 = vadd.f32 %v1731, %v1818
  %v1820 = vpop.f32.mrb[0].mxu0
  %1821 = vdwg.mxu0
  %v1822 = vmul.f32 %v1809, 0.25
  %v1823 = vmul.f32 %v1814, 0.25
  %1826 = vrot.lane.b32.xlu0 %v1809, 96
  %v1827 = vpop.permute.xlu0 %1826
  %1828 = vrot.lane.b32.xlu0 %v1814, 96
  %v1829 = vpop.permute.xlu0 %1828
  %v1831 = vsel %vm421, %v1822, 0
  %v1834 = vsel %vm421, %v1823, 0
  %v1836 = vsel %vm421, %v1827, 0
  %v1838 = vsel %vm421, %v1829, 0
  %1840 = vmatprep.subr.mxu0 0.0
  %1841 = vmatpush1.xpose.msra.mxu0 %v1836
  %1842 = vmatprep.subr.mxu0 0.0
  %1843 = vmatpush1.xpose.msra.mxu0 %v1838
  %1844 = vmatprep.subr.mxu0 0.0
  %1845 = vmatpush1.xpose.msra.mxu0 0.0
  %1846 = vmatprep.subr.mxu0 0.0
  %1847 = vmatpush1.xpose.msra.mxu0 0.0
  %1848 = vmatprep.subr.mxu0 0.0
  %1849 = vmatpush1.xpose.msra.mxu0 0.0
  %1850 = vmatprep.subr.mxu0 0.0
  %1851 = vmatpush1.xpose.msra.mxu0 0.0
  %1852 = vmatprep.subr.mxu0 0.0
  %1853 = vmatpush1.xpose.msra.mxu0 0.0
  %1854 = vmatprep.subr.mxu0 0.0
  %1855 = vmatpush1.xpose.msra.mxu0 0.0
  %1856 = vmatprep.subr.mxu0 0.0
  %1857 = vmatpush1.xpose.msra.mxu0 0.0
  %1858 = vmatprep.subr.mxu0 0.0
  %1859 = vmatpush1.xpose.msra.mxu0 0.0
  %1860 = vmatprep.subr.mxu0 0.0
  %1861 = vmatpush1.xpose.msra.mxu0 0.0
  %1862 = vmatprep.subr.mxu0 0.0
  %1863 = vmatpush1.xpose.msra.mxu0 0.0
  %1864 = vmatprep.subr.mxu0 0.0
  %1865 = vmatpush1.xpose.msra.mxu0 0.0
  %1866 = vmatprep.subr.mxu0 0.0
  %1867 = vmatpush1.xpose.msra.mxu0 0.0
  %1868 = vmatprep.subr.mxu0 0.0
  %1869 = vmatpush1.xpose.msra.mxu0 0.0
  %1870 = vmatprep.subr.mxu0 0.0
  %1871 = vmatpush1.xpose.msra.mxu0 0.0
  %1872 = vmatprep.subr.mxu0 0.0
  %1873 = vmatpush1.xpose.msra.mxu0 0.0
  %1874 = vmatprep.subr.mxu0 0.0
  %1875 = vmatpush1.xpose.msra.mxu0 0.0
  %1876 = vmatprep.subr.mxu0 0.0
  %1877 = vmatpush1.xpose.msra.mxu0 0.0
  %1878 = vmatprep.subr.mxu0 0.0
  %1879 = vmatpush1.xpose.msra.mxu0 0.0
  %1880 = vmatprep.subr.mxu0 0.0
  %1881 = vmatpush1.xpose.msra.mxu0 0.0
  %1882 = vmatprep.subr.mxu0 0.0
  %1883 = vmatpush1.xpose.msra.mxu0 0.0
  %1884 = vmatprep.subr.mxu0 0.0
  %1885 = vmatpush1.xpose.msra.mxu0 0.0
  %1886 = vmatprep.subr.mxu0 0.0
  %1887 = vmatpush1.xpose.msra.mxu0 0.0
  %1888 = vmatprep.subr.mxu0 0.0
  %1889 = vmatpush1.xpose.msra.mxu0 0.0
  %1890 = vmatprep.subr.mxu0 0.0
  %1891 = vmatpush1.xpose.msra.mxu0 0.0
  %1892 = vmatprep.subr.mxu0 0.0
  %1893 = vmatpush1.xpose.msra.mxu0 0.0
  %1894 = vmatprep.subr.mxu0 0.0
  %1895 = vmatpush1.xpose.msra.mxu0 0.0
  %1896 = vmatprep.subr.mxu0 0.0
  %1897 = vmatpush1.xpose.msra.mxu0 0.0
  %1898 = vmatprep.subr.mxu0 0.0
  %1899 = vmatpush1.xpose.msra.mxu0 0.0
  %1900 = vmatprep.subr.mxu0 0.0
  %1901 = vmatpush1.xpose.msra.mxu0 0.0
  %1902 = vmatprep.subr.mxu0 0.0
  %1903 = vmatpush1.xpose.msra.mxu0 0.0
  %1904 = vmatprep.mubr.f32.mxu0 0.0
  %1905 = vmatmul.mubr.f32.gmra.mrb[0].mxu0 %v1831
  %v1906 = vpop.f32.mrb[0].mxu0
  %v1907 = vadd.f32 0.0, %v1906
  %v1908 = vpop.f32.mrb[0].mxu0
  %1909 = vmatprep.mubr.f32.mxu0 0.0
  %1910 = vmatmul.mubr.f32.gmra.mrb[0].mxu0 %v1834
  %v1911 = vpop.f32.mrb[0].mxu0
  %v1912 = vadd.f32 0.0, %v1911
  %v1913 = vpop.f32.mrb[0].mxu0
  %1914 = vdwg.mxu0
  %v1915 = vsel %vm507, %v1907, -1e+30
  %v1916 = vsel %vm508, %v1912, -1e+30
  %v1917 = vsel %vm511, %v1915, -inf
  %1918 = vmax.xlane.f32.xlu0 %v1917
  %v1919 = vpop.xlane.xlu0 %1918
  %v1920 = vsel %vm515, %v1916, -inf
  %1921 = vmax.xlane.f32.xlu0 %v1920
  %v1922 = vpop.xlane.xlu0 %1921
  %v1923 = vsub.f32 %v1915, %v1919
  %v1924 = vsub.f32 %v1916, %v1922
  %v1925 = vmul.f32 %v1923, 1.442695
  %v1926 = vpow.pop %v1925
  %v1927 = vmul.f32 %v1924, 1.442695
  %v1928 = vpow.pop %v1927
  %v1929 = vsel %vm511, %v1926, 0.0
  %1930 = vadd.xlane.f32.xlu0 %v1929
  %v1931 = vpop.xlane.xlu0 %1930
  %v1932 = vsel %vm515, %v1928, 0.0
  %1933 = vadd.xlane.f32.xlu0 %v1932
  %v1934 = vpop.xlane.xlu0 %1933
  %v1935 = vrcp.pop %v1931
  %v1936 = vrcp.pop %v1934
  %v1937 = vmul.f32 %v1926, %v1935
  %v1938 = vmul.f32 %v1928, %v1936
  %1939 = vrot.lane.b32.xlu0 %v1809, 64
  %v1940 = vpop.permute.xlu0 %1939
  %1941 = vrot.lane.b32.xlu0 %v1814, 64
  %v1942 = vpop.permute.xlu0 %1941
  %v1945 = vsel %vm511, %v1937, 0
  %v1948 = vsel %vm511, %v1938, 0
  %v1950 = vsel %vm546, %v1942, 0
  %1952 = vmatprep.subr.mxu0 0.0
  %1953 = vmatpush1.msra.mxu0 %v1940
  %1954 = vmatprep.subr.mxu0 0.0
  %1955 = vmatpush1.msra.mxu0 %v1950
  %1956 = vmatprep.subr.mxu0 0.0
  %1957 = vmatpush1.msra.mxu0 0.0
  %1958 = vmatprep.subr.mxu0 0.0
  %1959 = vmatpush1.msra.mxu0 0.0
  %1960 = vmatprep.subr.mxu0 0.0
  %1961 = vmatpush1.msra.mxu0 0.0
  %1962 = vmatprep.subr.mxu0 0.0
  %1963 = vmatpush1.msra.mxu0 0.0
  %1964 = vmatprep.subr.mxu0 0.0
  %1965 = vmatpush1.msra.mxu0 0.0
  %1966 = vmatprep.subr.mxu0 0.0
  %1967 = vmatpush1.msra.mxu0 0.0
  %1968 = vmatprep.subr.mxu0 0.0
  %1969 = vmatpush1.msra.mxu0 0.0
  %1970 = vmatprep.subr.mxu0 0.0
  %1971 = vmatpush1.msra.mxu0 0.0
  %1972 = vmatprep.subr.mxu0 0.0
  %1973 = vmatpush1.msra.mxu0 0.0
  %1974 = vmatprep.subr.mxu0 0.0
  %1975 = vmatpush1.msra.mxu0 0.0
  %1976 = vmatprep.subr.mxu0 0.0
  %1977 = vmatpush1.msra.mxu0 0.0
  %1978 = vmatprep.subr.mxu0 0.0
  %1979 = vmatpush1.msra.mxu0 0.0
  %1980 = vmatprep.subr.mxu0 0.0
  %1981 = vmatpush1.msra.mxu0 0.0
  %1982 = vmatprep.subr.mxu0 0.0
  %1983 = vmatpush1.msra.mxu0 0.0
  %1984 = vmatprep.subr.mxu0 0.0
  %1985 = vmatpush1.msra.mxu0 0.0
  %1986 = vmatprep.subr.mxu0 0.0
  %1987 = vmatpush1.msra.mxu0 0.0
  %1988 = vmatprep.subr.mxu0 0.0
  %1989 = vmatpush1.msra.mxu0 0.0
  %1990 = vmatprep.subr.mxu0 0.0
  %1991 = vmatpush1.msra.mxu0 0.0
  %1992 = vmatprep.subr.mxu0 0.0
  %1993 = vmatpush1.msra.mxu0 0.0
  %1994 = vmatprep.subr.mxu0 0.0
  %1995 = vmatpush1.msra.mxu0 0.0
  %1996 = vmatprep.subr.mxu0 0.0
  %1997 = vmatpush1.msra.mxu0 0.0
  %1998 = vmatprep.subr.mxu0 0.0
  %1999 = vmatpush1.msra.mxu0 0.0
  %2000 = vmatprep.subr.mxu0 0.0
  %2001 = vmatpush1.msra.mxu0 0.0
  %2002 = vmatprep.subr.mxu0 0.0
  %2003 = vmatpush1.msra.mxu0 0.0
  %2004 = vmatprep.subr.mxu0 0.0
  %2005 = vmatpush1.msra.mxu0 0.0
  %2006 = vmatprep.subr.mxu0 0.0
  %2007 = vmatpush1.msra.mxu0 0.0
  %2008 = vmatprep.subr.mxu0 0.0
  %2009 = vmatpush1.msra.mxu0 0.0
  %2010 = vmatprep.subr.mxu0 0.0
  %2011 = vmatpush1.msra.mxu0 0.0
  %2012 = vmatprep.subr.mxu0 0.0
  %2013 = vmatpush1.msra.mxu0 0.0
  %2014 = vmatprep.subr.mxu0 0.0
  %2015 = vmatpush1.msra.mxu0 0.0
  %2016 = vmatprep.mubr.f32.mxu0 0.0
  %2017 = vmatmul.mubr.f32.gmra.mrb[0].mxu0 %v1945
  %v2018 = vpop.f32.mrb[0].mxu0
  %v2019 = vadd.f32 0.0, %v2018
  %v2020 = vpop.f32.mrb[0].mxu0
  %2021 = vmatprep.mubr.f32.mxu0 0.0
  %2022 = vmatmul.mubr.f32.gmra.mrb[0].mxu0 %v1948
  %v2023 = vpop.f32.mrb[0].mxu0
  %v2024 = vadd.f32 0.0, %v2023
  %v2025 = vpop.f32.mrb[0].mxu0
  %2026 = vdwg.mxu0
  %2027 = vst.msk [vmem:[#allocation2] sm:$0xff] %vm421, %v2019
  %2028 = vst.msk [vmem:[#allocation2 + $0x8] sm:$0x1] %vm625, %v2024
  %2029 = vrot.lane.b32.xlu0 %v1822, 112
  %v2030 = vpop.permute.xlu0 %2029
  %2031 = vrot.lane.b32.xlu0 %v1823, 112
  %v2032 = vpop.permute.xlu0 %2031
  %2033 = vrot.lane.b32.xlu0 %v1809, 80
  %v2034 = vpop.permute.xlu0 %2033
  %2035 = vrot.lane.b32.xlu0 %v1814, 80
  %v2036 = vpop.permute.xlu0 %2035
  %v2037 = vsel %vm421, %v2030, 0
  %v2039 = vsel %vm421, %v2032, 0
  %v2041 = vsel %vm421, %v2034, 0
  %v2043 = vsel %vm421, %v2036, 0
  %2045 = vmatprep.subr.mxu0 0.0
  %2046 = vmatpush1.xpose.msra.mxu0 %v2041
  %2047 = vmatprep.subr.mxu0 0.0
  %2048 = vmatpush1.xpose.msra.mxu0 %v2043
  %2049 = vmatprep.subr.mxu0 0.0
  %2050 = vmatpush1.xpose.msra.mxu0 0.0
  %2051 = vmatprep.subr.mxu0 0.0
  %2052 = vmatpush1.xpose.msra.mxu0 0.0
  %2053 = vmatprep.subr.mxu0 0.0
  %2054 = vmatpush1.xpose.msra.mxu0 0.0
  %2055 = vmatprep.subr.mxu0 0.0
  %2056 = vmatpush1.xpose.msra.mxu0 0.0
  %2057 = vmatprep.subr.mxu0 0.0
  %2058 = vmatpush1.xpose.msra.mxu0 0.0
  %2059 = vmatprep.subr.mxu0 0.0
  %2060 = vmatpush1.xpose.msra.mxu0 0.0
  %2061 = vmatprep.subr.mxu0 0.0
  %2062 = vmatpush1.xpose.msra.mxu0 0.0
  %2063 = vmatprep.subr.mxu0 0.0
  %2064 = vmatpush1.xpose.msra.mxu0 0.0
  %2065 = vmatprep.subr.mxu0 0.0
  %2066 = vmatpush1.xpose.msra.mxu0 0.0
  %2067 = vmatprep.subr.mxu0 0.0
  %2068 = vmatpush1.xpose.msra.mxu0 0.0
  %2069 = vmatprep.subr.mxu0 0.0
  %2070 = vmatpush1.xpose.msra.mxu0 0.0
  %2071 = vmatprep.subr.mxu0 0.0
  %2072 = vmatpush1.xpose.msra.mxu0 0.0
  %2073 = vmatprep.subr.mxu0 0.0
  %2074 = vmatpush1.xpose.msra.mxu0 0.0
  %2075 = vmatprep.subr.mxu0 0.0
  %2076 = vmatpush1.xpose.msra.mxu0 0.0
  %2077 = vmatprep.subr.mxu0 0.0
  %2078 = vmatpush1.xpose.msra.mxu0 0.0
  %2079 = vmatprep.subr.mxu0 0.0
  %2080 = vmatpush1.xpose.msra.mxu0 0.0
  %2081 = vmatprep.subr.mxu0 0.0
  %2082 = vmatpush1.xpose.msra.mxu0 0.0
  %2083 = vmatprep.subr.mxu0 0.0
  %2084 = vmatpush1.xpose.msra.mxu0 0.0
  %2085 = vmatprep.subr.mxu0 0.0
  %2086 = vmatpush1.xpose.msra.mxu0 0.0
  %2087 = vmatprep.subr.mxu0 0.0
  %2088 = vmatpush1.xpose.msra.mxu0 0.0
  %2089 = vmatprep.subr.mxu0 0.0
  %2090 = vmatpush1.xpose.msra.mxu0 0.0
  %2091 = vmatprep.subr.mxu0 0.0
  %2092 = vmatpush1.xpose.msra.mxu0 0.0
  %2093 = vmatprep.subr.mxu0 0.0
  %2094 = vmatpush1.xpose.msra.mxu0 0.0
  %2095 = vmatprep.subr.mxu0 0.0
  %2096 = vmatpush1.xpose.msra.mxu0 0.0
  %2097 = vmatprep.subr.mxu0 0.0
  %2098 = vmatpush1.xpose.msra.mxu0 0.0
  %2099 = vmatprep.subr.mxu0 0.0
  %2100 = vmatpush1.xpose.msra.mxu0 0.0
  %2101 = vmatprep.subr.mxu0 0.0
  %2102 = vmatpush1.xpose.msra.mxu0 0.0
  %2103 = vmatprep.subr.mxu0 0.0
  %2104 = vmatpush1.xpose.msra.mxu0 0.0
  %2105 = vmatprep.subr.mxu0 0.0
  %2106 = vmatpush1.xpose.msra.mxu0 0.0
  %2107 = vmatprep.subr.mxu0 0.0
  %2108 = vmatpush1.xpose.msra.mxu0 0.0
  %2109 = vmatprep.mubr.f32.mxu0 0.0
  %2110 = vmatmul.mubr.f32.gmra.mrb[0].mxu0 %v2037
  %v2111 = vpop.f32.mrb[0].mxu0
  %v2112 = vadd.f32 0.0, %v2111
  %v2113 = vpop.f32.mrb[0].mxu0
  %2114 = vmatprep.mubr.f32.mxu0 0.0
  %2115 = vmatmul.mubr.f32.gmra.mrb[0].mxu0 %v2039
  %v2116 = vpop.f32.mrb[0].mxu0
  %v2117 = vadd.f32 0.0, %v2116
  %v2118 = vpop.f32.mrb[0].mxu0
  %2119 = vdwg.mxu0
  %v2120 = vsel %vm507, %v2112, -1e+30
  %v2121 = vsel %vm508, %v2117, -1e+30
  %v2122 = vsel %vm511, %v2120, -inf
  %2123 = vmax.xlane.f32.xlu0 %v2122
  %v2124 = vpop.xlane.xlu0 %2123
  %v2125 = vsel %vm515, %v2121, -inf
  %2126 = vmax.xlane.f32.xlu0 %v2125
  %v2127 = vpop.xlane.xlu0 %2126
  %v2128 = vsub.f32 %v2120, %v2124
  %v2129 = vsub.f32 %v2121, %v2127
  %v2130 = vmul.f32 %v2128, 1.442695
  %v2131 = vpow.pop %v2130
  %v2132 = vmul.f32 %v2129, 1.442695
  %v2133 = vpow.pop %v2132
  %v2134 = vsel %vm511, %v2131, 0.0
  %2135 = vadd.xlane.f32.xlu0 %v2134
  %v2136 = vpop.xlane.xlu0 %2135
  %v2137 = vsel %vm515, %v2133, 0.0
  %2138 = vadd.xlane.f32.xlu0 %v2137
  %v2139 = vpop.xlane.xlu0 %2138
  %v2140 = vrcp.pop %v2136
  %v2141 = vrcp.pop %v2139
  %v2142 = vmul.f32 %v2131, %v2140
  %v2143 = vmul.f32 %v2133, %v2141
  %2144 = vrot.lane.b32.xlu0 %v1809, 48
  %v2145 = vpop.permute.xlu0 %2144
  %2146 = vrot.lane.b32.xlu0 %v1814, 48
  %v2147 = vpop.permute.xlu0 %2146
  %v2150 = vsel %vm511, %v2142, 0
  %v2153 = vsel %vm511, %v2143, 0
  %v2155 = vsel %vm546, %v2147, 0
  %2157 = vmatprep.subr.mxu0 0.0
  %2158 = vmatpush1.msra.mxu0 %v2145
  %2159 = vmatprep.subr.mxu0 0.0
  %2160 = vmatpush1.msra.mxu0 %v2155
  %2161 = vmatprep.subr.mxu0 0.0
  %2162 = vmatpush1.msra.mxu0 0.0
  %2163 = vmatprep.subr.mxu0 0.0
  %2164 = vmatpush1.msra.mxu0 0.0
  %2165 = vmatprep.subr.mxu0 0.0
  %2166 = vmatpush1.msra.mxu0 0.0
  %2167 = vmatprep.subr.mxu0 0.0
  %2168 = vmatpush1.msra.mxu0 0.0
  %2169 = vmatprep.subr.mxu0 0.0
  %2170 = vmatpush1.msra.mxu0 0.0
  %2171 = vmatprep.subr.mxu0 0.0
  %2172 = vmatpush1.msra.mxu0 0.0
  %2173 = vmatprep.subr.mxu0 0.0
  %2174 = vmatpush1.msra.mxu0 0.0
  %2175 = vmatprep.subr.mxu0 0.0
  %2176 = vmatpush1.msra.mxu0 0.0
  %2177 = vmatprep.subr.mxu0 0.0
  %2178 = vmatpush1.msra.mxu0 0.0
  %2179 = vmatprep.subr.mxu0 0.0
  %2180 = vmatpush1.msra.mxu0 0.0
  %2181 = vmatprep.subr.mxu0 0.0
  %2182 = vmatpush1.msra.mxu0 0.0
  %2183 = vmatprep.subr.mxu0 0.0
  %2184 = vmatpush1.msra.mxu0 0.0
  %2185 = vmatprep.subr.mxu0 0.0
  %2186 = vmatpush1.msra.mxu0 0.0
  %2187 = vmatprep.subr.mxu0 0.0
  %2188 = vmatpush1.msra.mxu0 0.0
  %2189 = vmatprep.subr.mxu0 0.0
  %2190 = vmatpush1.msra.mxu0 0.0
  %2191 = vmatprep.subr.mxu0 0.0
  %2192 = vmatpush1.msra.mxu0 0.0
  %2193 = vmatprep.subr.mxu0 0.0
  %2194 = vmatpush1.msra.mxu0 0.0
  %2195 = vmatprep.subr.mxu0 0.0
  %2196 = vmatpush1.msra.mxu0 0.0
  %2197 = vmatprep.subr.mxu0 0.0
  %2198 = vmatpush1.msra.mxu0 0.0
  %2199 = vmatprep.subr.mxu0 0.0
  %2200 = vmatpush1.msra.mxu0 0.0
  %2201 = vmatprep.subr.mxu0 0.0
  %2202 = vmatpush1.msra.mxu0 0.0
  %2203 = vmatprep.subr.mxu0 0.0
  %2204 = vmatpush1.msra.mxu0 0.0
  %2205 = vmatprep.subr.mxu0 0.0
  %2206 = vmatpush1.msra.mxu0 0.0
  %2207 = vmatprep.subr.mxu0 0.0
  %2208 = vmatpush1.msra.mxu0 0.0
  %2209 = vmatprep.subr.mxu0 0.0
  %2210 = vmatpush1.msra.mxu0 0.0
  %2211 = vmatprep.subr.mxu0 0.0
  %2212 = vmatpush1.msra.mxu0 0.0
  %2213 = vmatprep.subr.mxu0 0.0
  %2214 = vmatpush1.msra.mxu0 0.0
  %2215 = vmatprep.subr.mxu0 0.0
  %2216 = vmatpush1.msra.mxu0 0.0
  %2217 = vmatprep.subr.mxu0 0.0
  %2218 = vmatpush1.msra.mxu0 0.0
  %2219 = vmatprep.subr.mxu0 0.0
  %2220 = vmatpush1.msra.mxu0 0.0
  %2221 = vmatprep.mubr.f32.mxu0 0.0
  %2222 = vmatmul.mubr.f32.gmra.mrb[0].mxu0 %v2150
  %v2223 = vpop.f32.mrb[0].mxu0
  %v2224 = vadd.f32 0.0, %v2223
  %v2225 = vpop.f32.mrb[0].mxu0
  %2226 = vmatprep.mubr.f32.mxu0 0.0
  %2227 = vmatmul.mubr.f32.gmra.mrb[0].mxu0 %v2153
  %v2228 = vpop.f32.mrb[0].mxu0
  %v2229 = vadd.f32 0.0, %v2228
  %v2230 = vpop.f32.mrb[0].mxu0
  %2231 = vdwg.mxu0
  %2234 = vrot.lane.b32.xlu0 %v2224, 16
  %v2235 = vpop.permute.xlu0 %2234
  %2236 = vrot.lane.b32.xlu0 %v2229, 16
  %v2237 = vpop.permute.xlu0 %2236
  %2240 = vst.msk [vmem:[#allocation2] sm:$0xff] %vm838, %v2235
  %2241 = vst.msk [vmem:[#allocation2 + $0x8] sm:$0x1] %vm840, %v2237
  %v2242 = vmul.f32 %v1819, 0.25
  %v2244 = vrot.slane %v1823, 1
  %v2245 = vrot.slane %v2242, 1
  %v2246 = vsel %vm228, %v2244, %v2245
  %v2248 = vrot.slane %v1814, 1
  %v2249 = vrot.slane %v1819, 1
  %v2250 = vsel %vm228, %v2248, %v2249
  %2251 = vrot.lane.b32.xlu0 %v2250, 96
  %v2252 = vpop.permute.xlu0 %2251
  %2253 = vrot.lane.b32.xlu0 %v2249, 96
  %v2254 = vpop.permute.xlu0 %2253
  %v2255 = vsel %vm421, %v2246, 0
  %v2257 = vsel %vm421, %v2245, 0
  %v2259 = vsel %vm421, %v2252, 0
  %v2261 = vsel %vm421, %v2254, 0
  %2263 = vmatprep.subr.mxu0 0.0
  %2264 = vmatpush1.xpose.msra.mxu0 %v2259
  %2265 = vmatprep.subr.mxu0 0.0
  %2266 = vmatpush1.xpose.msra.mxu0 %v2261
  %2267 = vmatprep.subr.mxu0 0.0
  %2268 = vmatpush1.xpose.msra.mxu0 0.0
  %2269 = vmatprep.subr.mxu0 0.0
  %2270 = vmatpush1.xpose.msra.mxu0 0.0
  %2271 = vmatprep.subr.mxu0 0.0
  %2272 = vmatpush1.xpose.msra.mxu0 0.0
  %2273 = vmatprep.subr.mxu0 0.0
  %2274 = vmatpush1.xpose.msra.mxu0 0.0
  %2275 = vmatprep.subr.mxu0 0.0
  %2276 = vmatpush1.xpose.msra.mxu0 0.0
  %2277 = vmatprep.subr.mxu0 0.0
  %2278 = vmatpush1.xpose.msra.mxu0 0.0
  %2279 = vmatprep.subr.mxu0 0.0
  %2280 = vmatpush1.xpose.msra.mxu0 0.0
  %2281 = vmatprep.subr.mxu0 0.0
  %2282 = vmatpush1.xpose.msra.mxu0 0.0
  %2283 = vmatprep.subr.mxu0 0.0
  %2284 = vmatpush1.xpose.msra.mxu0 0.0
  %2285 = vmatprep.subr.mxu0 0.0
  %2286 = vmatpush1.xpose.msra.mxu0 0.0
  %2287 = vmatprep.subr.mxu0 0.0
  %2288 = vmatpush1.xpose.msra.mxu0 0.0
  %2289 = vmatprep.subr.mxu0 0.0
  %2290 = vmatpush1.xpose.msra.mxu0 0.0
  %2291 = vmatprep.subr.mxu0 0.0
  %2292 = vmatpush1.xpose.msra.mxu0 0.0
  %2293 = vmatprep.subr.mxu0 0.0
  %2294 = vmatpush1.xpose.msra.mxu0 0.0
  %2295 = vmatprep.subr.mxu0 0.0
  %2296 = vmatpush1.xpose.msra.mxu0 0.0
  %2297 = vmatprep.subr.mxu0 0.0
  %2298 = vmatpush1.xpose.msra.mxu0 0.0
  %2299 = vmatprep.subr.mxu0 0.0
  %2300 = vmatpush1.xpose.msra.mxu0 0.0
  %2301 = vmatprep.subr.mxu0 0.0
  %2302 = vmatpush1.xpose.msra.mxu0 0.0
  %2303 = vmatprep.subr.mxu0 0.0
  %2304 = vmatpush1.xpose.msra.mxu0 0.0
  %2305 = vmatprep.subr.mxu0 0.0
  %2306 = vmatpush1.xpose.msra.mxu0 0.0
  %2307 = vmatprep.subr.mxu0 0.0
  %2308 = vmatpush1.xpose.msra.mxu0 0.0
  %2309 = vmatprep.subr.mxu0 0.0
  %2310 = vmatpush1.xpose.msra.mxu0 0.0
  %2311 = vmatprep.subr.mxu0 0.0
  %2312 = vmatpush1.xpose.msra.mxu0 0.0
  %2313 = vmatprep.subr.mxu0 0.0
  %2314 = vmatpush1.xpose.msra.mxu0 0.0
  %2315 = vmatprep.subr.mxu0 0.0
  %2316 = vmatpush1.xpose.msra.mxu0 0.0
  %2317 = vmatprep.subr.mxu0 0.0
  %2318 = vmatpush1.xpose.msra.mxu0 0.0
  %2319 = vmatprep.subr.mxu0 0.0
  %2320 = vmatpush1.xpose.msra.mxu0 0.0
  %2321 = vmatprep.subr.mxu0 0.0
  %2322 = vmatpush1.xpose.msra.mxu0 0.0
  %2323 = vmatprep.subr.mxu0 0.0
  %2324 = vmatpush1.xpose.msra.mxu0 0.0
  %2325 = vmatprep.subr.mxu0 0.0
  %2326 = vmatpush1.xpose.msra.mxu0 0.0
  %2327 = vmatprep.mubr.f32.mxu0 0.0
  %2328 = vmatmul.mubr.f32.gmra.mrb[0].mxu0 %v2255
  %v2329 = vpop.f32.mrb[0].mxu0
  %v2330 = vadd.f32 0.0, %v2329
  %v2331 = vpop.f32.mrb[0].mxu0
  %2332 = vmatprep.mubr.f32.mxu0 0.0
  %2333 = vmatmul.mubr.f32.gmra.mrb[0].mxu0 %v2257
  %v2334 = vpop.f32.mrb[0].mxu0
  %v2335 = vadd.f32 0.0, %v2334
  %v2336 = vpop.f32.mrb[0].mxu0
  %2337 = vdwg.mxu0
  %v2338 = vsel %vm507, %v2330, -1e+30
  %v2339 = vsel %vm508, %v2335, -1e+30
  %v2340 = vsel %vm511, %v2338, -inf
  %2341 = vmax.xlane.f32.xlu0 %v2340
  %v2342 = vpop.xlane.xlu0 %2341
  %v2343 = vsel %vm515, %v2339, -inf
  %2344 = vmax.xlane.f32.xlu0 %v2343
  %v2345 = vpop.xlane.xlu0 %2344
  %v2346 = vsub.f32 %v2338, %v2342
  %v2347 = vsub.f32 %v2339, %v2345
  %v2348 = vmul.f32 %v2346, 1.442695
  %v2349 = vpow.pop %v2348
  %v2350 = vmul.f32 %v2347, 1.442695
  %v2351 = vpow.pop %v2350
  %v2352 = vsel %vm511, %v2349, 0.0
  %2353 = vadd.xlane.f32.xlu0 %v2352
  %v2354 = vpop.xlane.xlu0 %2353
  %v2355 = vsel %vm515, %v2351, 0.0
  %2356 = vadd.xlane.f32.xlu0 %v2355
  %v2357 = vpop.xlane.xlu0 %2356
  %v2358 = vrcp.pop %v2354
  %v2359 = vrcp.pop %v2357
  %v2360 = vmul.f32 %v2349, %v2358
  %v2361 = vmul.f32 %v2351, %v2359
  %2362 = vrot.lane.b32.xlu0 %v2250, 64
  %v2363 = vpop.permute.xlu0 %2362
  %2364 = vrot.lane.b32.xlu0 %v2249, 64
  %v2365 = vpop.permute.xlu0 %2364
  %v2368 = vsel %vm511, %v2360, 0
  %v2371 = vsel %vm511, %v2361, 0
  %v2373 = vsel %vm546, %v2365, 0
  %2375 = vmatprep.subr.mxu0 0.0
  %2376 = vmatpush1.msra.mxu0 %v2363
  %2377 = vmatprep.subr.mxu0 0.0
  %2378 = vmatpush1.msra.mxu0 %v2373
  %2379 = vmatprep.subr.mxu0 0.0
  %2380 = vmatpush1.msra.mxu0 0.0
  %2381 = vmatprep.subr.mxu0 0.0
  %2382 = vmatpush1.msra.mxu0 0.0
  %2383 = vmatprep.subr.mxu0 0.0
  %2384 = vmatpush1.msra.mxu0 0.0
  %2385 = vmatprep.subr.mxu0 0.0
  %2386 = vmatpush1.msra.mxu0 0.0
  %2387 = vmatprep.subr.mxu0 0.0
  %2388 = vmatpush1.msra.mxu0 0.0
  %2389 = vmatprep.subr.mxu0 0.0
  %2390 = vmatpush1.msra.mxu0 0.0
  %2391 = vmatprep.subr.mxu0 0.0
  %2392 = vmatpush1.msra.mxu0 0.0
  %2393 = vmatprep.subr.mxu0 0.0
  %2394 = vmatpush1.msra.mxu0 0.0
  %2395 = vmatprep.subr.mxu0 0.0
  %2396 = vmatpush1.msra.mxu0 0.0
  %2397 = vmatprep.subr.mxu0 0.0
  %2398 = vmatpush1.msra.mxu0 0.0
  %2399 = vmatprep.subr.mxu0 0.0
  %2400 = vmatpush1.msra.mxu0 0.0
  %2401 = vmatprep.subr.mxu0 0.0
  %2402 = vmatpush1.msra.mxu0 0.0
  %2403 = vmatprep.subr.mxu0 0.0
  %2404 = vmatpush1.msra.mxu0 0.0
  %2405 = vmatprep.subr.mxu0 0.0
  %2406 = vmatpush1.msra.mxu0 0.0
  %2407 = vmatprep.subr.mxu0 0.0
  %2408 = vmatpush1.msra.mxu0 0.0
  %2409 = vmatprep.subr.mxu0 0.0
  %2410 = vmatpush1.msra.mxu0 0.0
  %2411 = vmatprep.subr.mxu0 0.0
  %2412 = vmatpush1.msra.mxu0 0.0
  %2413 = vmatprep.subr.mxu0 0.0
  %2414 = vmatpush1.msra.mxu0 0.0
  %2415 = vmatprep.subr.mxu0 0.0
  %2416 = vmatpush1.msra.mxu0 0.0
  %2417 = vmatprep.subr.mxu0 0.0
  %2418 = vmatpush1.msra.mxu0 0.0
  %2419 = vmatprep.subr.mxu0 0.0
  %2420 = vmatpush1.msra.mxu0 0.0
  %2421 = vmatprep.subr.mxu0 0.0
  %2422 = vmatpush1.msra.mxu0 0.0
  %2423 = vmatprep.subr.mxu0 0.0
  %2424 = vmatpush1.msra.mxu0 0.0
  %2425 = vmatprep.subr.mxu0 0.0
  %2426 = vmatpush1.msra.mxu0 0.0
  %2427 = vmatprep.subr.mxu0 0.0
  %2428 = vmatpush1.msra.mxu0 0.0
  %2429 = vmatprep.subr.mxu0 0.0
  %2430 = vmatpush1.msra.mxu0 0.0
  %2431 = vmatprep.subr.mxu0 0.0
  %2432 = vmatpush1.msra.mxu0 0.0
  %2433 = vmatprep.subr.mxu0 0.0
  %2434 = vmatpush1.msra.mxu0 0.0
  %2435 = vmatprep.subr.mxu0 0.0
  %2436 = vmatpush1.msra.mxu0 0.0
  %2437 = vmatprep.subr.mxu0 0.0
  %2438 = vmatpush1.msra.mxu0 0.0
  %2439 = vmatprep.mubr.f32.mxu0 0.0
  %2440 = vmatmul.mubr.f32.gmra.mrb[0].mxu0 %v2368
  %v2441 = vpop.f32.mrb[0].mxu0
  %v2442 = vadd.f32 0.0, %v2441
  %v2443 = vpop.f32.mrb[0].mxu0
  %2444 = vmatprep.mubr.f32.mxu0 0.0
  %2445 = vmatmul.mubr.f32.gmra.mrb[0].mxu0 %v2371
  %v2446 = vpop.f32.mrb[0].mxu0
  %v2447 = vadd.f32 0.0, %v2446
  %v2448 = vpop.f32.mrb[0].mxu0
  %2449 = vdwg.mxu0
  %2450 = vst.msk [vmem:[#allocation2 + $0x9] sm:$0xff] %vm421, %v2442
  %2451 = vst.msk [vmem:[#allocation2 + $0x11] sm:$0x1] %vm625, %v2447
  %2452 = vrot.lane.b32.xlu0 %v2246, 112
  %v2453 = vpop.permute.xlu0 %2452
  %2454 = vrot.lane.b32.xlu0 %v2245, 112
  %v2455 = vpop.permute.xlu0 %2454
  %2456 = vrot.lane.b32.xlu0 %v2250, 80
  %v2457 = vpop.permute.xlu0 %2456
  %2458 = vrot.lane.b32.xlu0 %v2249, 80
  %v2459 = vpop.permute.xlu0 %2458
  %v2460 = vsel %vm421, %v2453, 0
  %v2462 = vsel %vm421, %v2455, 0
  %v2464 = vsel %vm421, %v2457, 0
  %v2466 = vsel %vm421, %v2459, 0
  %2468 = vmatprep.subr.mxu0 0.0
  %2469 = vmatpush1.xpose.msra.mxu0 %v2464
  %2470 = vmatprep.subr.mxu0 0.0
  %2471 = vmatpush1.xpose.msra.mxu0 %v2466
  %2472 = vmatprep.subr.mxu0 0.0
  %2473 = vmatpush1.xpose.msra.mxu0 0.0
  %2474 = vmatprep.subr.mxu0 0.0
  %2475 = vmatpush1.xpose.msra.mxu0 0.0
  %2476 = vmatprep.subr.mxu0 0.0
  %2477 = vmatpush1.xpose.msra.mxu0 0.0
  %2478 = vmatprep.subr.mxu0 0.0
  %2479 = vmatpush1.xpose.msra.mxu0 0.0
  %2480 = vmatprep.subr.mxu0 0.0
  %2481 = vmatpush1.xpose.msra.mxu0 0.0
  %2482 = vmatprep.subr.mxu0 0.0
  %2483 = vmatpush1.xpose.msra.mxu0 0.0
  %2484 = vmatprep.subr.mxu0 0.0
  %2485 = vmatpush1.xpose.msra.mxu0 0.0
  %2486 = vmatprep.subr.mxu0 0.0
  %2487 = vmatpush1.xpose.msra.mxu0 0.0
  %2488 = vmatprep.subr.mxu0 0.0
  %2489 = vmatpush1.xpose.msra.mxu0 0.0
  %2490 = vmatprep.subr.mxu0 0.0
  %2491 = vmatpush1.xpose.msra.mxu0 0.0
  %2492 = vmatprep.subr.mxu0 0.0
  %2493 = vmatpush1.xpose.msra.mxu0 0.0
  %2494 = vmatprep.subr.mxu0 0.0
  %2495 = vmatpush1.xpose.msra.mxu0 0.0
  %2496 = vmatprep.subr.mxu0 0.0
  %2497 = vmatpush1.xpose.msra.mxu0 0.0
  %2498 = vmatprep.subr.mxu0 0.0
  %2499 = vmatpush1.xpose.msra.mxu0 0.0
  %2500 = vmatprep.subr.mxu0 0.0
  %2501 = vmatpush1.xpose.msra.mxu0 0.0
  %2502 = vmatprep.subr.mxu0 0.0
  %2503 = vmatpush1.xpose.msra.mxu0 0.0
  %2504 = vmatprep.subr.mxu0 0.0
  %2505 = vmatpush1.xpose.msra.mxu0 0.0
  %2506 = vmatprep.subr.mxu0 0.0
  %2507 = vmatpush1.xpose.msra.mxu0 0.0
  %2508 = vmatprep.subr.mxu0 0.0
  %2509 = vmatpush1.xpose.msra.mxu0 0.0
  %2510 = vmatprep.subr.mxu0 0.0
  %2511 = vmatpush1.xpose.msra.mxu0 0.0
  %2512 = vmatprep.subr.mxu0 0.0
  %2513 = vmatpush1.xpose.msra.mxu0 0.0
  %2514 = vmatprep.subr.mxu0 0.0
  %2515 = vmatpush1.xpose.msra.mxu0 0.0
  %2516 = vmatprep.subr.mxu0 0.0
  %2517 = vmatpush1.xpose.msra.mxu0 0.0
  %2518 = vmatprep.subr.mxu0 0.0
  %2519 = vmatpush1.xpose.msra.mxu0 0.0
  %2520 = vmatprep.subr.mxu0 0.0
  %2521 = vmatpush1.xpose.msra.mxu0 0.0
  %2522 = vmatprep.subr.mxu0 0.0
  %2523 = vmatpush1.xpose.msra.mxu0 0.0
  %2524 = vmatprep.subr.mxu0 0.0
  %2525 = vmatpush1.xpose.msra.mxu0 0.0
  %2526 = vmatprep.subr.mxu0 0.0
  %2527 = vmatpush1.xpose.msra.mxu0 0.0
  %2528 = vmatprep.subr.mxu0 0.0
  %2529 = vmatpush1.xpose.msra.mxu0 0.0
  %2530 = vmatprep.subr.mxu0 0.0
  %2531 = vmatpush1.xpose.msra.mxu0 0.0
  %2532 = vmatprep.mubr.f32.mxu0 0.0
  %2533 = vmatmul.mubr.f32.gmra.mrb[0].mxu0 %v2460
  %v2534 = vpop.f32.mrb[0].mxu0
  %v2535 = vadd.f32 0.0, %v2534
  %v2536 = vpop.f32.mrb[0].mxu0
  %2537 = vmatprep.mubr.f32.mxu0 0.0
  %2538 = vmatmul.mubr.f32.gmra.mrb[0].mxu0 %v2462
  %v2539 = vpop.f32.mrb[0].mxu0
  %v2540 = vadd.f32 0.0, %v2539
  %v2541 = vpop.f32.mrb[0].mxu0
  %2542 = vdwg.mxu0
  %v2543 = vsel %vm507, %v2535, -1e+30
  %v2544 = vsel %vm508, %v2540, -1e+30
  %v2545 = vsel %vm511, %v2543, -inf
  %2546 = vmax.xlane.f32.xlu0 %v2545
  %v2547 = vpop.xlane.xlu0 %2546
  %v2548 = vsel %vm515, %v2544, -inf
  %2549 = vmax.xlane.f32.xlu0 %v2548
  %v2550 = vpop.xlane.xlu0 %2549
  %v2551 = vsub.f32 %v2543, %v2547
  %v2552 = vsub.f32 %v2544, %v2550
  %v2553 = vmul.f32 %v2551, 1.442695
  %v2554 = vpow.pop %v2553
  %v2555 = vmul.f32 %v2552, 1.442695
  %v2556 = vpow.pop %v2555
  %v2557 = vsel %vm511, %v2554, 0.0
  %2558 = vadd.xlane.f32.xlu0 %v2557
  %v2559 = vpop.xlane.xlu0 %2558
  %v2560 = vsel %vm515, %v2556, 0.0
  %2561 = vadd.xlane.f32.xlu0 %v2560
  %v2562 = vpop.xlane.xlu0 %2561
  %v2563 = vrcp.pop %v2559
  %v2564 = vrcp.pop %v2562
  %v2565 = vmul.f32 %v2554, %v2563
  %v2566 = vmul.f32 %v2556, %v2564
  %2567 = vrot.lane.b32.xlu0 %v2250, 48
  %v2568 = vpop.permute.xlu0 %2567
  %2569 = vrot.lane.b32.xlu0 %v2249, 48
  %v2570 = vpop.permute.xlu0 %2569
  %v2573 = vsel %vm511, %v2565, 0
  %v2576 = vsel %vm511, %v2566, 0
  %v2578 = vsel %vm546, %v2570, 0
  %2580 = vmatprep.subr.mxu0 0.0
  %2581 = vmatpush1.msra.mxu0 %v2568
  %2582 = vmatprep.subr.mxu0 0.0
  %2583 = vmatpush1.msra.mxu0 %v2578
  %2584 = vmatprep.subr.mxu0 0.0
  %2585 = vmatpush1.msra.mxu0 0.0
  %2586 = vmatprep.subr.mxu0 0.0
  %2587 = vmatpush1.msra.mxu0 0.0
  %2588 = vmatprep.subr.mxu0 0.0
  %2589 = vmatpush1.msra.mxu0 0.0
  %2590 = vmatprep.subr.mxu0 0.0
  %2591 = vmatpush1.msra.mxu0 0.0
  %2592 = vmatprep.subr.mxu0 0.0
  %2593 = vmatpush1.msra.mxu0 0.0
  %2594 = vmatprep.subr.mxu0 0.0
  %2595 = vmatpush1.msra.mxu0 0.0
  %2596 = vmatprep.subr.mxu0 0.0
  %2597 = vmatpush1.msra.mxu0 0.0
  %2598 = vmatprep.subr.mxu0 0.0
  %2599 = vmatpush1.msra.mxu0 0.0
  %2600 = vmatprep.subr.mxu0 0.0
  %2601 = vmatpush1.msra.mxu0 0.0
  %2602 = vmatprep.subr.mxu0 0.0
  %2603 = vmatpush1.msra.mxu0 0.0
  %2604 = vmatprep.subr.mxu0 0.0
  %2605 = vmatpush1.msra.mxu0 0.0
  %2606 = vmatprep.subr.mxu0 0.0
  %2607 = vmatpush1.msra.mxu0 0.0
  %2608 = vmatprep.subr.mxu0 0.0
  %2609 = vmatpush1.msra.mxu0 0.0
  %2610 = vmatprep.subr.mxu0 0.0
  %2611 = vmatpush1.msra.mxu0 0.0
  %2612 = vmatprep.subr.mxu0 0.0
  %2613 = vmatpush1.msra.mxu0 0.0
  %2614 = vmatprep.subr.mxu0 0.0
  %2615 = vmatpush1.msra.mxu0 0.0
  %2616 = vmatprep.subr.mxu0 0.0
  %2617 = vmatpush1.msra.mxu0 0.0
  %2618 = vmatprep.subr.mxu0 0.0
  %2619 = vmatpush1.msra.mxu0 0.0
  %2620 = vmatprep.subr.mxu0 0.0
  %2621 = vmatpush1.msra.mxu0 0.0
  %2622 = vmatprep.subr.mxu0 0.0
  %2623 = vmatpush1.msra.mxu0 0.0
  %2624 = vmatprep.subr.mxu0 0.0
  %2625 = vmatpush1.msra.mxu0 0.0
  %2626 = vmatprep.subr.mxu0 0.0
  %2627 = vmatpush1.msra.mxu0 0.0
  %2628 = vmatprep.subr.mxu0 0.0
  %2629 = vmatpush1.msra.mxu0 0.0
  %2630 = vmatprep.subr.mxu0 0.0
  %2631 = vmatpush1.msra.mxu0 0.0
  %2632 = vmatprep.subr.mxu0 0.0
  %2633 = vmatpush1.msra.mxu0 0.0
  %2634 = vmatprep.subr.mxu0 0.0
  %2635 = vmatpush1.msra.mxu0 0.0
  %2636 = vmatprep.subr.mxu0 0.0
  %2637 = vmatpush1.msra.mxu0 0.0
  %2638 = vmatprep.subr.mxu0 0.0
  %2639 = vmatpush1.msra.mxu0 0.0
  %2640 = vmatprep.subr.mxu0 0.0
  %2641 = vmatpush1.msra.mxu0 0.0
  %2642 = vmatprep.subr.mxu0 0.0
  %2643 = vmatpush1.msra.mxu0 0.0
  %2644 = vmatprep.mubr.f32.mxu0 0.0
  %2645 = vmatmul.mubr.f32.gmra.mrb[0].mxu0 %v2573
  %v2646 = vpop.f32.mrb[0].mxu0
  %v2647 = vadd.f32 0.0, %v2646
  %v2648 = vpop.f32.mrb[0].mxu0
  %2649 = vmatprep.mubr.f32.mxu0 0.0
  %2650 = vmatmul.mubr.f32.gmra.mrb[0].mxu0 %v2576
  %v2651 = vpop.f32.mrb[0].mxu0
  %v2652 = vadd.f32 0.0, %v2651
  %v2653 = vpop.f32.mrb[0].mxu0
  %2654 = vdwg.mxu0
  %2657 = vrot.lane.b32.xlu0 %v2647, 16
  %v2658 = vpop.permute.xlu0 %2657
  %2659 = vrot.lane.b32.xlu0 %v2652, 16
  %v2660 = vpop.permute.xlu0 %2659
  %2663 = vst.msk [vmem:[#allocation2 + $0x9] sm:$0xff] %vm838, %v2658
  %2664 = vst.msk [vmem:[#allocation2 + $0x11] sm:$0x1] %vm840, %v2660
  %v2665 = vld [vmem:[#allocation2] sm:$0xff]
  %v2666 = vld [vmem:[#allocation2 + $0x8] sm:$0xff]
  %v2667 = vld [vmem:[#allocation2 + $0x10] sm:$0x3]
  %v2668 = vld [vmem:[%s43] sm:$0xff]
  %v2669 = vld [vmem:[%s43 + $0x8] sm:$0xff]
  %v2670 = vld [vmem:[%s43 + $0x10] sm:$0xff]
  %v2671 = vld [vmem:[%s43 + $0x18] sm:$0xff]
  %v2672 = vld [vmem:[%s45] sm:$0x1]
  %v2674 = vlaneseq
  %v2675 = vshrl.u32 %v2674, 7
  %v2676 = vsub.s32 0, %v2675
  %v2677 = vrot.slane %v2672, %v2676
  %v2680 = vsel %vm148, %v2665, 0
  %v2683 = vsel %vm148, %v2666, 0
  %v2686 = vsel %vm148, %v2667, 0
  %2688 = vmatprep.subr.mxu0 0.0
  %2689 = vmatpush1.msra.mxu0 %v2668
  %2690 = vmatprep.subr.mxu0 0.0
  %2691 = vmatpush1.msra.mxu0 %v2669
  %2692 = vmatprep.subr.mxu0 0.0
  %2693 = vmatpush1.msra.mxu0 %v2670
  %2694 = vmatprep.subr.mxu0 0.0
  %2695 = vmatpush1.msra.mxu0 %v2671
  %2696 = vmatprep.subr.mxu0 0.0
  %2697 = vmatpush1.msra.mxu0 0.0
  %2698 = vmatprep.subr.mxu0 0.0
  %2699 = vmatpush1.msra.mxu0 0.0
  %2700 = vmatprep.subr.mxu0 0.0
  %2701 = vmatpush1.msra.mxu0 0.0
  %2702 = vmatprep.subr.mxu0 0.0
  %2703 = vmatpush1.msra.mxu0 0.0
  %2704 = vmatprep.subr.mxu0 0.0
  %2705 = vmatpush1.msra.mxu0 0.0
  %2706 = vmatprep.subr.mxu0 0.0
  %2707 = vmatpush1.msra.mxu0 0.0
  %2708 = vmatprep.subr.mxu0 0.0
  %2709 = vmatpush1.msra.mxu0 0.0
  %2710 = vmatprep.subr.mxu0 0.0
  %2711 = vmatpush1.msra.mxu0 0.0
  %2712 = vmatprep.subr.mxu0 0.0
  %2713 = vmatpush1.msra.mxu0 0.0
  %2714 = vmatprep.subr.mxu0 0.0
  %2715 = vmatpush1.msra.mxu0 0.0
  %2716 = vmatprep.subr.mxu0 0.0
  %2717 = vmatpush1.msra.mxu0 0.0
  %2718 = vmatprep.subr.mxu0 0.0
  %2719 = vmatpush1.msra.mxu0 0.0
  %2720 = vmatprep.subr.mxu0 0.0
  %2721 = vmatpush1.msra.mxu0 0.0
  %2722 = vmatprep.subr.mxu0 0.0
  %2723 = vmatpush1.msra.mxu0 0.0
  %2724 = vmatprep.subr.mxu0 0.0
  %2725 = vmatpush1.msra.mxu0 0.0
  %2726 = vmatprep.subr.mxu0 0.0
  %2727 = vmatpush1.msra.mxu0 0.0
  %2728 = vmatprep.subr.mxu0 0.0
  %2729 = vmatpush1.msra.mxu0 0.0
  %2730 = vmatprep.subr.mxu0 0.0
  %2731 = vmatpush1.msra.mxu0 0.0
  %2732 = vmatprep.subr.mxu0 0.0
  %2733 = vmatpush1.msra.mxu0 0.0
  %2734 = vmatprep.subr.mxu0 0.0
  %2735 = vmatpush1.msra.mxu0 0.0
  %2736 = vmatprep.subr.mxu0 0.0
  %2737 = vmatpush1.msra.mxu0 0.0
  %2738 = vmatprep.subr.mxu0 0.0
  %2739 = vmatpush1.msra.mxu0 0.0
  %2740 = vmatprep.subr.mxu0 0.0
  %2741 = vmatpush1.msra.mxu0 0.0
  %2742 = vmatprep.subr.mxu0 0.0
  %2743 = vmatpush1.msra.mxu0 0.0
  %2744 = vmatprep.subr.mxu0 0.0
  %2745 = vmatpush1.msra.mxu0 0.0
  %2746 = vmatprep.subr.mxu0 0.0
  %2747 = vmatpush1.msra.mxu0 0.0
  %2748 = vmatprep.subr.mxu0 0.0
  %2749 = vmatpush1.msra.mxu0 0.0
  %2750 = vmatprep.subr.mxu0 0.0
  %2751 = vmatpush1.msra.mxu0 0.0
  %2752 = vmatprep.mubr.f32.mxu0 0.0
  %2753 = vmatmul.mubr.f32.gmra.mrb[0].mxu0 %v2680
  %v2754 = vpop.f32.mrb[0].mxu0
  %v2755 = vadd.f32 %v2677, %v2754
  %v2756 = vpop.f32.mrb[0].mxu0
  %2757 = vmatprep.mubr.f32.mxu0 0.0
  %2758 = vmatmul.mubr.f32.gmra.mrb[0].mxu0 %v2683
  %v2759 = vpop.f32.mrb[0].mxu0
  %v2760 = vadd.f32 %v2677, %v2759
  %v2761 = vpop.f32.mrb[0].mxu0
  %2762 = vmatprep.mubr.f32.mxu0 0.0
  %2763 = vmatmul.mubr.f32.gmra.mrb[0].mxu0 %v2686
  %v2764 = vpop.f32.mrb[0].mxu0
  %v2765 = vadd.f32 %v2677, %v2764
  %v2766 = vpop.f32.mrb[0].mxu0
  %2767 = vdwg.mxu0
  %v2768 = vadd.f32 %v1660, %v2755
  %v2769 = vadd.f32 %v1661, %v2760
  %v2770 = vadd.f32 %v1662, %v2765
  %v2771 = vld [vmem:[%s47] sm:$0x1]
  %v2772 = vld [vmem:[%s49] sm:$0x1]
  %v2773 = vsel %vm148, %v2768, 0.0
  %2774 = vadd.xlane.f32.xlu0 %v2773
  %v2775 = vpop.xlane.xlu0 %2774
  %v2776 = vsel %vm148, %v2769, 0.0
  %2777 = vadd.xlane.f32.xlu0 %v2776
  %v2778 = vpop.xlane.xlu0 %2777
  %v2779 = vsel %vm260, %v2770, 0.0
  %2780 = vadd.xlane.f32.xlu0 %v2779
  %v2781 = vpop.xlane.xlu0 %2780
  %v2782 = vmul.f32 %v2775, %v264
  %v2783 = vmul.f32 %v2778, %v264
  %v2784 = vmul.f32 %v2781, %v264
  %v2785 = vsub.f32 %v2768, %v2782
  %v2786 = vsub.f32 %v2769, %v2783
  %v2787 = vsub.f32 %v2770, %v2784
  %v2788 = vmul.f32 %v2785, %v2785
  %v2789 = vmul.f32 %v2786, %v2786
  %v2790 = vmul.f32 %v2787, %v2787
  %v2791 = vsel %vm148, %v2788, 0.0
  %2792 = vadd.xlane.f32.xlu0 %v2791
  %v2793 = vpop.xlane.xlu0 %2792
  %v2794 = vsel %vm148, %v2789, 0.0
  %2795 = vadd.xlane.f32.xlu0 %v2794
  %v2796 = vpop.xlane.xlu0 %2795
  %v2797 = vsel %vm260, %v2790, 0.0
  %2798 = vadd.xlane.f32.xlu0 %v2797
  %v2799 = vpop.xlane.xlu0 %2798
  %v2800 = vmul.f32 %v2793, %v264
  %v2801 = vmul.f32 %v2796, %v264
  %v2802 = vmul.f32 %v2799, %v264
  %v2803 = vadd.f32 %v2800, 1e-05
  %v2804 = vadd.f32 %v2801, 1e-05
  %v2805 = vadd.f32 %v2802, 1e-05
  %v2806 = vrsqrt.pop %v2803
  %v2807 = vrsqrt.pop %v2804
  %v2808 = vrsqrt.pop %v2805
  %v2809 = vmul.f32 %v2785, %v2806
  %v2810 = vmul.f32 %v2786, %v2807
  %v2811 = vmul.f32 %v2787, %v2808
  %v2813 = vlaneseq
  %v2814 = vshrl.u32 %v2813, 7
  %v2815 = vsub.s32 0, %v2814
  %v2816 = vrot.slane %v2771, %v2815
  %v2818 = vmul.f32 %v2809, %v2816
  %v2819 = vmul.f32 %v2810, %v2816
  %v2820 = vmul.f32 %v2811, %v2816
  %v2822 = vlaneseq
  %v2823 = vshrl.u32 %v2822, 7
  %v2824 = vsub.s32 0, %v2823
  %v2825 = vrot.slane %v2772, %v2824
  %v2827 = vadd.f32 %v2818, %v2825
  %v2828 = vadd.f32 %v2819, %v2825
  %v2829 = vadd.f32 %v2820, %v2825
  %v2830 = vld [vmem:[%s51] sm:$0xff]
  %v2831 = vld [vmem:[%s51 + $0x8] sm:$0xff]
  %v2832 = vld [vmem:[%s51 + $0x10] sm:$0xff]
  %v2833 = vld [vmem:[%s51 + $0x18] sm:$0xff]
  %v2834 = vld [vmem:[%s53] sm:$0x1]
  %v2836 = vlaneseq
  %v2837 = vshrl.u32 %v2836, 7
  %v2838 = vsub.s32 0, %v2837
  %v2839 = vrot.slane %v2834, %v2838
  %v2842 = vsel %vm148, %v2827, 0
  %v2845 = vsel %vm148, %v2828, 0
  %v2848 = vsel %vm148, %v2829, 0
  %2850 = vmatprep.subr.mxu0 0.0
  %2851 = vmatpush1.msra.mxu0 %v2830
  %2852 = vmatprep.subr.mxu0 0.0
  %2853 = vmatpush1.msra.mxu0 %v2831
  %2854 = vmatprep.subr.mxu0 0.0
  %2855 = vmatpush1.msra.mxu0 %v2832
  %2856 = vmatprep.subr.mxu0 0.0
  %2857 = vmatpush1.msra.mxu0 %v2833
  %2858 = vmatprep.subr.mxu0 0.0
  %2859 = vmatpush1.msra.mxu0 0.0
  %2860 = vmatprep.subr.mxu0 0.0
  %2861 = vmatpush1.msra.mxu0 0.0
  %2862 = vmatprep.subr.mxu0 0.0
  %2863 = vmatpush1.msra.mxu0 0.0
  %2864 = vmatprep.subr.mxu0 0.0
  %2865 = vmatpush1.msra.mxu0 0.0
  %2866 = vmatprep.subr.mxu0 0.0
  %2867 = vmatpush1.msra.mxu0 0.0
  %2868 = vmatprep.subr.mxu0 0.0
  %2869 = vmatpush1.msra.mxu0 0.0
  %2870 = vmatprep.subr.mxu0 0.0
  %2871 = vmatpush1.msra.mxu0 0.0
  %2872 = vmatprep.subr.mxu0 0.0
  %2873 = vmatpush1.msra.mxu0 0.0
  %2874 = vmatprep.subr.mxu0 0.0
  %2875 = vmatpush1.msra.mxu0 0.0
  %2876 = vmatprep.subr.mxu0 0.0
  %2877 = vmatpush1.msra.mxu0 0.0
  %2878 = vmatprep.subr.mxu0 0.0
  %2879 = vmatpush1.msra.mxu0 0.0
  %2880 = vmatprep.subr.mxu0 0.0
  %2881 = vmatpush1.msra.mxu0 0.0
  %2882 = vmatprep.subr.mxu0 0.0
  %2883 = vmatpush1.msra.mxu0 0.0
  %2884 = vmatprep.subr.mxu0 0.0
  %2885 = vmatpush1.msra.mxu0 0.0
  %2886 = vmatprep.subr.mxu0 0.0
  %2887 = vmatpush1.msra.mxu0 0.0
  %2888 = vmatprep.subr.mxu0 0.0
  %2889 = vmatpush1.msra.mxu0 0.0
  %2890 = vmatprep.subr.mxu0 0.0
  %2891 = vmatpush1.msra.mxu0 0.0
  %2892 = vmatprep.subr.mxu0 0.0
  %2893 = vmatpush1.msra.mxu0 0.0
  %2894 = vmatprep.subr.mxu0 0.0
  %2895 = vmatpush1.msra.mxu0 0.0
  %2896 = vmatprep.subr.mxu0 0.0
  %2897 = vmatpush1.msra.mxu0 0.0
  %2898 = vmatprep.subr.mxu0 0.0
  %2899 = vmatpush1.msra.mxu0 0.0
  %2900 = vmatprep.subr.mxu0 0.0
  %2901 = vmatpush1.msra.mxu0 0.0
  %2902 = vmatprep.subr.mxu0 0.0
  %2903 = vmatpush1.msra.mxu0 0.0
  %2904 = vmatprep.subr.mxu0 0.0
  %2905 = vmatpush1.msra.mxu0 0.0
  %2906 = vmatprep.subr.mxu0 0.0
  %2907 = vmatpush1.msra.mxu0 0.0
  %2908 = vmatprep.subr.mxu0 0.0
  %2909 = vmatpush1.msra.mxu0 0.0
  %2910 = vmatprep.subr.mxu0 0.0
  %2911 = vmatpush1.msra.mxu0 0.0
  %2912 = vmatprep.subr.mxu0 0.0
  %2913 = vmatpush1.msra.mxu0 0.0
  %2914 = vmatprep.mubr.f32.mxu0 0.0
  %2915 = vmatmul.mubr.f32.gmra.mrb[0].mxu0 %v2842
  %v2916 = vpop.f32.mrb[0].mxu0
  %v2917 = vadd.f32 %v2839, %v2916
  %v2918 = vpop.f32.mrb[0].mxu0
  %2919 = vmatprep.mubr.f32.mxu0 0.0
  %2920 = vmatmul.mubr.f32.gmra.mrb[0].mxu0 %v2845
  %v2921 = vpop.f32.mrb[0].mxu0
  %v2922 = vadd.f32 %v2839, %v2921
  %v2923 = vpop.f32.mrb[0].mxu0
  %2924 = vmatprep.mubr.f32.mxu0 0.0
  %2925 = vmatmul.mubr.f32.gmra.mrb[0].mxu0 %v2848
  %v2926 = vpop.f32.mrb[0].mxu0
  %v2927 = vadd.f32 %v2839, %v2926
  %v2928 = vpop.f32.mrb[0].mxu0
  %2929 = vdwg.mxu0
  %v2930 = vmul.f32 %v2917, 0.5
  %v2931 = vmul.f32 %v2922, 0.5
  %v2932 = vmul.f32 %v2927, 0.5
  %v2933 = vmul.f32 %v2917, 0.044715
  %v2934 = vmul.f32 %v2922, 0.044715
  %v2935 = vmul.f32 %v2927, 0.044715
  %v2936 = vmul.f32 %v2933, %v2917
  %v2937 = vmul.f32 %v2934, %v2922
  %v2938 = vmul.f32 %v2935, %v2927
  %v2939 = vmul.f32 %v2936, %v2917
  %v2940 = vmul.f32 %v2937, %v2922
  %v2941 = vmul.f32 %v2938, %v2927
  %v2942 = vadd.f32 %v2917, %v2939
  %v2943 = vadd.f32 %v2922, %v2940
  %v2944 = vadd.f32 %v2927, %v2941
  %v2945 = vmul.f32 %v2942, 0.7978846
  %v2946 = vmul.f32 %v2943, 0.7978846
  %v2947 = vmul.f32 %v2944, 0.7978846
  %v2948 = vtanh.pop %v2945
  %v2949 = vtanh.pop %v2946
  %v2950 = vtanh.pop %v2947
  %v2951 = vadd.f32 %v2948, 1.0
  %v2952 = vadd.f32 %v2949, 1.0
  %v2953 = vadd.f32 %v2950, 1.0
  %v2954 = vmul.f32 %v2930, %v2951
  %v2955 = vmul.f32 %v2931, %v2952
  %v2956 = vmul.f32 %v2932, %v2953
  %v2957 = vld [vmem:[%s55] sm:$0xff]
  %v2958 = vld [vmem:[%s55 + $0x8] sm:$0xff]
  %v2959 = vld [vmem:[%s55 + $0x10] sm:$0xff]
  %v2960 = vld [vmem:[%s55 + $0x18] sm:$0xff]
  %v2961 = vld [vmem:[%s55 + $0x20] sm:$0xff]
  %v2962 = vld [vmem:[%s55 + $0x28] sm:$0xff]
  %v2963 = vld [vmem:[%s55 + $0x30] sm:$0xff]
  %v2964 = vld [vmem:[%s55 + $0x38] sm:$0xff]
  %v2965 = vld [vmem:[%s55 + $0x40] sm:$0xff]
  %v2966 = vld [vmem:[%s55 + $0x48] sm:$0xff]
  %v2967 = vld [vmem:[%s55 + $0x50] sm:$0xff]
  %v2968 = vld [vmem:[%s55 + $0x58] sm:$0xff]
  %v2969 = vld [vmem:[%s55 + $0x60] sm:$0xff]
  %v2970 = vld [vmem:[%s55 + $0x68] sm:$0xff]
  %v2971 = vld [vmem:[%s55 + $0x70] sm:$0xff]
  %v2972 = vld [vmem:[%s55 + $0x78] sm:$0xff]
  %v2973 = vld [vmem:[%s57] sm:$0x1]
  %v2975 = vlaneseq
  %v2976 = vshrl.u32 %v2975, 7
  %v2977 = vsub.s32 0, %v2976
  %v2978 = vrot.slane %v2973, %v2977
  %2980 = vmatprep.subr.mxu0 0.0
  %2981 = vmatpush1.msra.mxu0 %v2957
  %2982 = vmatprep.subr.mxu0 0.0
  %2983 = vmatpush1.msra.mxu0 %v2958
  %2984 = vmatprep.subr.mxu0 0.0
  %2985 = vmatpush1.msra.mxu0 %v2959
  %2986 = vmatprep.subr.mxu0 0.0
  %2987 = vmatpush1.msra.mxu0 %v2960
  %2988 = vmatprep.subr.mxu0 0.0
  %2989 = vmatpush1.msra.mxu0 %v2961
  %2990 = vmatprep.subr.mxu0 0.0
  %2991 = vmatpush1.msra.mxu0 %v2962
  %2992 = vmatprep.subr.mxu0 0.0
  %2993 = vmatpush1.msra.mxu0 %v2963
  %2994 = vmatprep.subr.mxu0 0.0
  %2995 = vmatpush1.msra.mxu0 %v2964
  %2996 = vmatprep.subr.mxu0 0.0
  %2997 = vmatpush1.msra.mxu0 %v2965
  %2998 = vmatprep.subr.mxu0 0.0
  %2999 = vmatpush1.msra.mxu0 %v2966
  %3000 = vmatprep.subr.mxu0 0.0
  %3001 = vmatpush1.msra.mxu0 %v2967
  %3002 = vmatprep.subr.mxu0 0.0
  %3003 = vmatpush1.msra.mxu0 %v2968
  %3004 = vmatprep.subr.mxu0 0.0
  %3005 = vmatpush1.msra.mxu0 %v2969
  %3006 = vmatprep.subr.mxu0 0.0
  %3007 = vmatpush1.msra.mxu0 %v2970
  %3008 = vmatprep.subr.mxu0 0.0
  %3009 = vmatpush1.msra.mxu0 %v2971
  %3010 = vmatprep.subr.mxu0 0.0
  %3011 = vmatpush1.msra.mxu0 %v2972
  %3012 = vmatprep.subr.mxu0 0.0
  %3013 = vmatpush1.msra.mxu0 0.0
  %3014 = vmatprep.subr.mxu0 0.0
  %3015 = vmatpush1.msra.mxu0 0.0
  %3016 = vmatprep.subr.mxu0 0.0
  %3017 = vmatpush1.msra.mxu0 0.0
  %3018 = vmatprep.subr.mxu0 0.0
  %3019 = vmatpush1.msra.mxu0 0.0
  %3020 = vmatprep.subr.mxu0 0.0
  %3021 = vmatpush1.msra.mxu0 0.0
  %3022 = vmatprep.subr.mxu0 0.0
  %3023 = vmatpush1.msra.mxu0 0.0
  %3024 = vmatprep.subr.mxu0 0.0
  %3025 = vmatpush1.msra.mxu0 0.0
  %3026 = vmatprep.subr.mxu0 0.0
  %3027 = vmatpush1.msra.mxu0 0.0
  %3028 = vmatprep.subr.mxu0 0.0
  %3029 = vmatpush1.msra.mxu0 0.0
  %3030 = vmatprep.subr.mxu0 0.0
  %3031 = vmatpush1.msra.mxu0 0.0
  %3032 = vmatprep.subr.mxu0 0.0
  %3033 = vmatpush1.msra.mxu0 0.0
  %3034 = vmatprep.subr.mxu0 0.0
  %3035 = vmatpush1.msra.mxu0 0.0
  %3036 = vmatprep.subr.mxu0 0.0
  %3037 = vmatpush1.msra.mxu0 0.0
  %3038 = vmatprep.subr.mxu0 0.0
  %3039 = vmatpush1.msra.mxu0 0.0
  %3040 = vmatprep.subr.mxu0 0.0
  %3041 = vmatpush1.msra.mxu0 0.0
  %3042 = vmatprep.subr.mxu0 0.0
  %3043 = vmatpush1.msra.mxu0 0.0
  %3044 = vmatprep.mubr.f32.mxu0 0.0
  %3045 = vmatmul.mubr.f32.gmra.mrb[0].mxu0 %v2954
  %v3046 = vpop.f32.mrb[0].mxu0
  %v3047 = vadd.f32 %v2978, %v3046
  %v3048 = vpop.f32.mrb[0].mxu0
  %3049 = vmatprep.mubr.f32.mxu0 0.0
  %3050 = vmatmul.mubr.f32.gmra.mrb[0].mxu0 %v2955
  %v3051 = vpop.f32.mrb[0].mxu0
  %v3052 = vadd.f32 %v2978, %v3051
  %v3053 = vpop.f32.mrb[0].mxu0
  %3054 = vmatprep.mubr.f32.mxu0 0.0
  %3055 = vmatmul.mubr.f32.gmra.mrb[0].mxu0 %v2956
  %v3056 = vpop.f32.mrb[0].mxu0
  %v3057 = vadd.f32 %v2978, %v3056
  %v3058 = vpop.f32.mrb[0].mxu0
  %3059 = vdwg.mxu0
  %v3060 = vadd.f32 %v2768, %v3047
  %v3061 = vadd.f32 %v2769, %v3052
  %v3062 = vadd.f32 %v2770, %v3057
  %v3063 = vld [vmem:[%s59] sm:$0x1]
  %v3064 = vld [vmem:[%s61] sm:$0x1]
  %v3065 = vsel %vm148, %v3060, 0.0
  %3066 = vadd.xlane.f32.xlu0 %v3065
  %v3067 = vpop.xlane.xlu0 %3066
  %v3068 = vsel %vm148, %v3061, 0.0
  %3069 = vadd.xlane.f32.xlu0 %v3068
  %v3070 = vpop.xlane.xlu0 %3069
  %v3071 = vsel %vm260, %v3062, 0.0
  %3072 = vadd.xlane.f32.xlu0 %v3071
  %v3073 = vpop.xlane.xlu0 %3072
  %v3074 = vmul.f32 %v3067, %v264
  %v3075 = vmul.f32 %v3070, %v264
  %v3076 = vmul.f32 %v3073, %v264
  %v3077 = vsub.f32 %v3060, %v3074
  %v3078 = vsub.f32 %v3061, %v3075
  %v3079 = vsub.f32 %v3062, %v3076
  %v3080 = vmul.f32 %v3077, %v3077
  %v3081 = vmul.f32 %v3078, %v3078
  %v3082 = vmul.f32 %v3079, %v3079
  %v3083 = vsel %vm148, %v3080, 0.0
  %3084 = vadd.xlane.f32.xlu0 %v3083
  %v3085 = vpop.xlane.xlu0 %3084
  %v3086 = vsel %vm148, %v3081, 0.0
  %3087 = vadd.xlane.f32.xlu0 %v3086
  %v3088 = vpop.xlane.xlu0 %3087
  %v3089 = vsel %vm260, %v3082, 0.0
  %3090 = vadd.xlane.f32.xlu0 %v3089
  %v3091 = vpop.xlane.xlu0 %3090
  %v3092 = vmul.f32 %v3085, %v264
  %v3093 = vmul.f32 %v3088, %v264
  %v3094 = vmul.f32 %v3091, %v264
  %v3095 = vadd.f32 %v3092, 1e-05
  %v3096 = vadd.f32 %v3093, 1e-05
  %v3097 = vadd.f32 %v3094, 1e-05
  %v3098 = vrsqrt.pop %v3095
  %v3099 = vrsqrt.pop %v3096
  %v3100 = vrsqrt.pop %v3097
  %v3101 = vmul.f32 %v3077, %v3098
  %v3102 = vmul.f32 %v3078, %v3099
  %v3103 = vmul.f32 %v3079, %v3100
  %v3105 = vlaneseq
  %v3106 = vshrl.u32 %v3105, 7
  %v3107 = vsub.s32 0, %v3106
  %v3108 = vrot.slane %v3063, %v3107
  %v3110 = vmul.f32 %v3101, %v3108
  %v3111 = vmul.f32 %v3102, %v3108
  %v3112 = vmul.f32 %v3103, %v3108
  %v3114 = vlaneseq
  %v3115 = vshrl.u32 %v3114, 7
  %v3116 = vsub.s32 0, %v3115
  %v3117 = vrot.slane %v3064, %v3116
  %v3119 = vadd.f32 %v3110, %v3117
  %v3120 = vadd.f32 %v3111, %v3117
  %v3121 = vadd.f32 %v3112, %v3117
  %v3122 = vld [vmem:[%s63] sm:$0xff]
  %v3123 = vld [vmem:[%s63 + $0x8] sm:$0xff]
  %v3124 = vld [vmem:[%s63 + $0x10] sm:$0xff]
  %v3125 = vld [vmem:[%s63 + $0x18] sm:$0xff]
  %v3127 = vsel %vm148, %v3119, 0
  %v3130 = vsel %vm148, %v3120, 0
  %v3133 = vsel %vm148, %v3121, 0
  %3135 = vmatprep.subr.mxu0 0.0
  %3136 = vmatpush1.msra.mxu0 %v3122
  %3137 = vmatprep.subr.mxu0 0.0
  %3138 = vmatpush1.msra.mxu0 %v3123
  %3139 = vmatprep.subr.mxu0 0.0
  %3140 = vmatpush1.msra.mxu0 %v3124
  %3141 = vmatprep.subr.mxu0 0.0
  %3142 = vmatpush1.msra.mxu0 %v3125
  %3143 = vmatprep.subr.mxu0 0.0
  %3144 = vmatpush1.msra.mxu0 0.0
  %3145 = vmatprep.subr.mxu0 0.0
  %3146 = vmatpush1.msra.mxu0 0.0
  %3147 = vmatprep.subr.mxu0 0.0
  %3148 = vmatpush1.msra.mxu0 0.0
  %3149 = vmatprep.subr.mxu0 0.0
  %3150 = vmatpush1.msra.mxu0 0.0
  %3151 = vmatprep.subr.mxu0 0.0
  %3152 = vmatpush1.msra.mxu0 0.0
  %3153 = vmatprep.subr.mxu0 0.0
  %3154 = vmatpush1.msra.mxu0 0.0
  %3155 = vmatprep.subr.mxu0 0.0
  %3156 = vmatpush1.msra.mxu0 0.0
  %3157 = vmatprep.subr.mxu0 0.0
  %3158 = vmatpush1.msra.mxu0 0.0
  %3159 = vmatprep.subr.mxu0 0.0
  %3160 = vmatpush1.msra.mxu0 0.0
  %3161 = vmatprep.subr.mxu0 0.0
  %3162 = vmatpush1.msra.mxu0 0.0
  %3163 = vmatprep.subr.mxu0 0.0
  %3164 = vmatpush1.msra.mxu0 0.0
  %3165 = vmatprep.subr.mxu0 0.0
  %3166 = vmatpush1.msra.mxu0 0.0
  %3167 = vmatprep.subr.mxu0 0.0
  %3168 = vmatpush1.msra.mxu0 0.0
  %3169 = vmatprep.subr.mxu0 0.0
  %3170 = vmatpush1.msra.mxu0 0.0
  %3171 = vmatprep.subr.mxu0 0.0
  %3172 = vmatpush1.msra.mxu0 0.0
  %3173 = vmatprep.subr.mxu0 0.0
  %3174 = vmatpush1.msra.mxu0 0.0
  %3175 = vmatprep.subr.mxu0 0.0
  %3176 = vmatpush1.msra.mxu0 0.0
  %3177 = vmatprep.subr.mxu0 0.0
  %3178 = vmatpush1.msra.mxu0 0.0
  %3179 = vmatprep.subr.mxu0 0.0
  %3180 = vmatpush1.msra.mxu0 0.0
  %3181 = vmatprep.subr.mxu0 0.0
  %3182 = vmatpush1.msra.mxu0 0.0
  %3183 = vmatprep.subr.mxu0 0.0
  %3184 = vmatpush1.msra.mxu0 0.0
  %3185 = vmatprep.subr.mxu0 0.0
  %3186 = vmatpush1.msra.mxu0 0.0
  %3187 = vmatprep.subr.mxu0 0.0
  %3188 = vmatpush1.msra.mxu0 0.0
  %3189 = vmatprep.subr.mxu0 0.0
  %3190 = vmatpush1.msra.mxu0 0.0
  %3191 = vmatprep.subr.mxu0 0.0
  %3192 = vmatpush1.msra.mxu0 0.0
  %3193 = vmatprep.subr.mxu0 0.0
  %3194 = vmatpush1.msra.mxu0 0.0
  %3195 = vmatprep.subr.mxu0 0.0
  %3196 = vmatpush1.msra.mxu0 0.0
  %3197 = vmatprep.subr.mxu0 0.0
  %3198 = vmatpush1.msra.mxu0 0.0
  %3199 = vmatprep.mubr.f32.mxu0 0.0
  %3200 = vmatmul.mubr.f32.gmra.mrb[0].mxu0 %v3127
  %v3201 = vpop.f32.mrb[0].mxu0
  %v3202 = vadd.f32 0.0, %v3201
  %v3203 = vpop.f32.mrb[0].mxu0
  %3204 = vmatprep.mubr.f32.mxu0 0.0
  %3205 = vmatmul.mubr.f32.gmra.mrb[0].mxu0 %v3130
  %v3206 = vpop.f32.mrb[0].mxu0
  %v3207 = vadd.f32 0.0, %v3206
  %v3208 = vpop.f32.mrb[0].mxu0
  %3209 = vmatprep.mubr.f32.mxu0 0.0
  %3210 = vmatmul.mubr.f32.gmra.mrb[0].mxu0 %v3133
  %v3211 = vpop.f32.mrb[0].mxu0
  %v3212 = vadd.f32 0.0, %v3211
  %v3213 = vpop.f32.mrb[0].mxu0
  %3214 = vdwg.mxu0
  %vm3215 = vcmask 523264
  %3216 = vst.msk [vmem:[%s65] sm:$0xff] %vm3215, %v3202
  %3217 = vst.msk [vmem:[%s65 + $0x8] sm:$0xff] %vm3215, %v3207
  %vm3218 = vcmask 517120
  %3219 = vst.msk [vmem:[%s65 + $0x10] sm:$0x3] %vm3218, %v3212
  // Predicated region
  $region130: #{_lambda_.1} parent=0 // pred_check
    _
  $region131: #{_lambda_.1} parent=0 // pred_check_branch
    %3221 = sbr.rel (0) target = $region133
  $region132: #{_lambda_.1} parent=0 // pred_region
    _
  $region133: #{_lambda_.1} parent=0 // pred_fallthru
    _
  // Predicated region
  $region134: #{_lambda_.1} parent=0 // pred_check
    _
  $region135: #{_lambda_.1} parent=0 // pred_check_branch
    %3223 = sbr.rel (0) target = $region137
  $region136: #{_lambda_.1} parent=0 // pred_region
    _
  $region137: #{_lambda_.1} parent=0 // pred_fallthru
    _

</llo_original>
